<compile_context>
chip_gen: v6e
topology: v6e:2x2x1
jax: 0.10.0
libtpu: 0.0.40
codegen_flags: <defaults>
</compile_context>

<pallas_src>
import jax
import jax.numpy as jnp
import numpy as np
from jax.experimental import pallas as pl
from jax.experimental.pallas import tpu as pltpu

N, CIN, H, W = 2, 3, 16, 16
COUT1, COUT2 = 3, 3
OH1 = OW1 = 8      # conv1 output spatial (stride 2, pad 1)
OH2 = OW2 = 8      # conv2 output spatial (stride 1, pad 1)


def _widx(o, c, kh, kw):
    # flat index into a [O, C, 3, 3] weight tensor reshaped to 1-D
    return ((o * 3 + c) * 3 + kh) * 3 + kw


def _fused_kernel(w1_ref, b1_ref, w2_ref, b2_ref, xpoly_ref, out_ref, v1pad_ref):
    # Zero the padded-v1 scratch once; its 1-pixel border implements conv2's
    # padding=1 for free.
    v1pad_ref[...] = jnp.zeros_like(v1pad_ref)

    # ----------------- conv1 (stride 2, pad 1) + ReLU -----------------------
    # xpoly_ref[(a*2+b)*N*CIN + n*CIN + c] is the (row-parity a, col-parity b)
    # polyphase component [9,9] of the zero-padded 18x18 plane (n, c).
    # Tap (kh, kw) of the stride-2 conv == unit-stride slice
    #   P[kh%2][kw%2][kh//2 : kh//2+8, kw//2 : kw//2+8]
    for n in range(N):
        for o in range(COUT1):
            acc = jnp.zeros((OH1, OW1), jnp.float32)
            for c in range(CIN):
                for kh in range(3):
                    for kw in range(3):
                        comp = (kh % 2) * 2 + (kw % 2)
                        r, s = kh // 2, kw // 2
                        tap = xpoly_ref[comp * (N * CIN) + n * CIN + c,
                                        r:r + OH1, s:s + OW1]
                        acc = acc + w1_ref[_widx(o, c, kh, kw)] * tap
            v1 = jnp.maximum(acc + b1_ref[o], 0.0)
            v1pad_ref[n * COUT1 + o, 1:1 + OH1, 1:1 + OW1] = v1

    # ----------------- conv2 (stride 1, pad 1) + ReLU -----------------------
    # NOTE: where(v2 > 0, v2, 0.1*v2) followed by relu is the identity after
    # the preceding ReLU, so only the ReLU is kept (bit-exact vs. reference).
    for n in range(N):
        for o in range(COUT2):
            acc = jnp.zeros((OH2, OW2), jnp.float32)
            for c in range(COUT1):
                for kh in range(3):
                    for kw in range(3):
                        tap = v1pad_ref[n * COUT1 + c, kh:kh + OH2, kw:kw + OW2]
                        acc = acc + w2_ref[_widx(o, c, kh, kw)] * tap
            out_ref[n, o, :, :] = jnp.maximum(acc + b2_ref[o], 0.0)


def _polyphase(x_nchw):
    # zero-pad spatially by 1 and split into the 4 stride-2 polyphase planes
    xpad = jnp.pad(x_nchw, ((0, 0), (0, 0), (1, 1), (1, 1)))       # [N,C,18,18]
    comps = [xpad[:, :, a::2, b::2] for a in range(2) for b in range(2)]
    xpoly = jnp.stack(comps, axis=0)                               # [4,N,C,9,9]
    return xpoly.reshape(4 * N * CIN, 9, 9)                        # [24,9,9]


@jax.jit
def model_forward(x_nchw, params):
    x = x_nchw.astype(jnp.float32)
    xpoly = _polyphase(x)
    w1f = params["w1"].reshape(-1).astype(jnp.float32)             # [81]
    b1 = params["b1"].astype(jnp.float32)                          # [3]
    w2f = params["w2"].reshape(-1).astype(jnp.float32)             # [81]
    b2 = params["b2"].astype(jnp.float32)                          # [3]

    smem = pl.BlockSpec(memory_space=pltpu.MemorySpace.SMEM)
    vmem = pl.BlockSpec(memory_space=pltpu.MemorySpace.VMEM)
    return pl.pallas_call(
        _fused_kernel,
        out_shape=jax.ShapeDtypeStruct((N, COUT2, OH2, OW2), jnp.float32),
        in_specs=[smem, smem, smem, smem, vmem],
        out_specs=vmem,
        scratch_shapes=[pltpu.VMEM((N * COUT1, OH1 + 2, OW1 + 2), jnp.float32)],
    )(w1f, b1, w2f, b2, xpoly)


def _reference(x_nchw, params):
    dn = ("NCHW", "OIHW", "NCHW")
    v1 = jax.lax.conv_general_dilated(x_nchw, params["w1"], (2, 2),
                                      [(1, 1), (1, 1)], dimension_numbers=dn)
    v1 = jax.nn.relu(v1 + params["b1"].reshape(1, -1, 1, 1))
    v2 = jax.lax.conv_general_dilated(v1, params["w2"], (1, 1),
                                      [(1, 1), (1, 1)], dimension_numbers=dn)
    v2 = jax.nn.relu(v2 + params["b2"].reshape(1, -1, 1, 1))
    v5 = jnp.where(v2 > 0, v2, v2 * 0.1)
    return jax.nn.relu(v5)


if __name__ == "__main__":
    key = jax.random.PRNGKey(0)
    kx, kw1, kb1, kw2, kb2 = jax.random.split(key, 5)

    params = {
        "w1": jax.random.normal(kw1, (3, 3, 3, 3), jnp.float32) * 0.2,
        "b1": jax.random.normal(kb1, (3,), jnp.float32) * 0.1,
        "w2": jax.random.normal(kw2, (3, 3, 3, 3), jnp.float32) * 0.2,
        "b2": jax.random.normal(kb2, (3,), jnp.float32) * 0.1,
    }
    x = jax.random.normal(kx, (N, CIN, H, W), jnp.float32)

    out = jax.block_until_ready(model_forward(x, params))
    ref = jax.block_until_ready(_reference(x, params))

    assert out.shape == (2, 3, 8, 8), out.shape
    np.testing.assert_allclose(np.asarray(out), np.asarray(ref),
                               rtol=1e-5, atol=1e-5)
    print("KERNEL_OK")
</pallas_src>

<mosaic_0001>
module attributes {stable_mosaic.version = 11 : i64} {
  func.func @_fused_kernel(%arg0: memref<81xf32, #tpu.memory_space<smem>>, %arg1: memref<3xf32, #tpu.memory_space<smem>>, %arg2: memref<81xf32, #tpu.memory_space<smem>>, %arg3: memref<3xf32, #tpu.memory_space<smem>>, %arg4: memref<24x9x9xf32, #tpu.memory_space<vmem>>, %arg5: memref<2x3x8x8xf32, #tpu.memory_space<vmem>>, %arg6: memref<6x10x10xf32, #tpu.memory_space<vmem>>) attributes {dimension_semantics = [], scalar_prefetch = 0 : i64, scratch_operands = 1 : i64, tpu.core_type = #tpu.core_type<tc>} {
    %cst = arith.constant 0.000000e+00 : f32
    %0 = vector.broadcast %cst : f32 to vector<6x10x10xf32>
    %c0 = arith.constant 0 : index
    %c0_0 = arith.constant 0 : index
    %c0_1 = arith.constant 0 : index
    %1 = vector.load %arg6[%c0, %c0_0, %c0_1] : memref<6x10x10xf32, #tpu.memory_space<vmem>>, vector<6x10x10xf32>
    tpu.vector_store %arg6[%c0, %c0_0, %c0_1], %0 {strides = array<i32>} : memref<6x10x10xf32, #tpu.memory_space<vmem>>, vector<6x10x10xf32>,
    %cst_2 = arith.constant 0.000000e+00 : f32
    %2 = vector.broadcast %cst_2 : f32 to vector<8x8xf32>
    %c0_3 = arith.constant 0 : index
    %c0_4 = arith.constant 0 : index
    %c0_5 = arith.constant 0 : index
    %3 = vector.load %arg4[%c0_3, %c0_4, %c0_5] : memref<24x9x9xf32, #tpu.memory_space<vmem>>, vector<1x8x8xf32>
    %4 = vector.shape_cast %3 : vector<1x8x8xf32> to vector<8x8xf32>
    %c0_6 = arith.constant 0 : index
    %5 = memref.load %arg0[%c0_6] : memref<81xf32, #tpu.memory_space<smem>>
    %6 = vector.broadcast %5 : f32 to vector<8x8xf32>
    %7 = arith.mulf %6, %4 : vector<8x8xf32>
    %8 = arith.addf %2, %7 : vector<8x8xf32>
    %c6 = arith.constant 6 : index
    %c0_7 = arith.constant 0 : index
    %c0_8 = arith.constant 0 : index
    %9 = vector.load %arg4[%c6, %c0_7, %c0_8] : memref<24x9x9xf32, #tpu.memory_space<vmem>>, vector<1x8x8xf32>
    %10 = vector.shape_cast %9 : vector<1x8x8xf32> to vector<8x8xf32>
    %c1 = arith.constant 1 : index
    %11 = memref.load %arg0[%c1] : memref<81xf32, #tpu.memory_space<smem>>
    %12 = vector.broadcast %11 : f32 to vector<8x8xf32>
    %13 = arith.mulf %12, %10 : vector<8x8xf32>
    %14 = arith.addf %8, %13 : vector<8x8xf32>
    %c0_9 = arith.constant 0 : index
    %c0_10 = arith.constant 0 : index
    %c1_11 = arith.constant 1 : index
    %15 = vector.load %arg4[%c0_9, %c0_10, %c1_11] : memref<24x9x9xf32, #tpu.memory_space<vmem>>, vector<1x8x8xf32>
    %16 = vector.shape_cast %15 : vector<1x8x8xf32> to vector<8x8xf32>
    %c2 = arith.constant 2 : index
    %17 = memref.load %arg0[%c2] : memref<81xf32, #tpu.memory_space<smem>>
    %18 = vector.broadcast %17 : f32 to vector<8x8xf32>
    %19 = arith.mulf %18, %16 : vector<8x8xf32>
    %20 = arith.addf %14, %19 : vector<8x8xf32>
    %c12 = arith.constant 12 : index
    %c0_12 = arith.constant 0 : index
    %c0_13 = arith.constant 0 : index
    %21 = vector.load %arg4[%c12, %c0_12, %c0_13] : memref<24x9x9xf32, #tpu.memory_space<vmem>>, vector<1x8x8xf32>
    %22 = vector.shape_cast %21 : vector<1x8x8xf32> to vector<8x8xf32>
    %c3 = arith.constant 3 : index
    %23 = memref.load %arg0[%c3] : memref<81xf32, #tpu.memory_space<smem>>
    %24 = vector.broadcast %23 : f32 to vector<8x8xf32>
    %25 = arith.mulf %24, %22 : vector<8x8xf32>
    %26 = arith.addf %20, %25 : vector<8x8xf32>
    %c18 = arith.constant 18 : index
    %c0_14 = arith.constant 0 : index
    %c0_15 = arith.constant 0 : index
    %27 = vector.load %arg4[%c18, %c0_14, %c0_15] : memref<24x9x9xf32, #tpu.memory_space<vmem>>, vector<1x8x8xf32>
    %28 = vector.shape_cast %27 : vector<1x8x8xf32> to vector<8x8xf32>
    %c4 = arith.constant 4 : index
    %29 = memref.load %arg0[%c4] : memref<81xf32, #tpu.memory_space<smem>>
    %30 = vector.broadcast %29 : f32 to vector<8x8xf32>
    %31 = arith.mulf %30, %28 : vector<8x8xf32>
    %32 = arith.addf %26, %31 : vector<8x8xf32>
    %c12_16 = arith.constant 12 : index
    %c0_17 = arith.constant 0 : index
    %c1_18 = arith.constant 1 : index
    %33 = vector.load %arg4[%c12_16, %c0_17, %c1_18] : memref<24x9x9xf32, #tpu.memory_space<vmem>>, vector<1x8x8xf32>
    %34 = vector.shape_cast %33 : vector<1x8x8xf32> to vector<8x8xf32>
    %c5 = arith.constant 5 : index
    %35 = memref.load %arg0[%c5] : memref<81xf32, #tpu.memory_space<smem>>
    %36 = vector.broadcast %35 : f32 to vector<8x8xf32>
    %37 = arith.mulf %36, %34 : vector<8x8xf32>
    %38 = arith.addf %32, %37 : vector<8x8xf32>
    %c0_19 = arith.constant 0 : index
    %c1_20 = arith.constant 1 : index
    %c0_21 = arith.constant 0 : index
    %39 = vector.load %arg4[%c0_19, %c1_20, %c0_21] : memref<24x9x9xf32, #tpu.memory_space<vmem>>, vector<1x8x8xf32>
    %40 = vector.shape_cast %39 : vector<1x8x8xf32> to vector<8x8xf32>
    %c6_22 = arith.constant 6 : index
    %41 = memref.load %arg0[%c6_22] : memref<81xf32, #tpu.memory_space<smem>>
    %42 = vector.broadcast %41 : f32 to vector<8x8xf32>
    %43 = arith.mulf %42, %40 : vector<8x8xf32>
    %44 = arith.addf %38, %43 : vector<8x8xf32>
    %c6_23 = arith.constant 6 : index
    %c1_24 = arith.constant 1 : index
    %c0_25 = arith.constant 0 : index
    %45 = vector.load %arg4[%c6_23, %c1_24, %c0_25] : memref<24x9x9xf32, #tpu.memory_space<vmem>>, vector<1x8x8xf32>
    %46 = vector.shape_cast %45 : vector<1x8x8xf32> to vector<8x8xf32>
    %c7 = arith.constant 7 : index
    %47 = memref.load %arg0[%c7] : memref<81xf32, #tpu.memory_space<smem>>
    %48 = vector.broadcast %47 : f32 to vector<8x8xf32>
    %49 = arith.mulf %48, %46 : vector<8x8xf32>
    %50 = arith.addf %44, %49 : vector<8x8xf32>
    %c0_26 = arith.constant 0 : index
    %c1_27 = arith.constant 1 : index
    %c1_28 = arith.constant 1 : index
    %51 = vector.load %arg4[%c0_26, %c1_27, %c1_28] : memref<24x9x9xf32, #tpu.memory_space<vmem>>, vector<1x8x8xf32>
    %52 = vector.shape_cast %51 : vector<1x8x8xf32> to vector<8x8xf32>
    %c8 = arith.constant 8 : index
    %53 = memref.load %arg0[%c8] : memref<81xf32, #tpu.memory_space<smem>>
    %54 = vector.broadcast %53 : f32 to vector<8x8xf32>
    %55 = arith.mulf %54, %52 : vector<8x8xf32>
    %56 = arith.addf %50, %55 : vector<8x8xf32>
    %c1_29 = arith.constant 1 : index
    %c0_30 = arith.constant 0 : index
    %c0_31 = arith.constant 0 : index
    %57 = vector.load %arg4[%c1_29, %c0_30, %c0_31] : memref<24x9x9xf32, #tpu.memory_space<vmem>>, vector<1x8x8xf32>
    %58 = vector.shape_cast %57 : vector<1x8x8xf32> to vector<8x8xf32>
    %c9 = arith.constant 9 : index
    %59 = memref.load %arg0[%c9] : memref<81xf32, #tpu.memory_space<smem>>
    %60 = vector.broadcast %59 : f32 to vector<8x8xf32>
    %61 = arith.mulf %60, %58 : vector<8x8xf32>
    %62 = arith.addf %56, %61 : vector<8x8xf32>
    %c7_32 = arith.constant 7 : index
    %c0_33 = arith.constant 0 : index
    %c0_34 = arith.constant 0 : index
    %63 = vector.load %arg4[%c7_32, %c0_33, %c0_34] : memref<24x9x9xf32, #tpu.memory_space<vmem>>, vector<1x8x8xf32>
    %64 = vector.shape_cast %63 : vector<1x8x8xf32> to vector<8x8xf32>
    %c10 = arith.constant 10 : index
    %65 = memref.load %arg0[%c10] : memref<81xf32, #tpu.memory_space<smem>>
    %66 = vector.broadcast %65 : f32 to vector<8x8xf32>
    %67 = arith.mulf %66, %64 : vector<8x8xf32>
    %68 = arith.addf %62, %67 : vector<8x8xf32>
    %c1_35 = arith.constant 1 : index
    %c0_36 = arith.constant 0 : index
    %c1_37 = arith.constant 1 : index
    %69 = vector.load %arg4[%c1_35, %c0_36, %c1_37] : memref<24x9x9xf32, #tpu.memory_space<vmem>>, vector<1x8x8xf32>
    %70 = vector.shape_cast %69 : vector<1x8x8xf32> to vector<8x8xf32>
    %c11 = arith.constant 11 : index
    %71 = memref.load %arg0[%c11] : memref<81xf32, #tpu.memory_space<smem>>
    %72 = vector.broadcast %71 : f32 to vector<8x8xf32>
    %73 = arith.mulf %72, %70 : vector<8x8xf32>
    %74 = arith.addf %68, %73 : vector<8x8xf32>
    %c13 = arith.constant 13 : index
    %c0_38 = arith.constant 0 : index
    %c0_39 = arith.constant 0 : index
    %75 = vector.load %arg4[%c13, %c0_38, %c0_39] : memref<24x9x9xf32, #tpu.memory_space<vmem>>, vector<1x8x8xf32>
    %76 = vector.shape_cast %75 : vector<1x8x8xf32> to vector<8x8xf32>
    %c12_40 = arith.constant 12 : index
    %77 = memref.load %arg0[%c12_40] : memref<81xf32, #tpu.memory_space<smem>>
    %78 = vector.broadcast %77 : f32 to vector<8x8xf32>
    %79 = arith.mulf %78, %76 : vector<8x8xf32>
    %80 = arith.addf %74, %79 : vector<8x8xf32>
    %c19 = arith.constant 19 : index
    %c0_41 = arith.constant 0 : index
    %c0_42 = arith.constant 0 : index
    %81 = vector.load %arg4[%c19, %c0_41, %c0_42] : memref<24x9x9xf32, #tpu.memory_space<vmem>>, vector<1x8x8xf32>
    %82 = vector.shape_cast %81 : vector<1x8x8xf32> to vector<8x8xf32>
    %c13_43 = arith.constant 13 : index
    %83 = memref.load %arg0[%c13_43] : memref<81xf32, #tpu.memory_space<smem>>
    %84 = vector.broadcast %83 : f32 to vector<8x8xf32>
    %85 = arith.mulf %84, %82 : vector<8x8xf32>
    %86 = arith.addf %80, %85 : vector<8x8xf32>
    %c13_44 = arith.constant 13 : index
    %c0_45 = arith.constant 0 : index
    %c1_46 = arith.constant 1 : index
    %87 = vector.load %arg4[%c13_44, %c0_45, %c1_46] : memref<24x9x9xf32, #tpu.memory_space<vmem>>, vector<1x8x8xf32>
    %88 = vector.shape_cast %87 : vector<1x8x8xf32> to vector<8x8xf32>
    %c14 = arith.constant 14 : index
    %89 = memref.load %arg0[%c14] : memref<81xf32, #tpu.memory_space<smem>>
    %90 = vector.broadcast %89 : f32 to vector<8x8xf32>
    %91 = arith.mulf %90, %88 : vector<8x8xf32>
    %92 = arith.addf %86, %91 : vector<8x8xf32>
    %c1_47 = arith.constant 1 : index
    %c1_48 = arith.constant 1 : index
    %c0_49 = arith.constant 0 : index
    %93 = vector.load %arg4[%c1_47, %c1_48, %c0_49] : memref<24x9x9xf32, #tpu.memory_space<vmem>>, vector<1x8x8xf32>
    %94 = vector.shape_cast %93 : vector<1x8x8xf32> to vector<8x8xf32>
    %c15 = arith.constant 15 : index
    %95 = memref.load %arg0[%c15] : memref<81xf32, #tpu.memory_space<smem>>
    %96 = vector.broadcast %95 : f32 to vector<8x8xf32>
    %97 = arith.mulf %96, %94 : vector<8x8xf32>
    %98 = arith.addf %92, %97 : vector<8x8xf32>
    %c7_50 = arith.constant 7 : index
    %c1_51 = arith.constant 1 : index
    %c0_52 = arith.constant 0 : index
    %99 = vector.load %arg4[%c7_50, %c1_51, %c0_52] : memref<24x9x9xf32, #tpu.memory_space<vmem>>, vector<1x8x8xf32>
    %100 = vector.shape_cast %99 : vector<1x8x8xf32> to vector<8x8xf32>
    %c16 = arith.constant 16 : index
    %101 = memref.load %arg0[%c16] : memref<81xf32, #tpu.memory_space<smem>>
    %102 = vector.broadcast %101 : f32 to vector<8x8xf32>
    %103 = arith.mulf %102, %100 : vector<8x8xf32>
    %104 = arith.addf %98, %103 : vector<8x8xf32>
    %c1_53 = arith.constant 1 : index
    %c1_54 = arith.constant 1 : index
    %c1_55 = arith.constant 1 : index
    %105 = vector.load %arg4[%c1_53, %c1_54, %c1_55] : memref<24x9x9xf32, #tpu.memory_space<vmem>>, vector<1x8x8xf32>
    %106 = vector.shape_cast %105 : vector<1x8x8xf32> to vector<8x8xf32>
    %c17 = arith.constant 17 : index
    %107 = memref.load %arg0[%c17] : memref<81xf32, #tpu.memory_space<smem>>
    %108 = vector.broadcast %107 : f32 to vector<8x8xf32>
    %109 = arith.mulf %108, %106 : vector<8x8xf32>
    %110 = arith.addf %104, %109 : vector<8x8xf32>
    %c2_56 = arith.constant 2 : index
    %c0_57 = arith.constant 0 : index
    %c0_58 = arith.constant 0 : index
    %111 = vector.load %arg4[%c2_56, %c0_57, %c0_58] : memref<24x9x9xf32, #tpu.memory_space<vmem>>, vector<1x8x8xf32>
    %112 = vector.shape_cast %111 : vector<1x8x8xf32> to vector<8x8xf32>
    %c18_59 = arith.constant 18 : index
    %113 = memref.load %arg0[%c18_59] : memref<81xf32, #tpu.memory_space<smem>>
    %114 = vector.broadcast %113 : f32 to vector<8x8xf32>
    %115 = arith.mulf %114, %112 : vector<8x8xf32>
    %116 = arith.addf %110, %115 : vector<8x8xf32>
    %c8_60 = arith.constant 8 : index
    %c0_61 = arith.constant 0 : index
    %c0_62 = arith.constant 0 : index
    %117 = vector.load %arg4[%c8_60, %c0_61, %c0_62] : memref<24x9x9xf32, #tpu.memory_space<vmem>>, vector<1x8x8xf32>
    %118 = vector.shape_cast %117 : vector<1x8x8xf32> to vector<8x8xf32>
    %c19_63 = arith.constant 19 : index
    %119 = memref.load %arg0[%c19_63] : memref<81xf32, #tpu.memory_space<smem>>
    %120 = vector.broadcast %119 : f32 to vector<8x8xf32>
    %121 = arith.mulf %120, %118 : vector<8x8xf32>
    %122 = arith.addf %116, %121 : vector<8x8xf32>
    %c2_64 = arith.constant 2 : index
    %c0_65 = arith.constant 0 : index
    %c1_66 = arith.constant 1 : index
    %123 = vector.load %arg4[%c2_64, %c0_65, %c1_66] : memref<24x9x9xf32, #tpu.memory_space<vmem>>, vector<1x8x8xf32>
    %124 = vector.shape_cast %123 : vector<1x8x8xf32> to vector<8x8xf32>
    %c20 = arith.constant 20 : index
    %125 = memref.load %arg0[%c20] : memref<81xf32, #tpu.memory_space<smem>>
    %126 = vector.broadcast %125 : f32 to vector<8x8xf32>
    %127 = arith.mulf %126, %124 : vector<8x8xf32>
    %128 = arith.addf %122, %127 : vector<8x8xf32>
    %c14_67 = arith.constant 14 : index
    %c0_68 = arith.constant 0 : index
    %c0_69 = arith.constant 0 : index
    %129 = vector.load %arg4[%c14_67, %c0_68, %c0_69] : memref<24x9x9xf32, #tpu.memory_space<vmem>>, vector<1x8x8xf32>
    %130 = vector.shape_cast %129 : vector<1x8x8xf32> to vector<8x8xf32>
    %c21 = arith.constant 21 : index
    %131 = memref.load %arg0[%c21] : memref<81xf32, #tpu.memory_space<smem>>
    %132 = vector.broadcast %131 : f32 to vector<8x8xf32>
    %133 = arith.mulf %132, %130 : vector<8x8xf32>
    %134 = arith.addf %128, %133 : vector<8x8xf32>
    %c20_70 = arith.constant 20 : index
    %c0_71 = arith.constant 0 : index
    %c0_72 = arith.constant 0 : index
    %135 = vector.load %arg4[%c20_70, %c0_71, %c0_72] : memref<24x9x9xf32, #tpu.memory_space<vmem>>, vector<1x8x8xf32>
    %136 = vector.shape_cast %135 : vector<1x8x8xf32> to vector<8x8xf32>
    %c22 = arith.constant 22 : index
    %137 = memref.load %arg0[%c22] : memref<81xf32, #tpu.memory_space<smem>>
    %138 = vector.broadcast %137 : f32 to vector<8x8xf32>
    %139 = arith.mulf %138, %136 : vector<8x8xf32>
    %140 = arith.addf %134, %139 : vector<8x8xf32>
    %c14_73 = arith.constant 14 : index
    %c0_74 = arith.constant 0 : index
    %c1_75 = arith.constant 1 : index
    %141 = vector.load %arg4[%c14_73, %c0_74, %c1_75] : memref<24x9x9xf32, #tpu.memory_space<vmem>>, vector<1x8x8xf32>
    %142 = vector.shape_cast %141 : vector<1x8x8xf32> to vector<8x8xf32>
    %c23 = arith.constant 23 : index
    %143 = memref.load %arg0[%c23] : memref<81xf32, #tpu.memory_space<smem>>
    %144 = vector.broadcast %143 : f32 to vector<8x8xf32>
    %145 = arith.mulf %144, %142 : vector<8x8xf32>
    %146 = arith.addf %140, %145 : vector<8x8xf32>
    %c2_76 = arith.constant 2 : index
    %c1_77 = arith.constant 1 : index
    %c0_78 = arith.constant 0 : index
    %147 = vector.load %arg4[%c2_76, %c1_77, %c0_78] : memref<24x9x9xf32, #tpu.memory_space<vmem>>, vector<1x8x8xf32>
    %148 = vector.shape_cast %147 : vector<1x8x8xf32> to vector<8x8xf32>
    %c24 = arith.constant 24 : index
    %149 = memref.load %arg0[%c24] : memref<81xf32, #tpu.memory_space<smem>>
    %150 = vector.broadcast %149 : f32 to vector<8x8xf32>
    %151 = arith.mulf %150, %148 : vector<8x8xf32>
    %152 = arith.addf %146, %151 : vector<8x8xf32>
    %c8_79 = arith.constant 8 : index
    %c1_80 = arith.constant 1 : index
    %c0_81 = arith.constant 0 : index
    %153 = vector.load %arg4[%c8_79, %c1_80, %c0_81] : memref<24x9x9xf32, #tpu.memory_space<vmem>>, vector<1x8x8xf32>
    %154 = vector.shape_cast %153 : vector<1x8x8xf32> to vector<8x8xf32>
    %c25 = arith.constant 25 : index
    %155 = memref.load %arg0[%c25] : memref<81xf32, #tpu.memory_space<smem>>
    %156 = vector.broadcast %155 : f32 to vector<8x8xf32>
    %157 = arith.mulf %156, %154 : vector<8x8xf32>
    %158 = arith.addf %152, %157 : vector<8x8xf32>
    %c2_82 = arith.constant 2 : index
    %c1_83 = arith.constant 1 : index
    %c1_84 = arith.constant 1 : index
    %159 = vector.load %arg4[%c2_82, %c1_83, %c1_84] : memref<24x9x9xf32, #tpu.memory_space<vmem>>, vector<1x8x8xf32>
    %160 = vector.shape_cast %159 : vector<1x8x8xf32> to vector<8x8xf32>
    %c26 = arith.constant 26 : index
    %161 = memref.load %arg0[%c26] : memref<81xf32, #tpu.memory_space<smem>>
    %162 = vector.broadcast %161 : f32 to vector<8x8xf32>
    %163 = arith.mulf %162, %160 : vector<8x8xf32>
    %164 = arith.addf %158, %163 : vector<8x8xf32>
    %c0_85 = arith.constant 0 : index
    %165 = memref.load %arg1[%c0_85] : memref<3xf32, #tpu.memory_space<smem>>
    %166 = vector.broadcast %165 : f32 to vector<8x8xf32>
    %167 = arith.addf %164, %166 : vector<8x8xf32>
    %cst_86 = arith.constant 0.000000e+00 : f32
    %168 = vector.broadcast %cst_86 : f32 to vector<8x8xf32>
    %169 = arith.maximumf %167, %168 : vector<8x8xf32>
    %c0_87 = arith.constant 0 : index
    %c1_88 = arith.constant 1 : index
    %c1_89 = arith.constant 1 : index
    %170 = vector.load %arg6[%c0_87, %c1_88, %c1_89] : memref<6x10x10xf32, #tpu.memory_space<vmem>>, vector<1x8x8xf32>
    %171 = vector.shape_cast %170 : vector<1x8x8xf32> to vector<8x8xf32>
    %172 = vector.shape_cast %169 : vector<8x8xf32> to vector<1x8x8xf32>
    tpu.vector_store %arg6[%c0_87, %c1_88, %c1_89], %172 {strides = array<i32>} : memref<6x10x10xf32, #tpu.memory_space<vmem>>, vector<1x8x8xf32>,
    %cst_90 = arith.constant 0.000000e+00 : f32
    %173 = vector.broadcast %cst_90 : f32 to vector<8x8xf32>
    %c0_91 = arith.constant 0 : index
    %c0_92 = arith.constant 0 : index
    %c0_93 = arith.constant 0 : index
    %174 = vector.load %arg4[%c0_91, %c0_92, %c0_93] : memref<24x9x9xf32, #tpu.memory_space<vmem>>, vector<1x8x8xf32>
    %175 = vector.shape_cast %174 : vector<1x8x8xf32> to vector<8x8xf32>
    %c27 = arith.constant 27 : index
    %176 = memref.load %arg0[%c27] : memref<81xf32, #tpu.memory_space<smem>>
    %177 = vector.broadcast %176 : f32 to vector<8x8xf32>
    %178 = arith.mulf %177, %175 : vector<8x8xf32>
    %179 = arith.addf %173, %178 : vector<8x8xf32>
    %c6_94 = arith.constant 6 : index
    %c0_95 = arith.constant 0 : index
    %c0_96 = arith.constant 0 : index
    %180 = vector.load %arg4[%c6_94, %c0_95, %c0_96] : memref<24x9x9xf32, #tpu.memory_space<vmem>>, vector<1x8x8xf32>
    %181 = vector.shape_cast %180 : vector<1x8x8xf32> to vector<8x8xf32>
    %c28 = arith.constant 28 : index
    %182 = memref.load %arg0[%c28] : memref<81xf32, #tpu.memory_space<smem>>
    %183 = vector.broadcast %182 : f32 to vector<8x8xf32>
    %184 = arith.mulf %183, %181 : vector<8x8xf32>
    %185 = arith.addf %179, %184 : vector<8x8xf32>
    %c0_97 = arith.constant 0 : index
    %c0_98 = arith.constant 0 : index
    %c1_99 = arith.constant 1 : index
    %186 = vector.load %arg4[%c0_97, %c0_98, %c1_99] : memref<24x9x9xf32, #tpu.memory_space<vmem>>, vector<1x8x8xf32>
    %187 = vector.shape_cast %186 : vector<1x8x8xf32> to vector<8x8xf32>
    %c29 = arith.constant 29 : index
    %188 = memref.load %arg0[%c29] : memref<81xf32, #tpu.memory_space<smem>>
    %189 = vector.broadcast %188 : f32 to vector<8x8xf32>
    %190 = arith.mulf %189, %187 : vector<8x8xf32>
    %191 = arith.addf %185, %190 : vector<8x8xf32>
    %c12_100 = arith.constant 12 : index
    %c0_101 = arith.constant 0 : index
    %c0_102 = arith.constant 0 : index
    %192 = vector.load %arg4[%c12_100, %c0_101, %c0_102] : memref<24x9x9xf32, #tpu.memory_space<vmem>>, vector<1x8x8xf32>
    %193 = vector.shape_cast %192 : vector<1x8x8xf32> to vector<8x8xf32>
    %c30 = arith.constant 30 : index
    %194 = memref.load %arg0[%c30] : memref<81xf32, #tpu.memory_space<smem>>
    %195 = vector.broadcast %194 : f32 to vector<8x8xf32>
    %196 = arith.mulf %195, %193 : vector<8x8xf32>
    %197 = arith.addf %191, %196 : vector<8x8xf32>
    %c18_103 = arith.constant 18 : index
    %c0_104 = arith.constant 0 : index
    %c0_105 = arith.constant 0 : index
    %198 = vector.load %arg4[%c18_103, %c0_104, %c0_105] : memref<24x9x9xf32, #tpu.memory_space<vmem>>, vector<1x8x8xf32>
    %199 = vector.shape_cast %198 : vector<1x8x8xf32> to vector<8x8xf32>
    %c31 = arith.constant 31 : index
    %200 = memref.load %arg0[%c31] : memref<81xf32, #tpu.memory_space<smem>>
    %201 = vector.broadcast %200 : f32 to vector<8x8xf32>
    %202 = arith.mulf %201, %199 : vector<8x8xf32>
    %203 = arith.addf %197, %202 : vector<8x8xf32>
    %c12_106 = arith.constant 12 : index
    %c0_107 = arith.constant 0 : index
    %c1_108 = arith.constant 1 : index
    %204 = vector.load %arg4[%c12_106, %c0_107, %c1_108] : memref<24x9x9xf32, #tpu.memory_space<vmem>>, vector<1x8x8xf32>
    %205 = vector.shape_cast %204 : vector<1x8x8xf32> to vector<8x8xf32>
    %c32 = arith.constant 32 : index
    %206 = memref.load %arg0[%c32] : memref<81xf32, #tpu.memory_space<smem>>
    %207 = vector.broadcast %206 : f32 to vector<8x8xf32>
    %208 = arith.mulf %207, %205 : vector<8x8xf32>
    %209 = arith.addf %203, %208 : vector<8x8xf32>
    %c0_109 = arith.constant 0 : index
    %c1_110 = arith.constant 1 : index
    %c0_111 = arith.constant 0 : index
    %210 = vector.load %arg4[%c0_109, %c1_110, %c0_111] : memref<24x9x9xf32, #tpu.memory_space<vmem>>, vector<1x8x8xf32>
    %211 = vector.shape_cast %210 : vector<1x8x8xf32> to vector<8x8xf32>
    %c33 = arith.constant 33 : index
    %212 = memref.load %arg0[%c33] : memref<81xf32, #tpu.memory_space<smem>>
    %213 = vector.broadcast %212 : f32 to vector<8x8xf32>
    %214 = arith.mulf %213, %211 : vector<8x8xf32>
    %215 = arith.addf %209, %214 : vector<8x8xf32>
    %c6_112 = arith.constant 6 : index
    %c1_113 = arith.constant 1 : index
    %c0_114 = arith.constant 0 : index
    %216 = vector.load %arg4[%c6_112, %c1_113, %c0_114] : memref<24x9x9xf32, #tpu.memory_space<vmem>>, vector<1x8x8xf32>
    %217 = vector.shape_cast %216 : vector<1x8x8xf32> to vector<8x8xf32>
    %c34 = arith.constant 34 : index
    %218 = memref.load %arg0[%c34] : memref<81xf32, #tpu.memory_space<smem>>
    %219 = vector.broadcast %218 : f32 to vector<8x8xf32>
    %220 = arith.mulf %219, %217 : vector<8x8xf32>
    %221 = arith.addf %215, %220 : vector<8x8xf32>
    %c0_115 = arith.constant 0 : index
    %c1_116 = arith.constant 1 : index
    %c1_117 = arith.constant 1 : index
    %222 = vector.load %arg4[%c0_115, %c1_116, %c1_117] : memref<24x9x9xf32, #tpu.memory_space<vmem>>, vector<1x8x8xf32>
    %223 = vector.shape_cast %222 : vector<1x8x8xf32> to vector<8x8xf32>
    %c35 = arith.constant 35 : index
    %224 = memref.load %arg0[%c35] : memref<81xf32, #tpu.memory_space<smem>>
    %225 = vector.broadcast %224 : f32 to vector<8x8xf32>
    %226 = arith.mulf %225, %223 : vector<8x8xf32>
    %227 = arith.addf %221, %226 : vector<8x8xf32>
    %c1_118 = arith.constant 1 : index
    %c0_119 = arith.constant 0 : index
    %c0_120 = arith.constant 0 : index
    %228 = vector.load %arg4[%c1_118, %c0_119, %c0_120] : memref<24x9x9xf32, #tpu.memory_space<vmem>>, vector<1x8x8xf32>
    %229 = vector.shape_cast %228 : vector<1x8x8xf32> to vector<8x8xf32>
    %c36 = arith.constant 36 : index
    %230 = memref.load %arg0[%c36] : memref<81xf32, #tpu.memory_space<smem>>
    %231 = vector.broadcast %230 : f32 to vector<8x8xf32>
    %232 = arith.mulf %231, %229 : vector<8x8xf32>
    %233 = arith.addf %227, %232 : vector<8x8xf32>
    %c7_121 = arith.constant 7 : index
    %c0_122 = arith.constant 0 : index
    %c0_123 = arith.constant 0 : index
    %234 = vector.load %arg4[%c7_121, %c0_122, %c0_123] : memref<24x9x9xf32, #tpu.memory_space<vmem>>, vector<1x8x8xf32>
    %235 = vector.shape_cast %234 : vector<1x8x8xf32> to vector<8x8xf32>
    %c37 = arith.constant 37 : index
    %236 = memref.load %arg0[%c37] : memref<81xf32, #tpu.memory_space<smem>>
    %237 = vector.broadcast %236 : f32 to vector<8x8xf32>
    %238 = arith.mulf %237, %235 : vector<8x8xf32>
    %239 = arith.addf %233, %238 : vector<8x8xf32>
    %c1_124 = arith.constant 1 : index
    %c0_125 = arith.constant 0 : index
    %c1_126 = arith.constant 1 : index
    %240 = vector.load %arg4[%c1_124, %c0_125, %c1_126] : memref<24x9x9xf32, #tpu.memory_space<vmem>>, vector<1x8x8xf32>
    %241 = vector.shape_cast %240 : vector<1x8x8xf32> to vector<8x8xf32>
    %c38 = arith.constant 38 : index
    %242 = memref.load %arg0[%c38] : memref<81xf32, #tpu.memory_space<smem>>
    %243 = vector.broadcast %242 : f32 to vector<8x8xf32>
    %244 = arith.mulf %243, %241 : vector<8x8xf32>
    %245 = arith.addf %239, %244 : vector<8x8xf32>
    %c13_127 = arith.constant 13 : index
    %c0_128 = arith.constant 0 : index
    %c0_129 = arith.constant 0 : index
    %246 = vector.load %arg4[%c13_127, %c0_128, %c0_129] : memref<24x9x9xf32, #tpu.memory_space<vmem>>, vector<1x8x8xf32>
    %247 = vector.shape_cast %246 : vector<1x8x8xf32> to vector<8x8xf32>
    %c39 = arith.constant 39 : index
    %248 = memref.load %arg0[%c39] : memref<81xf32, #tpu.memory_space<smem>>
    %249 = vector.broadcast %248 : f32 to vector<8x8xf32>
    %250 = arith.mulf %249, %247 : vector<8x8xf32>
    %251 = arith.addf %245, %250 : vector<8x8xf32>
    %c19_130 = arith.constant 19 : index
    %c0_131 = arith.constant 0 : index
    %c0_132 = arith.constant 0 : index
    %252 = vector.load %arg4[%c19_130, %c0_131, %c0_132] : memref<24x9x9xf32, #tpu.memory_space<vmem>>, vector<1x8x8xf32>
    %253 = vector.shape_cast %252 : vector<1x8x8xf32> to vector<8x8xf32>
    %c40 = arith.constant 40 : index
    %254 = memref.load %arg0[%c40] : memref<81xf32, #tpu.memory_space<smem>>
    %255 = vector.broadcast %254 : f32 to vector<8x8xf32>
    %256 = arith.mulf %255, %253 : vector<8x8xf32>
    %257 = arith.addf %251, %256 : vector<8x8xf32>
    %c13_133 = arith.constant 13 : index
    %c0_134 = arith.constant 0 : index
    %c1_135 = arith.constant 1 : index
    %258 = vector.load %arg4[%c13_133, %c0_134, %c1_135] : memref<24x9x9xf32, #tpu.memory_space<vmem>>, vector<1x8x8xf32>
    %259 = vector.shape_cast %258 : vector<1x8x8xf32> to vector<8x8xf32>
    %c41 = arith.constant 41 : index
    %260 = memref.load %arg0[%c41] : memref<81xf32, #tpu.memory_space<smem>>
    %261 = vector.broadcast %260 : f32 to vector<8x8xf32>
    %262 = arith.mulf %261, %259 : vector<8x8xf32>
    %263 = arith.addf %257, %262 : vector<8x8xf32>
    %c1_136 = arith.constant 1 : index
    %c1_137 = arith.constant 1 : index
    %c0_138 = arith.constant 0 : index
    %264 = vector.load %arg4[%c1_136, %c1_137, %c0_138] : memref<24x9x9xf32, #tpu.memory_space<vmem>>, vector<1x8x8xf32>
    %265 = vector.shape_cast %264 : vector<1x8x8xf32> to vector<8x8xf32>
    %c42 = arith.constant 42 : index
    %266 = memref.load %arg0[%c42] : memref<81xf32, #tpu.memory_space<smem>>
    %267 = vector.broadcast %266 : f32 to vector<8x8xf32>
    %268 = arith.mulf %267, %265 : vector<8x8xf32>
    %269 = arith.addf %263, %268 : vector<8x8xf32>
    %c7_139 = arith.constant 7 : index
    %c1_140 = arith.constant 1 : index
    %c0_141 = arith.constant 0 : index
    %270 = vector.load %arg4[%c7_139, %c1_140, %c0_141] : memref<24x9x9xf32, #tpu.memory_space<vmem>>, vector<1x8x8xf32>
    %271 = vector.shape_cast %270 : vector<1x8x8xf32> to vector<8x8xf32>
    %c43 = arith.constant 43 : index
    %272 = memref.load %arg0[%c43] : memref<81xf32, #tpu.memory_space<smem>>
    %273 = vector.broadcast %272 : f32 to vector<8x8xf32>
    %274 = arith.mulf %273, %271 : vector<8x8xf32>
    %275 = arith.addf %269, %274 : vector<8x8xf32>
    %c1_142 = arith.constant 1 : index
    %c1_143 = arith.constant 1 : index
    %c1_144 = arith.constant 1 : index
    %276 = vector.load %arg4[%c1_142, %c1_143, %c1_144] : memref<24x9x9xf32, #tpu.memory_space<vmem>>, vector<1x8x8xf32>
    %277 = vector.shape_cast %276 : vector<1x8x8xf32> to vector<8x8xf32>
    %c44 = arith.constant 44 : index
    %278 = memref.load %arg0[%c44] : memref<81xf32, #tpu.memory_space<smem>>
    %279 = vector.broadcast %278 : f32 to vector<8x8xf32>
    %280 = arith.mulf %279, %277 : vector<8x8xf32>
    %281 = arith.addf %275, %280 : vector<8x8xf32>
    %c2_145 = arith.constant 2 : index
    %c0_146 = arith.constant 0 : index
    %c0_147 = arith.constant 0 : index
    %282 = vector.load %arg4[%c2_145, %c0_146, %c0_147] : memref<24x9x9xf32, #tpu.memory_space<vmem>>, vector<1x8x8xf32>
    %283 = vector.shape_cast %282 : vector<1x8x8xf32> to vector<8x8xf32>
    %c45 = arith.constant 45 : index
    %284 = memref.load %arg0[%c45] : memref<81xf32, #tpu.memory_space<smem>>
    %285 = vector.broadcast %284 : f32 to vector<8x8xf32>
    %286 = arith.mulf %285, %283 : vector<8x8xf32>
    %287 = arith.addf %281, %286 : vector<8x8xf32>
    %c8_148 = arith.constant 8 : index
    %c0_149 = arith.constant 0 : index
    %c0_150 = arith.constant 0 : index
    %288 = vector.load %arg4[%c8_148, %c0_149, %c0_150] : memref<24x9x9xf32, #tpu.memory_space<vmem>>, vector<1x8x8xf32>
    %289 = vector.shape_cast %288 : vector<1x8x8xf32> to vector<8x8xf32>
    %c46 = arith.constant 46 : index
    %290 = memref.load %arg0[%c46] : memref<81xf32, #tpu.memory_space<smem>>
    %291 = vector.broadcast %290 : f32 to vector<8x8xf32>
    %292 = arith.mulf %291, %289 : vector<8x8xf32>
    %293 = arith.addf %287, %292 : vector<8x8xf32>
    %c2_151 = arith.constant 2 : index
    %c0_152 = arith.constant 0 : index
    %c1_153 = arith.constant 1 : index
    %294 = vector.load %arg4[%c2_151, %c0_152, %c1_153] : memref<24x9x9xf32, #tpu.memory_space<vmem>>, vector<1x8x8xf32>
    %295 = vector.shape_cast %294 : vector<1x8x8xf32> to vector<8x8xf32>
    %c47 = arith.constant 47 : index
    %296 = memref.load %arg0[%c47] : memref<81xf32, #tpu.memory_space<smem>>
    %297 = vector.broadcast %296 : f32 to vector<8x8xf32>
    %298 = arith.mulf %297, %295 : vector<8x8xf32>
    %299 = arith.addf %293, %298 : vector<8x8xf32>
    %c14_154 = arith.constant 14 : index
    %c0_155 = arith.constant 0 : index
    %c0_156 = arith.constant 0 : index
    %300 = vector.load %arg4[%c14_154, %c0_155, %c0_156] : memref<24x9x9xf32, #tpu.memory_space<vmem>>, vector<1x8x8xf32>
    %301 = vector.shape_cast %300 : vector<1x8x8xf32> to vector<8x8xf32>
    %c48 = arith.constant 48 : index
    %302 = memref.load %arg0[%c48] : memref<81xf32, #tpu.memory_space<smem>>
    %303 = vector.broadcast %302 : f32 to vector<8x8xf32>
    %304 = arith.mulf %303, %301 : vector<8x8xf32>
    %305 = arith.addf %299, %304 : vector<8x8xf32>
    %c20_157 = arith.constant 20 : index
    %c0_158 = arith.constant 0 : index
    %c0_159 = arith.constant 0 : index
    %306 = vector.load %arg4[%c20_157, %c0_158, %c0_159] : memref<24x9x9xf32, #tpu.memory_space<vmem>>, vector<1x8x8xf32>
    %307 = vector.shape_cast %306 : vector<1x8x8xf32> to vector<8x8xf32>
    %c49 = arith.constant 49 : index
    %308 = memref.load %arg0[%c49] : memref<81xf32, #tpu.memory_space<smem>>
    %309 = vector.broadcast %308 : f32 to vector<8x8xf32>
    %310 = arith.mulf %309, %307 : vector<8x8xf32>
    %311 = arith.addf %305, %310 : vector<8x8xf32>
    %c14_160 = arith.constant 14 : index
    %c0_161 = arith.constant 0 : index
    %c1_162 = arith.constant 1 : index
    %312 = vector.load %arg4[%c14_160, %c0_161, %c1_162] : memref<24x9x9xf32, #tpu.memory_space<vmem>>, vector<1x8x8xf32>
    %313 = vector.shape_cast %312 : vector<1x8x8xf32> to vector<8x8xf32>
    %c50 = arith.constant 50 : index
    %314 = memref.load %arg0[%c50] : memref<81xf32, #tpu.memory_space<smem>>
    %315 = vector.broadcast %314 : f32 to vector<8x8xf32>
    %316 = arith.mulf %315, %313 : vector<8x8xf32>
    %317 = arith.addf %311, %316 : vector<8x8xf32>
    %c2_163 = arith.constant 2 : index
    %c1_164 = arith.constant 1 : index
    %c0_165 = arith.constant 0 : index
    %318 = vector.load %arg4[%c2_163, %c1_164, %c0_165] : memref<24x9x9xf32, #tpu.memory_space<vmem>>, vector<1x8x8xf32>
    %319 = vector.shape_cast %318 : vector<1x8x8xf32> to vector<8x8xf32>
    %c51 = arith.constant 51 : index
    %320 = memref.load %arg0[%c51] : memref<81xf32, #tpu.memory_space<smem>>
    %321 = vector.broadcast %320 : f32 to vector<8x8xf32>
    %322 = arith.mulf %321, %319 : vector<8x8xf32>
    %323 = arith.addf %317, %322 : vector<8x8xf32>
    %c8_166 = arith.constant 8 : index
    %c1_167 = arith.constant 1 : index
    %c0_168 = arith.constant 0 : index
    %324 = vector.load %arg4[%c8_166, %c1_167, %c0_168] : memref<24x9x9xf32, #tpu.memory_space<vmem>>, vector<1x8x8xf32>
    %325 = vector.shape_cast %324 : vector<1x8x8xf32> to vector<8x8xf32>
    %c52 = arith.constant 52 : index
    %326 = memref.load %arg0[%c52] : memref<81xf32, #tpu.memory_space<smem>>
    %327 = vector.broadcast %326 : f32 to vector<8x8xf32>
    %328 = arith.mulf %327, %325 : vector<8x8xf32>
    %329 = arith.addf %323, %328 : vector<8x8xf32>
    %c2_169 = arith.constant 2 : index
    %c1_170 = arith.constant 1 : index
    %c1_171 = arith.constant 1 : index
    %330 = vector.load %arg4[%c2_169, %c1_170, %c1_171] : memref<24x9x9xf32, #tpu.memory_space<vmem>>, vector<1x8x8xf32>
    %331 = vector.shape_cast %330 : vector<1x8x8xf32> to vector<8x8xf32>
    %c53 = arith.constant 53 : index
    %332 = memref.load %arg0[%c53] : memref<81xf32, #tpu.memory_space<smem>>
    %333 = vector.broadcast %332 : f32 to vector<8x8xf32>
    %334 = arith.mulf %333, %331 : vector<8x8xf32>
    %335 = arith.addf %329, %334 : vector<8x8xf32>
    %c1_172 = arith.constant 1 : index
    %336 = memref.load %arg1[%c1_172] : memref<3xf32, #tpu.memory_space<smem>>
    %337 = vector.broadcast %336 : f32 to vector<8x8xf32>
    %338 = arith.addf %335, %337 : vector<8x8xf32>
    %cst_173 = arith.constant 0.000000e+00 : f32
    %339 = vector.broadcast %cst_173 : f32 to vector<8x8xf32>
    %340 = arith.maximumf %338, %339 : vector<8x8xf32>
    %c1_174 = arith.constant 1 : index
    %c1_175 = arith.constant 1 : index
    %c1_176 = arith.constant 1 : index
    %341 = vector.load %arg6[%c1_174, %c1_175, %c1_176] : memref<6x10x10xf32, #tpu.memory_space<vmem>>, vector<1x8x8xf32>
    %342 = vector.shape_cast %341 : vector<1x8x8xf32> to vector<8x8xf32>
    %343 = vector.shape_cast %340 : vector<8x8xf32> to vector<1x8x8xf32>
    tpu.vector_store %arg6[%c1_174, %c1_175, %c1_176], %343 {strides = array<i32>} : memref<6x10x10xf32, #tpu.memory_space<vmem>>, vector<1x8x8xf32>,
    %cst_177 = arith.constant 0.000000e+00 : f32
    %344 = vector.broadcast %cst_177 : f32 to vector<8x8xf32>
    %c0_178 = arith.constant 0 : index
    %c0_179 = arith.constant 0 : index
    %c0_180 = arith.constant 0 : index
    %345 = vector.load %arg4[%c0_178, %c0_179, %c0_180] : memref<24x9x9xf32, #tpu.memory_space<vmem>>, vector<1x8x8xf32>
    %346 = vector.shape_cast %345 : vector<1x8x8xf32> to vector<8x8xf32>
    %c54 = arith.constant 54 : index
    %347 = memref.load %arg0[%c54] : memref<81xf32, #tpu.memory_space<smem>>
    %348 = vector.broadcast %347 : f32 to vector<8x8xf32>
    %349 = arith.mulf %348, %346 : vector<8x8xf32>
    %350 = arith.addf %344, %349 : vector<8x8xf32>
    %c6_181 = arith.constant 6 : index
    %c0_182 = arith.constant 0 : index
    %c0_183 = arith.constant 0 : index
    %351 = vector.load %arg4[%c6_181, %c0_182, %c0_183] : memref<24x9x9xf32, #tpu.memory_space<vmem>>, vector<1x8x8xf32>
    %352 = vector.shape_cast %351 : vector<1x8x8xf32> to vector<8x8xf32>
    %c55 = arith.constant 55 : index
    %353 = memref.load %arg0[%c55] : memref<81xf32, #tpu.memory_space<smem>>
    %354 = vector.broadcast %353 : f32 to vector<8x8xf32>
    %355 = arith.mulf %354, %352 : vector<8x8xf32>
    %356 = arith.addf %350, %355 : vector<8x8xf32>
    %c0_184 = arith.constant 0 : index
    %c0_185 = arith.constant 0 : index
    %c1_186 = arith.constant 1 : index
    %357 = vector.load %arg4[%c0_184, %c0_185, %c1_186] : memref<24x9x9xf32, #tpu.memory_space<vmem>>, vector<1x8x8xf32>
    %358 = vector.shape_cast %357 : vector<1x8x8xf32> to vector<8x8xf32>
    %c56 = arith.constant 56 : index
    %359 = memref.load %arg0[%c56] : memref<81xf32, #tpu.memory_space<smem>>
    %360 = vector.broadcast %359 : f32 to vector<8x8xf32>
    %361 = arith.mulf %360, %358 : vector<8x8xf32>
    %362 = arith.addf %356, %361 : vector<8x8xf32>
    %c12_187 = arith.constant 12 : index
    %c0_188 = arith.constant 0 : index
    %c0_189 = arith.constant 0 : index
    %363 = vector.load %arg4[%c12_187, %c0_188, %c0_189] : memref<24x9x9xf32, #tpu.memory_space<vmem>>, vector<1x8x8xf32>
    %364 = vector.shape_cast %363 : vector<1x8x8xf32> to vector<8x8xf32>
    %c57 = arith.constant 57 : index
    %365 = memref.load %arg0[%c57] : memref<81xf32, #tpu.memory_space<smem>>
    %366 = vector.broadcast %365 : f32 to vector<8x8xf32>
    %367 = arith.mulf %366, %364 : vector<8x8xf32>
    %368 = arith.addf %362, %367 : vector<8x8xf32>
    %c18_190 = arith.constant 18 : index
    %c0_191 = arith.constant 0 : index
    %c0_192 = arith.constant 0 : index
    %369 = vector.load %arg4[%c18_190, %c0_191, %c0_192] : memref<24x9x9xf32, #tpu.memory_space<vmem>>, vector<1x8x8xf32>
    %370 = vector.shape_cast %369 : vector<1x8x8xf32> to vector<8x8xf32>
    %c58 = arith.constant 58 : index
    %371 = memref.load %arg0[%c58] : memref<81xf32, #tpu.memory_space<smem>>
    %372 = vector.broadcast %371 : f32 to vector<8x8xf32>
    %373 = arith.mulf %372, %370 : vector<8x8xf32>
    %374 = arith.addf %368, %373 : vector<8x8xf32>
    %c12_193 = arith.constant 12 : index
    %c0_194 = arith.constant 0 : index
    %c1_195 = arith.constant 1 : index
    %375 = vector.load %arg4[%c12_193, %c0_194, %c1_195] : memref<24x9x9xf32, #tpu.memory_space<vmem>>, vector<1x8x8xf32>
    %376 = vector.shape_cast %375 : vector<1x8x8xf32> to vector<8x8xf32>
    %c59 = arith.constant 59 : index
    %377 = memref.load %arg0[%c59] : memref<81xf32, #tpu.memory_space<smem>>
    %378 = vector.broadcast %377 : f32 to vector<8x8xf32>
    %379 = arith.mulf %378, %376 : vector<8x8xf32>
    %380 = arith.addf %374, %379 : vector<8x8xf32>
    %c0_196 = arith.constant 0 : index
    %c1_197 = arith.constant 1 : index
    %c0_198 = arith.constant 0 : index
    %381 = vector.load %arg4[%c0_196, %c1_197, %c0_198] : memref<24x9x9xf32, #tpu.memory_space<vmem>>, vector<1x8x8xf32>
    %382 = vector.shape_cast %381 : vector<1x8x8xf32> to vector<8x8xf32>
    %c60 = arith.constant 60 : index
    %383 = memref.load %arg0[%c60] : memref<81xf32, #tpu.memory_space<smem>>
    %384 = vector.broadcast %383 : f32 to vector<8x8xf32>
    %385 = arith.mulf %384, %382 : vector<8x8xf32>
    %386 = arith.addf %380, %385 : vector<8x8xf32>
    %c6_199 = arith.constant 6 : index
    %c1_200 = arith.constant 1 : index
    %c0_201 = arith.constant 0 : index
    %387 = vector.load %arg4[%c6_199, %c1_200, %c0_201] : memref<24x9x9xf32, #tpu.memory_space<vmem>>, vector<1x8x8xf32>
    %388 = vector.shape_cast %387 : vector<1x8x8xf32> to vector<8x8xf32>
    %c61 = arith.constant 61 : index
    %389 = memref.load %arg0[%c61] : memref<81xf32, #tpu.memory_space<smem>>
    %390 = vector.broadcast %389 : f32 to vector<8x8xf32>
    %391 = arith.mulf %390, %388 : vector<8x8xf32>
    %392 = arith.addf %386, %391 : vector<8x8xf32>
    %c0_202 = arith.constant 0 : index
    %c1_203 = arith.constant 1 : index
    %c1_204 = arith.constant 1 : index
    %393 = vector.load %arg4[%c0_202, %c1_203, %c1_204] : memref<24x9x9xf32, #tpu.memory_space<vmem>>, vector<1x8x8xf32>
    %394 = vector.shape_cast %393 : vector<1x8x8xf32> to vector<8x8xf32>
    %c62 = arith.constant 62 : index
    %395 = memref.load %arg0[%c62] : memref<81xf32, #tpu.memory_space<smem>>
    %396 = vector.broadcast %395 : f32 to vector<8x8xf32>
    %397 = arith.mulf %396, %394 : vector<8x8xf32>
    %398 = arith.addf %392, %397 : vector<8x8xf32>
    %c1_205 = arith.constant 1 : index
    %c0_206 = arith.constant 0 : index
    %c0_207 = arith.constant 0 : index
    %399 = vector.load %arg4[%c1_205, %c0_206, %c0_207] : memref<24x9x9xf32, #tpu.memory_space<vmem>>, vector<1x8x8xf32>
    %400 = vector.shape_cast %399 : vector<1x8x8xf32> to vector<8x8xf32>
    %c63 = arith.constant 63 : index
    %401 = memref.load %arg0[%c63] : memref<81xf32, #tpu.memory_space<smem>>
    %402 = vector.broadcast %401 : f32 to vector<8x8xf32>
    %403 = arith.mulf %402, %400 : vector<8x8xf32>
    %404 = arith.addf %398, %403 : vector<8x8xf32>
    %c7_208 = arith.constant 7 : index
    %c0_209 = arith.constant 0 : index
    %c0_210 = arith.constant 0 : index
    %405 = vector.load %arg4[%c7_208, %c0_209, %c0_210] : memref<24x9x9xf32, #tpu.memory_space<vmem>>, vector<1x8x8xf32>
    %406 = vector.shape_cast %405 : vector<1x8x8xf32> to vector<8x8xf32>
    %c64 = arith.constant 64 : index
    %407 = memref.load %arg0[%c64] : memref<81xf32, #tpu.memory_space<smem>>
    %408 = vector.broadcast %407 : f32 to vector<8x8xf32>
    %409 = arith.mulf %408, %406 : vector<8x8xf32>
    %410 = arith.addf %404, %409 : vector<8x8xf32>
    %c1_211 = arith.constant 1 : index
    %c0_212 = arith.constant 0 : index
    %c1_213 = arith.constant 1 : index
    %411 = vector.load %arg4[%c1_211, %c0_212, %c1_213] : memref<24x9x9xf32, #tpu.memory_space<vmem>>, vector<1x8x8xf32>
    %412 = vector.shape_cast %411 : vector<1x8x8xf32> to vector<8x8xf32>
    %c65 = arith.constant 65 : index
    %413 = memref.load %arg0[%c65] : memref<81xf32, #tpu.memory_space<smem>>
    %414 = vector.broadcast %413 : f32 to vector<8x8xf32>
    %415 = arith.mulf %414, %412 : vector<8x8xf32>
    %416 = arith.addf %410, %415 : vector<8x8xf32>
    %c13_214 = arith.constant 13 : index
    %c0_215 = arith.constant 0 : index
    %c0_216 = arith.constant 0 : index
    %417 = vector.load %arg4[%c13_214, %c0_215, %c0_216] : memref<24x9x9xf32, #tpu.memory_space<vmem>>, vector<1x8x8xf32>
    %418 = vector.shape_cast %417 : vector<1x8x8xf32> to vector<8x8xf32>
    %c66 = arith.constant 66 : index
    %419 = memref.load %arg0[%c66] : memref<81xf32, #tpu.memory_space<smem>>
    %420 = vector.broadcast %419 : f32 to vector<8x8xf32>
    %421 = arith.mulf %420, %418 : vector<8x8xf32>
    %422 = arith.addf %416, %421 : vector<8x8xf32>
    %c19_217 = arith.constant 19 : index
    %c0_218 = arith.constant 0 : index
    %c0_219 = arith.constant 0 : index
    %423 = vector.load %arg4[%c19_217, %c0_218, %c0_219] : memref<24x9x9xf32, #tpu.memory_space<vmem>>, vector<1x8x8xf32>
    %424 = vector.shape_cast %423 : vector<1x8x8xf32> to vector<8x8xf32>
    %c67 = arith.constant 67 : index
    %425 = memref.load %arg0[%c67] : memref<81xf32, #tpu.memory_space<smem>>
    %426 = vector.broadcast %425 : f32 to vector<8x8xf32>
    %427 = arith.mulf %426, %424 : vector<8x8xf32>
    %428 = arith.addf %422, %427 : vector<8x8xf32>
    %c13_220 = arith.constant 13 : index
    %c0_221 = arith.constant 0 : index
    %c1_222 = arith.constant 1 : index
    %429 = vector.load %arg4[%c13_220, %c0_221, %c1_222] : memref<24x9x9xf32, #tpu.memory_space<vmem>>, vector<1x8x8xf32>
    %430 = vector.shape_cast %429 : vector<1x8x8xf32> to vector<8x8xf32>
    %c68 = arith.constant 68 : index
    %431 = memref.load %arg0[%c68] : memref<81xf32, #tpu.memory_space<smem>>
    %432 = vector.broadcast %431 : f32 to vector<8x8xf32>
    %433 = arith.mulf %432, %430 : vector<8x8xf32>
    %434 = arith.addf %428, %433 : vector<8x8xf32>
    %c1_223 = arith.constant 1 : index
    %c1_224 = arith.constant 1 : index
    %c0_225 = arith.constant 0 : index
    %435 = vector.load %arg4[%c1_223, %c1_224, %c0_225] : memref<24x9x9xf32, #tpu.memory_space<vmem>>, vector<1x8x8xf32>
    %436 = vector.shape_cast %435 : vector<1x8x8xf32> to vector<8x8xf32>
    %c69 = arith.constant 69 : index
    %437 = memref.load %arg0[%c69] : memref<81xf32, #tpu.memory_space<smem>>
    %438 = vector.broadcast %437 : f32 to vector<8x8xf32>
    %439 = arith.mulf %438, %436 : vector<8x8xf32>
    %440 = arith.addf %434, %439 : vector<8x8xf32>
    %c7_226 = arith.constant 7 : index
    %c1_227 = arith.constant 1 : index
    %c0_228 = arith.constant 0 : index
    %441 = vector.load %arg4[%c7_226, %c1_227, %c0_228] : memref<24x9x9xf32, #tpu.memory_space<vmem>>, vector<1x8x8xf32>
    %442 = vector.shape_cast %441 : vector<1x8x8xf32> to vector<8x8xf32>
    %c70 = arith.constant 70 : index
    %443 = memref.load %arg0[%c70] : memref<81xf32, #tpu.memory_space<smem>>
    %444 = vector.broadcast %443 : f32 to vector<8x8xf32>
    %445 = arith.mulf %444, %442 : vector<8x8xf32>
    %446 = arith.addf %440, %445 : vector<8x8xf32>
    %c1_229 = arith.constant 1 : index
    %c1_230 = arith.constant 1 : index
    %c1_231 = arith.constant 1 : index
    %447 = vector.load %arg4[%c1_229, %c1_230, %c1_231] : memref<24x9x9xf32, #tpu.memory_space<vmem>>, vector<1x8x8xf32>
    %448 = vector.shape_cast %447 : vector<1x8x8xf32> to vector<8x8xf32>
    %c71 = arith.constant 71 : index
    %449 = memref.load %arg0[%c71] : memref<81xf32, #tpu.memory_space<smem>>
    %450 = vector.broadcast %449 : f32 to vector<8x8xf32>
    %451 = arith.mulf %450, %448 : vector<8x8xf32>
    %452 = arith.addf %446, %451 : vector<8x8xf32>
    %c2_232 = arith.constant 2 : index
    %c0_233 = arith.constant 0 : index
    %c0_234 = arith.constant 0 : index
    %453 = vector.load %arg4[%c2_232, %c0_233, %c0_234] : memref<24x9x9xf32, #tpu.memory_space<vmem>>, vector<1x8x8xf32>
    %454 = vector.shape_cast %453 : vector<1x8x8xf32> to vector<8x8xf32>
    %c72 = arith.constant 72 : index
    %455 = memref.load %arg0[%c72] : memref<81xf32, #tpu.memory_space<smem>>
    %456 = vector.broadcast %455 : f32 to vector<8x8xf32>
    %457 = arith.mulf %456, %454 : vector<8x8xf32>
    %458 = arith.addf %452, %457 : vector<8x8xf32>
    %c8_235 = arith.constant 8 : index
    %c0_236 = arith.constant 0 : index
    %c0_237 = arith.constant 0 : index
    %459 = vector.load %arg4[%c8_235, %c0_236, %c0_237] : memref<24x9x9xf32, #tpu.memory_space<vmem>>, vector<1x8x8xf32>
    %460 = vector.shape_cast %459 : vector<1x8x8xf32> to vector<8x8xf32>
    %c73 = arith.constant 73 : index
    %461 = memref.load %arg0[%c73] : memref<81xf32, #tpu.memory_space<smem>>
    %462 = vector.broadcast %461 : f32 to vector<8x8xf32>
    %463 = arith.mulf %462, %460 : vector<8x8xf32>
    %464 = arith.addf %458, %463 : vector<8x8xf32>
    %c2_238 = arith.constant 2 : index
    %c0_239 = arith.constant 0 : index
    %c1_240 = arith.constant 1 : index
    %465 = vector.load %arg4[%c2_238, %c0_239, %c1_240] : memref<24x9x9xf32, #tpu.memory_space<vmem>>, vector<1x8x8xf32>
    %466 = vector.shape_cast %465 : vector<1x8x8xf32> to vector<8x8xf32>
    %c74 = arith.constant 74 : index
    %467 = memref.load %arg0[%c74] : memref<81xf32, #tpu.memory_space<smem>>
    %468 = vector.broadcast %467 : f32 to vector<8x8xf32>
    %469 = arith.mulf %468, %466 : vector<8x8xf32>
    %470 = arith.addf %464, %469 : vector<8x8xf32>
    %c14_241 = arith.constant 14 : index
    %c0_242 = arith.constant 0 : index
    %c0_243 = arith.constant 0 : index
    %471 = vector.load %arg4[%c14_241, %c0_242, %c0_243] : memref<24x9x9xf32, #tpu.memory_space<vmem>>, vector<1x8x8xf32>
    %472 = vector.shape_cast %471 : vector<1x8x8xf32> to vector<8x8xf32>
    %c75 = arith.constant 75 : index
    %473 = memref.load %arg0[%c75] : memref<81xf32, #tpu.memory_space<smem>>
    %474 = vector.broadcast %473 : f32 to vector<8x8xf32>
    %475 = arith.mulf %474, %472 : vector<8x8xf32>
    %476 = arith.addf %470, %475 : vector<8x8xf32>
    %c20_244 = arith.constant 20 : index
    %c0_245 = arith.constant 0 : index
    %c0_246 = arith.constant 0 : index
    %477 = vector.load %arg4[%c20_244, %c0_245, %c0_246] : memref<24x9x9xf32, #tpu.memory_space<vmem>>, vector<1x8x8xf32>
    %478 = vector.shape_cast %477 : vector<1x8x8xf32> to vector<8x8xf32>
    %c76 = arith.constant 76 : index
    %479 = memref.load %arg0[%c76] : memref<81xf32, #tpu.memory_space<smem>>
    %480 = vector.broadcast %479 : f32 to vector<8x8xf32>
    %481 = arith.mulf %480, %478 : vector<8x8xf32>
    %482 = arith.addf %476, %481 : vector<8x8xf32>
    %c14_247 = arith.constant 14 : index
    %c0_248 = arith.constant 0 : index
    %c1_249 = arith.constant 1 : index
    %483 = vector.load %arg4[%c14_247, %c0_248, %c1_249] : memref<24x9x9xf32, #tpu.memory_space<vmem>>, vector<1x8x8xf32>
    %484 = vector.shape_cast %483 : vector<1x8x8xf32> to vector<8x8xf32>
    %c77 = arith.constant 77 : index
    %485 = memref.load %arg0[%c77] : memref<81xf32, #tpu.memory_space<smem>>
    %486 = vector.broadcast %485 : f32 to vector<8x8xf32>
    %487 = arith.mulf %486, %484 : vector<8x8xf32>
    %488 = arith.addf %482, %487 : vector<8x8xf32>
    %c2_250 = arith.constant 2 : index
    %c1_251 = arith.constant 1 : index
    %c0_252 = arith.constant 0 : index
    %489 = vector.load %arg4[%c2_250, %c1_251, %c0_252] : memref<24x9x9xf32, #tpu.memory_space<vmem>>, vector<1x8x8xf32>
    %490 = vector.shape_cast %489 : vector<1x8x8xf32> to vector<8x8xf32>
    %c78 = arith.constant 78 : index
    %491 = memref.load %arg0[%c78] : memref<81xf32, #tpu.memory_space<smem>>
    %492 = vector.broadcast %491 : f32 to vector<8x8xf32>
    %493 = arith.mulf %492, %490 : vector<8x8xf32>
    %494 = arith.addf %488, %493 : vector<8x8xf32>
    %c8_253 = arith.constant 8 : index
    %c1_254 = arith.constant 1 : index
    %c0_255 = arith.constant 0 : index
    %495 = vector.load %arg4[%c8_253, %c1_254, %c0_255] : memref<24x9x9xf32, #tpu.memory_space<vmem>>, vector<1x8x8xf32>
    %496 = vector.shape_cast %495 : vector<1x8x8xf32> to vector<8x8xf32>
    %c79 = arith.constant 79 : index
    %497 = memref.load %arg0[%c79] : memref<81xf32, #tpu.memory_space<smem>>
    %498 = vector.broadcast %497 : f32 to vector<8x8xf32>
    %499 = arith.mulf %498, %496 : vector<8x8xf32>
    %500 = arith.addf %494, %499 : vector<8x8xf32>
    %c2_256 = arith.constant 2 : index
    %c1_257 = arith.constant 1 : index
    %c1_258 = arith.constant 1 : index
    %501 = vector.load %arg4[%c2_256, %c1_257, %c1_258] : memref<24x9x9xf32, #tpu.memory_space<vmem>>, vector<1x8x8xf32>
    %502 = vector.shape_cast %501 : vector<1x8x8xf32> to vector<8x8xf32>
    %c80 = arith.constant 80 : index
    %503 = memref.load %arg0[%c80] : memref<81xf32, #tpu.memory_space<smem>>
    %504 = vector.broadcast %503 : f32 to vector<8x8xf32>
    %505 = arith.mulf %504, %502 : vector<8x8xf32>
    %506 = arith.addf %500, %505 : vector<8x8xf32>
    %c2_259 = arith.constant 2 : index
    %507 = memref.load %arg1[%c2_259] : memref<3xf32, #tpu.memory_space<smem>>
    %508 = vector.broadcast %507 : f32 to vector<8x8xf32>
    %509 = arith.addf %506, %508 : vector<8x8xf32>
    %cst_260 = arith.constant 0.000000e+00 : f32
    %510 = vector.broadcast %cst_260 : f32 to vector<8x8xf32>
    %511 = arith.maximumf %509, %510 : vector<8x8xf32>
    %c2_261 = arith.constant 2 : index
    %c1_262 = arith.constant 1 : index
    %c1_263 = arith.constant 1 : index
    %512 = vector.load %arg6[%c2_261, %c1_262, %c1_263] : memref<6x10x10xf32, #tpu.memory_space<vmem>>, vector<1x8x8xf32>
    %513 = vector.shape_cast %512 : vector<1x8x8xf32> to vector<8x8xf32>
    %514 = vector.shape_cast %511 : vector<8x8xf32> to vector<1x8x8xf32>
    tpu.vector_store %arg6[%c2_261, %c1_262, %c1_263], %514 {strides = array<i32>} : memref<6x10x10xf32, #tpu.memory_space<vmem>>, vector<1x8x8xf32>,
    %cst_264 = arith.constant 0.000000e+00 : f32
    %515 = vector.broadcast %cst_264 : f32 to vector<8x8xf32>
    %c3_265 = arith.constant 3 : index
    %c0_266 = arith.constant 0 : index
    %c0_267 = arith.constant 0 : index
    %516 = vector.load %arg4[%c3_265, %c0_266, %c0_267] : memref<24x9x9xf32, #tpu.memory_space<vmem>>, vector<1x8x8xf32>
    %517 = vector.shape_cast %516 : vector<1x8x8xf32> to vector<8x8xf32>
    %c0_268 = arith.constant 0 : index
    %518 = memref.load %arg0[%c0_268] : memref<81xf32, #tpu.memory_space<smem>>
    %519 = vector.broadcast %518 : f32 to vector<8x8xf32>
    %520 = arith.mulf %519, %517 : vector<8x8xf32>
    %521 = arith.addf %515, %520 : vector<8x8xf32>
    %c9_269 = arith.constant 9 : index
    %c0_270 = arith.constant 0 : index
    %c0_271 = arith.constant 0 : index
    %522 = vector.load %arg4[%c9_269, %c0_270, %c0_271] : memref<24x9x9xf32, #tpu.memory_space<vmem>>, vector<1x8x8xf32>
    %523 = vector.shape_cast %522 : vector<1x8x8xf32> to vector<8x8xf32>
    %c1_272 = arith.constant 1 : index
    %524 = memref.load %arg0[%c1_272] : memref<81xf32, #tpu.memory_space<smem>>
    %525 = vector.broadcast %524 : f32 to vector<8x8xf32>
    %526 = arith.mulf %525, %523 : vector<8x8xf32>
    %527 = arith.addf %521, %526 : vector<8x8xf32>
    %c3_273 = arith.constant 3 : index
    %c0_274 = arith.constant 0 : index
    %c1_275 = arith.constant 1 : index
    %528 = vector.load %arg4[%c3_273, %c0_274, %c1_275] : memref<24x9x9xf32, #tpu.memory_space<vmem>>, vector<1x8x8xf32>
    %529 = vector.shape_cast %528 : vector<1x8x8xf32> to vector<8x8xf32>
    %c2_276 = arith.constant 2 : index
    %530 = memref.load %arg0[%c2_276] : memref<81xf32, #tpu.memory_space<smem>>
    %531 = vector.broadcast %530 : f32 to vector<8x8xf32>
    %532 = arith.mulf %531, %529 : vector<8x8xf32>
    %533 = arith.addf %527, %532 : vector<8x8xf32>
    %c15_277 = arith.constant 15 : index
    %c0_278 = arith.constant 0 : index
    %c0_279 = arith.constant 0 : index
    %534 = vector.load %arg4[%c15_277, %c0_278, %c0_279] : memref<24x9x9xf32, #tpu.memory_space<vmem>>, vector<1x8x8xf32>
    %535 = vector.shape_cast %534 : vector<1x8x8xf32> to vector<8x8xf32>
    %c3_280 = arith.constant 3 : index
    %536 = memref.load %arg0[%c3_280] : memref<81xf32, #tpu.memory_space<smem>>
    %537 = vector.broadcast %536 : f32 to vector<8x8xf32>
    %538 = arith.mulf %537, %535 : vector<8x8xf32>
    %539 = arith.addf %533, %538 : vector<8x8xf32>
    %c21_281 = arith.constant 21 : index
    %c0_282 = arith.constant 0 : index
    %c0_283 = arith.constant 0 : index
    %540 = vector.load %arg4[%c21_281, %c0_282, %c0_283] : memref<24x9x9xf32, #tpu.memory_space<vmem>>, vector<1x8x8xf32>
    %541 = vector.shape_cast %540 : vector<1x8x8xf32> to vector<8x8xf32>
    %c4_284 = arith.constant 4 : index
    %542 = memref.load %arg0[%c4_284] : memref<81xf32, #tpu.memory_space<smem>>
    %543 = vector.broadcast %542 : f32 to vector<8x8xf32>
    %544 = arith.mulf %543, %541 : vector<8x8xf32>
    %545 = arith.addf %539, %544 : vector<8x8xf32>
    %c15_285 = arith.constant 15 : index
    %c0_286 = arith.constant 0 : index
    %c1_287 = arith.constant 1 : index
    %546 = vector.load %arg4[%c15_285, %c0_286, %c1_287] : memref<24x9x9xf32, #tpu.memory_space<vmem>>, vector<1x8x8xf32>
    %547 = vector.shape_cast %546 : vector<1x8x8xf32> to vector<8x8xf32>
    %c5_288 = arith.constant 5 : index
    %548 = memref.load %arg0[%c5_288] : memref<81xf32, #tpu.memory_space<smem>>
    %549 = vector.broadcast %548 : f32 to vector<8x8xf32>
    %550 = arith.mulf %549, %547 : vector<8x8xf32>
    %551 = arith.addf %545, %550 : vector<8x8xf32>
    %c3_289 = arith.constant 3 : index
    %c1_290 = arith.constant 1 : index
    %c0_291 = arith.constant 0 : index
    %552 = vector.load %arg4[%c3_289, %c1_290, %c0_291] : memref<24x9x9xf32, #tpu.memory_space<vmem>>, vector<1x8x8xf32>
    %553 = vector.shape_cast %552 : vector<1x8x8xf32> to vector<8x8xf32>
    %c6_292 = arith.constant 6 : index
    %554 = memref.load %arg0[%c6_292] : memref<81xf32, #tpu.memory_space<smem>>
    %555 = vector.broadcast %554 : f32 to vector<8x8xf32>
    %556 = arith.mulf %555, %553 : vector<8x8xf32>
    %557 = arith.addf %551, %556 : vector<8x8xf32>
    %c9_293 = arith.constant 9 : index
    %c1_294 = arith.constant 1 : index
    %c0_295 = arith.constant 0 : index
    %558 = vector.load %arg4[%c9_293, %c1_294, %c0_295] : memref<24x9x9xf32, #tpu.memory_space<vmem>>, vector<1x8x8xf32>
    %559 = vector.shape_cast %558 : vector<1x8x8xf32> to vector<8x8xf32>
    %c7_296 = arith.constant 7 : index
    %560 = memref.load %arg0[%c7_296] : memref<81xf32, #tpu.memory_space<smem>>
    %561 = vector.broadcast %560 : f32 to vector<8x8xf32>
    %562 = arith.mulf %561, %559 : vector<8x8xf32>
    %563 = arith.addf %557, %562 : vector<8x8xf32>
    %c3_297 = arith.constant 3 : index
    %c1_298 = arith.constant 1 : index
    %c1_299 = arith.constant 1 : index
    %564 = vector.load %arg4[%c3_297, %c1_298, %c1_299] : memref<24x9x9xf32, #tpu.memory_space<vmem>>, vector<1x8x8xf32>
    %565 = vector.shape_cast %564 : vector<1x8x8xf32> to vector<8x8xf32>
    %c8_300 = arith.constant 8 : index
    %566 = memref.load %arg0[%c8_300] : memref<81xf32, #tpu.memory_space<smem>>
    %567 = vector.broadcast %566 : f32 to vector<8x8xf32>
    %568 = arith.mulf %567, %565 : vector<8x8xf32>
    %569 = arith.addf %563, %568 : vector<8x8xf32>
    %c4_301 = arith.constant 4 : index
    %c0_302 = arith.constant 0 : index
    %c0_303 = arith.constant 0 : index
    %570 = vector.load %arg4[%c4_301, %c0_302, %c0_303] : memref<24x9x9xf32, #tpu.memory_space<vmem>>, vector<1x8x8xf32>
    %571 = vector.shape_cast %570 : vector<1x8x8xf32> to vector<8x8xf32>
    %c9_304 = arith.constant 9 : index
    %572 = memref.load %arg0[%c9_304] : memref<81xf32, #tpu.memory_space<smem>>
    %573 = vector.broadcast %572 : f32 to vector<8x8xf32>
    %574 = arith.mulf %573, %571 : vector<8x8xf32>
    %575 = arith.addf %569, %574 : vector<8x8xf32>
    %c10_305 = arith.constant 10 : index
    %c0_306 = arith.constant 0 : index
    %c0_307 = arith.constant 0 : index
    %576 = vector.load %arg4[%c10_305, %c0_306, %c0_307] : memref<24x9x9xf32, #tpu.memory_space<vmem>>, vector<1x8x8xf32>
    %577 = vector.shape_cast %576 : vector<1x8x8xf32> to vector<8x8xf32>
    %c10_308 = arith.constant 10 : index
    %578 = memref.load %arg0[%c10_308] : memref<81xf32, #tpu.memory_space<smem>>
    %579 = vector.broadcast %578 : f32 to vector<8x8xf32>
    %580 = arith.mulf %579, %577 : vector<8x8xf32>
    %581 = arith.addf %575, %580 : vector<8x8xf32>
    %c4_309 = arith.constant 4 : index
    %c0_310 = arith.constant 0 : index
    %c1_311 = arith.constant 1 : index
    %582 = vector.load %arg4[%c4_309, %c0_310, %c1_311] : memref<24x9x9xf32, #tpu.memory_space<vmem>>, vector<1x8x8xf32>
    %583 = vector.shape_cast %582 : vector<1x8x8xf32> to vector<8x8xf32>
    %c11_312 = arith.constant 11 : index
    %584 = memref.load %arg0[%c11_312] : memref<81xf32, #tpu.memory_space<smem>>
    %585 = vector.broadcast %584 : f32 to vector<8x8xf32>
    %586 = arith.mulf %585, %583 : vector<8x8xf32>
    %587 = arith.addf %581, %586 : vector<8x8xf32>
    %c16_313 = arith.constant 16 : index
    %c0_314 = arith.constant 0 : index
    %c0_315 = arith.constant 0 : index
    %588 = vector.load %arg4[%c16_313, %c0_314, %c0_315] : memref<24x9x9xf32, #tpu.memory_space<vmem>>, vector<1x8x8xf32>
    %589 = vector.shape_cast %588 : vector<1x8x8xf32> to vector<8x8xf32>
    %c12_316 = arith.constant 12 : index
    %590 = memref.load %arg0[%c12_316] : memref<81xf32, #tpu.memory_space<smem>>
    %591 = vector.broadcast %590 : f32 to vector<8x8xf32>
    %592 = arith.mulf %591, %589 : vector<8x8xf32>
    %593 = arith.addf %587, %592 : vector<8x8xf32>
    %c22_317 = arith.constant 22 : index
    %c0_318 = arith.constant 0 : index
    %c0_319 = arith.constant 0 : index
    %594 = vector.load %arg4[%c22_317, %c0_318, %c0_319] : memref<24x9x9xf32, #tpu.memory_space<vmem>>, vector<1x8x8xf32>
    %595 = vector.shape_cast %594 : vector<1x8x8xf32> to vector<8x8xf32>
    %c13_320 = arith.constant 13 : index
    %596 = memref.load %arg0[%c13_320] : memref<81xf32, #tpu.memory_space<smem>>
    %597 = vector.broadcast %596 : f32 to vector<8x8xf32>
    %598 = arith.mulf %597, %595 : vector<8x8xf32>
    %599 = arith.addf %593, %598 : vector<8x8xf32>
    %c16_321 = arith.constant 16 : index
    %c0_322 = arith.constant 0 : index
    %c1_323 = arith.constant 1 : index
    %600 = vector.load %arg4[%c16_321, %c0_322, %c1_323] : memref<24x9x9xf32, #tpu.memory_space<vmem>>, vector<1x8x8xf32>
    %601 = vector.shape_cast %600 : vector<1x8x8xf32> to vector<8x8xf32>
    %c14_324 = arith.constant 14 : index
    %602 = memref.load %arg0[%c14_324] : memref<81xf32, #tpu.memory_space<smem>>
    %603 = vector.broadcast %602 : f32 to vector<8x8xf32>
    %604 = arith.mulf %603, %601 : vector<8x8xf32>
    %605 = arith.addf %599, %604 : vector<8x8xf32>
    %c4_325 = arith.constant 4 : index
    %c1_326 = arith.constant 1 : index
    %c0_327 = arith.constant 0 : index
    %606 = vector.load %arg4[%c4_325, %c1_326, %c0_327] : memref<24x9x9xf32, #tpu.memory_space<vmem>>, vector<1x8x8xf32>
    %607 = vector.shape_cast %606 : vector<1x8x8xf32> to vector<8x8xf32>
    %c15_328 = arith.constant 15 : index
    %608 = memref.load %arg0[%c15_328] : memref<81xf32, #tpu.memory_space<smem>>
    %609 = vector.broadcast %608 : f32 to vector<8x8xf32>
    %610 = arith.mulf %609, %607 : vector<8x8xf32>
    %611 = arith.addf %605, %610 : vector<8x8xf32>
    %c10_329 = arith.constant 10 : index
    %c1_330 = arith.constant 1 : index
    %c0_331 = arith.constant 0 : index
    %612 = vector.load %arg4[%c10_329, %c1_330, %c0_331] : memref<24x9x9xf32, #tpu.memory_space<vmem>>, vector<1x8x8xf32>
    %613 = vector.shape_cast %612 : vector<1x8x8xf32> to vector<8x8xf32>
    %c16_332 = arith.constant 16 : index
    %614 = memref.load %arg0[%c16_332] : memref<81xf32, #tpu.memory_space<smem>>
    %615 = vector.broadcast %614 : f32 to vector<8x8xf32>
    %616 = arith.mulf %615, %613 : vector<8x8xf32>
    %617 = arith.addf %611, %616 : vector<8x8xf32>
    %c4_333 = arith.constant 4 : index
    %c1_334 = arith.constant 1 : index
    %c1_335 = arith.constant 1 : index
    %618 = vector.load %arg4[%c4_333, %c1_334, %c1_335] : memref<24x9x9xf32, #tpu.memory_space<vmem>>, vector<1x8x8xf32>
    %619 = vector.shape_cast %618 : vector<1x8x8xf32> to vector<8x8xf32>
    %c17_336 = arith.constant 17 : index
    %620 = memref.load %arg0[%c17_336] : memref<81xf32, #tpu.memory_space<smem>>
    %621 = vector.broadcast %620 : f32 to vector<8x8xf32>
    %622 = arith.mulf %621, %619 : vector<8x8xf32>
    %623 = arith.addf %617, %622 : vector<8x8xf32>
    %c5_337 = arith.constant 5 : index
    %c0_338 = arith.constant 0 : index
    %c0_339 = arith.constant 0 : index
    %624 = vector.load %arg4[%c5_337, %c0_338, %c0_339] : memref<24x9x9xf32, #tpu.memory_space<vmem>>, vector<1x8x8xf32>
    %625 = vector.shape_cast %624 : vector<1x8x8xf32> to vector<8x8xf32>
    %c18_340 = arith.constant 18 : index
    %626 = memref.load %arg0[%c18_340] : memref<81xf32, #tpu.memory_space<smem>>
    %627 = vector.broadcast %626 : f32 to vector<8x8xf32>
    %628 = arith.mulf %627, %625 : vector<8x8xf32>
    %629 = arith.addf %623, %628 : vector<8x8xf32>
    %c11_341 = arith.constant 11 : index
    %c0_342 = arith.constant 0 : index
    %c0_343 = arith.constant 0 : index
    %630 = vector.load %arg4[%c11_341, %c0_342, %c0_343] : memref<24x9x9xf32, #tpu.memory_space<vmem>>, vector<1x8x8xf32>
    %631 = vector.shape_cast %630 : vector<1x8x8xf32> to vector<8x8xf32>
    %c19_344 = arith.constant 19 : index
    %632 = memref.load %arg0[%c19_344] : memref<81xf32, #tpu.memory_space<smem>>
    %633 = vector.broadcast %632 : f32 to vector<8x8xf32>
    %634 = arith.mulf %633, %631 : vector<8x8xf32>
    %635 = arith.addf %629, %634 : vector<8x8xf32>
    %c5_345 = arith.constant 5 : index
    %c0_346 = arith.constant 0 : index
    %c1_347 = arith.constant 1 : index
    %636 = vector.load %arg4[%c5_345, %c0_346, %c1_347] : memref<24x9x9xf32, #tpu.memory_space<vmem>>, vector<1x8x8xf32>
    %637 = vector.shape_cast %636 : vector<1x8x8xf32> to vector<8x8xf32>
    %c20_348 = arith.constant 20 : index
    %638 = memref.load %arg0[%c20_348] : memref<81xf32, #tpu.memory_space<smem>>
    %639 = vector.broadcast %638 : f32 to vector<8x8xf32>
    %640 = arith.mulf %639, %637 : vector<8x8xf32>
    %641 = arith.addf %635, %640 : vector<8x8xf32>
    %c17_349 = arith.constant 17 : index
    %c0_350 = arith.constant 0 : index
    %c0_351 = arith.constant 0 : index
    %642 = vector.load %arg4[%c17_349, %c0_350, %c0_351] : memref<24x9x9xf32, #tpu.memory_space<vmem>>, vector<1x8x8xf32>
    %643 = vector.shape_cast %642 : vector<1x8x8xf32> to vector<8x8xf32>
    %c21_352 = arith.constant 21 : index
    %644 = memref.load %arg0[%c21_352] : memref<81xf32, #tpu.memory_space<smem>>
    %645 = vector.broadcast %644 : f32 to vector<8x8xf32>
    %646 = arith.mulf %645, %643 : vector<8x8xf32>
    %647 = arith.addf %641, %646 : vector<8x8xf32>
    %c23_353 = arith.constant 23 : index
    %c0_354 = arith.constant 0 : index
    %c0_355 = arith.constant 0 : index
    %648 = vector.load %arg4[%c23_353, %c0_354, %c0_355] : memref<24x9x9xf32, #tpu.memory_space<vmem>>, vector<1x8x8xf32>
    %649 = vector.shape_cast %648 : vector<1x8x8xf32> to vector<8x8xf32>
    %c22_356 = arith.constant 22 : index
    %650 = memref.load %arg0[%c22_356] : memref<81xf32, #tpu.memory_space<smem>>
    %651 = vector.broadcast %650 : f32 to vector<8x8xf32>
    %652 = arith.mulf %651, %649 : vector<8x8xf32>
    %653 = arith.addf %647, %652 : vector<8x8xf32>
    %c17_357 = arith.constant 17 : index
    %c0_358 = arith.constant 0 : index
    %c1_359 = arith.constant 1 : index
    %654 = vector.load %arg4[%c17_357, %c0_358, %c1_359] : memref<24x9x9xf32, #tpu.memory_space<vmem>>, vector<1x8x8xf32>
    %655 = vector.shape_cast %654 : vector<1x8x8xf32> to vector<8x8xf32>
    %c23_360 = arith.constant 23 : index
    %656 = memref.load %arg0[%c23_360] : memref<81xf32, #tpu.memory_space<smem>>
    %657 = vector.broadcast %656 : f32 to vector<8x8xf32>
    %658 = arith.mulf %657, %655 : vector<8x8xf32>
    %659 = arith.addf %653, %658 : vector<8x8xf32>
    %c5_361 = arith.constant 5 : index
    %c1_362 = arith.constant 1 : index
    %c0_363 = arith.constant 0 : index
    %660 = vector.load %arg4[%c5_361, %c1_362, %c0_363] : memref<24x9x9xf32, #tpu.memory_space<vmem>>, vector<1x8x8xf32>
    %661 = vector.shape_cast %660 : vector<1x8x8xf32> to vector<8x8xf32>
    %c24_364 = arith.constant 24 : index
    %662 = memref.load %arg0[%c24_364] : memref<81xf32, #tpu.memory_space<smem>>
    %663 = vector.broadcast %662 : f32 to vector<8x8xf32>
    %664 = arith.mulf %663, %661 : vector<8x8xf32>
    %665 = arith.addf %659, %664 : vector<8x8xf32>
    %c11_365 = arith.constant 11 : index
    %c1_366 = arith.constant 1 : index
    %c0_367 = arith.constant 0 : index
    %666 = vector.load %arg4[%c11_365, %c1_366, %c0_367] : memref<24x9x9xf32, #tpu.memory_space<vmem>>, vector<1x8x8xf32>
    %667 = vector.shape_cast %666 : vector<1x8x8xf32> to vector<8x8xf32>
    %c25_368 = arith.constant 25 : index
    %668 = memref.load %arg0[%c25_368] : memref<81xf32, #tpu.memory_space<smem>>
    %669 = vector.broadcast %668 : f32 to vector<8x8xf32>
    %670 = arith.mulf %669, %667 : vector<8x8xf32>
    %671 = arith.addf %665, %670 : vector<8x8xf32>
    %c5_369 = arith.constant 5 : index
    %c1_370 = arith.constant 1 : index
    %c1_371 = arith.constant 1 : index
    %672 = vector.load %arg4[%c5_369, %c1_370, %c1_371] : memref<24x9x9xf32, #tpu.memory_space<vmem>>, vector<1x8x8xf32>
    %673 = vector.shape_cast %672 : vector<1x8x8xf32> to vector<8x8xf32>
    %c26_372 = arith.constant 26 : index
    %674 = memref.load %arg0[%c26_372] : memref<81xf32, #tpu.memory_space<smem>>
    %675 = vector.broadcast %674 : f32 to vector<8x8xf32>
    %676 = arith.mulf %675, %673 : vector<8x8xf32>
    %677 = arith.addf %671, %676 : vector<8x8xf32>
    %c0_373 = arith.constant 0 : index
    %678 = memref.load %arg1[%c0_373] : memref<3xf32, #tpu.memory_space<smem>>
    %679 = vector.broadcast %678 : f32 to vector<8x8xf32>
    %680 = arith.addf %677, %679 : vector<8x8xf32>
    %cst_374 = arith.constant 0.000000e+00 : f32
    %681 = vector.broadcast %cst_374 : f32 to vector<8x8xf32>
    %682 = arith.maximumf %680, %681 : vector<8x8xf32>
    %c3_375 = arith.constant 3 : index
    %c1_376 = arith.constant 1 : index
    %c1_377 = arith.constant 1 : index
    %683 = vector.load %arg6[%c3_375, %c1_376, %c1_377] : memref<6x10x10xf32, #tpu.memory_space<vmem>>, vector<1x8x8xf32>
    %684 = vector.shape_cast %683 : vector<1x8x8xf32> to vector<8x8xf32>
    %685 = vector.shape_cast %682 : vector<8x8xf32> to vector<1x8x8xf32>
    tpu.vector_store %arg6[%c3_375, %c1_376, %c1_377], %685 {strides = array<i32>} : memref<6x10x10xf32, #tpu.memory_space<vmem>>, vector<1x8x8xf32>,
    %cst_378 = arith.constant 0.000000e+00 : f32
    %686 = vector.broadcast %cst_378 : f32 to vector<8x8xf32>
    %c3_379 = arith.constant 3 : index
    %c0_380 = arith.constant 0 : index
    %c0_381 = arith.constant 0 : index
    %687 = vector.load %arg4[%c3_379, %c0_380, %c0_381] : memref<24x9x9xf32, #tpu.memory_space<vmem>>, vector<1x8x8xf32>
    %688 = vector.shape_cast %687 : vector<1x8x8xf32> to vector<8x8xf32>
    %c27_382 = arith.constant 27 : index
    %689 = memref.load %arg0[%c27_382] : memref<81xf32, #tpu.memory_space<smem>>
    %690 = vector.broadcast %689 : f32 to vector<8x8xf32>
    %691 = arith.mulf %690, %688 : vector<8x8xf32>
    %692 = arith.addf %686, %691 : vector<8x8xf32>
    %c9_383 = arith.constant 9 : index
    %c0_384 = arith.constant 0 : index
    %c0_385 = arith.constant 0 : index
    %693 = vector.load %arg4[%c9_383, %c0_384, %c0_385] : memref<24x9x9xf32, #tpu.memory_space<vmem>>, vector<1x8x8xf32>
    %694 = vector.shape_cast %693 : vector<1x8x8xf32> to vector<8x8xf32>
    %c28_386 = arith.constant 28 : index
    %695 = memref.load %arg0[%c28_386] : memref<81xf32, #tpu.memory_space<smem>>
    %696 = vector.broadcast %695 : f32 to vector<8x8xf32>
    %697 = arith.mulf %696, %694 : vector<8x8xf32>
    %698 = arith.addf %692, %697 : vector<8x8xf32>
    %c3_387 = arith.constant 3 : index
    %c0_388 = arith.constant 0 : index
    %c1_389 = arith.constant 1 : index
    %699 = vector.load %arg4[%c3_387, %c0_388, %c1_389] : memref<24x9x9xf32, #tpu.memory_space<vmem>>, vector<1x8x8xf32>
    %700 = vector.shape_cast %699 : vector<1x8x8xf32> to vector<8x8xf32>
    %c29_390 = arith.constant 29 : index
    %701 = memref.load %arg0[%c29_390] : memref<81xf32, #tpu.memory_space<smem>>
    %702 = vector.broadcast %701 : f32 to vector<8x8xf32>
    %703 = arith.mulf %702, %700 : vector<8x8xf32>
    %704 = arith.addf %698, %703 : vector<8x8xf32>
    %c15_391 = arith.constant 15 : index
    %c0_392 = arith.constant 0 : index
    %c0_393 = arith.constant 0 : index
    %705 = vector.load %arg4[%c15_391, %c0_392, %c0_393] : memref<24x9x9xf32, #tpu.memory_space<vmem>>, vector<1x8x8xf32>
    %706 = vector.shape_cast %705 : vector<1x8x8xf32> to vector<8x8xf32>
    %c30_394 = arith.constant 30 : index
    %707 = memref.load %arg0[%c30_394] : memref<81xf32, #tpu.memory_space<smem>>
    %708 = vector.broadcast %707 : f32 to vector<8x8xf32>
    %709 = arith.mulf %708, %706 : vector<8x8xf32>
    %710 = arith.addf %704, %709 : vector<8x8xf32>
    %c21_395 = arith.constant 21 : index
    %c0_396 = arith.constant 0 : index
    %c0_397 = arith.constant 0 : index
    %711 = vector.load %arg4[%c21_395, %c0_396, %c0_397] : memref<24x9x9xf32, #tpu.memory_space<vmem>>, vector<1x8x8xf32>
    %712 = vector.shape_cast %711 : vector<1x8x8xf32> to vector<8x8xf32>
    %c31_398 = arith.constant 31 : index
    %713 = memref.load %arg0[%c31_398] : memref<81xf32, #tpu.memory_space<smem>>
    %714 = vector.broadcast %713 : f32 to vector<8x8xf32>
    %715 = arith.mulf %714, %712 : vector<8x8xf32>
    %716 = arith.addf %710, %715 : vector<8x8xf32>
    %c15_399 = arith.constant 15 : index
    %c0_400 = arith.constant 0 : index
    %c1_401 = arith.constant 1 : index
    %717 = vector.load %arg4[%c15_399, %c0_400, %c1_401] : memref<24x9x9xf32, #tpu.memory_space<vmem>>, vector<1x8x8xf32>
    %718 = vector.shape_cast %717 : vector<1x8x8xf32> to vector<8x8xf32>
    %c32_402 = arith.constant 32 : index
    %719 = memref.load %arg0[%c32_402] : memref<81xf32, #tpu.memory_space<smem>>
    %720 = vector.broadcast %719 : f32 to vector<8x8xf32>
    %721 = arith.mulf %720, %718 : vector<8x8xf32>
    %722 = arith.addf %716, %721 : vector<8x8xf32>
    %c3_403 = arith.constant 3 : index
    %c1_404 = arith.constant 1 : index
    %c0_405 = arith.constant 0 : index
    %723 = vector.load %arg4[%c3_403, %c1_404, %c0_405] : memref<24x9x9xf32, #tpu.memory_space<vmem>>, vector<1x8x8xf32>
    %724 = vector.shape_cast %723 : vector<1x8x8xf32> to vector<8x8xf32>
    %c33_406 = arith.constant 33 : index
    %725 = memref.load %arg0[%c33_406] : memref<81xf32, #tpu.memory_space<smem>>
    %726 = vector.broadcast %725 : f32 to vector<8x8xf32>
    %727 = arith.mulf %726, %724 : vector<8x8xf32>
    %728 = arith.addf %722, %727 : vector<8x8xf32>
    %c9_407 = arith.constant 9 : index
    %c1_408 = arith.constant 1 : index
    %c0_409 = arith.constant 0 : index
    %729 = vector.load %arg4[%c9_407, %c1_408, %c0_409] : memref<24x9x9xf32, #tpu.memory_space<vmem>>, vector<1x8x8xf32>
    %730 = vector.shape_cast %729 : vector<1x8x8xf32> to vector<8x8xf32>
    %c34_410 = arith.constant 34 : index
    %731 = memref.load %arg0[%c34_410] : memref<81xf32, #tpu.memory_space<smem>>
    %732 = vector.broadcast %731 : f32 to vector<8x8xf32>
    %733 = arith.mulf %732, %730 : vector<8x8xf32>
    %734 = arith.addf %728, %733 : vector<8x8xf32>
    %c3_411 = arith.constant 3 : index
    %c1_412 = arith.constant 1 : index
    %c1_413 = arith.constant 1 : index
    %735 = vector.load %arg4[%c3_411, %c1_412, %c1_413] : memref<24x9x9xf32, #tpu.memory_space<vmem>>, vector<1x8x8xf32>
    %736 = vector.shape_cast %735 : vector<1x8x8xf32> to vector<8x8xf32>
    %c35_414 = arith.constant 35 : index
    %737 = memref.load %arg0[%c35_414] : memref<81xf32, #tpu.memory_space<smem>>
    %738 = vector.broadcast %737 : f32 to vector<8x8xf32>
    %739 = arith.mulf %738, %736 : vector<8x8xf32>
    %740 = arith.addf %734, %739 : vector<8x8xf32>
    %c4_415 = arith.constant 4 : index
    %c0_416 = arith.constant 0 : index
    %c0_417 = arith.constant 0 : index
    %741 = vector.load %arg4[%c4_415, %c0_416, %c0_417] : memref<24x9x9xf32, #tpu.memory_space<vmem>>, vector<1x8x8xf32>
    %742 = vector.shape_cast %741 : vector<1x8x8xf32> to vector<8x8xf32>
    %c36_418 = arith.constant 36 : index
    %743 = memref.load %arg0[%c36_418] : memref<81xf32, #tpu.memory_space<smem>>
    %744 = vector.broadcast %743 : f32 to vector<8x8xf32>
    %745 = arith.mulf %744, %742 : vector<8x8xf32>
    %746 = arith.addf %740, %745 : vector<8x8xf32>
    %c10_419 = arith.constant 10 : index
    %c0_420 = arith.constant 0 : index
    %c0_421 = arith.constant 0 : index
    %747 = vector.load %arg4[%c10_419, %c0_420, %c0_421] : memref<24x9x9xf32, #tpu.memory_space<vmem>>, vector<1x8x8xf32>
    %748 = vector.shape_cast %747 : vector<1x8x8xf32> to vector<8x8xf32>
    %c37_422 = arith.constant 37 : index
    %749 = memref.load %arg0[%c37_422] : memref<81xf32, #tpu.memory_space<smem>>
    %750 = vector.broadcast %749 : f32 to vector<8x8xf32>
    %751 = arith.mulf %750, %748 : vector<8x8xf32>
    %752 = arith.addf %746, %751 : vector<8x8xf32>
    %c4_423 = arith.constant 4 : index
    %c0_424 = arith.constant 0 : index
    %c1_425 = arith.constant 1 : index
    %753 = vector.load %arg4[%c4_423, %c0_424, %c1_425] : memref<24x9x9xf32, #tpu.memory_space<vmem>>, vector<1x8x8xf32>
    %754 = vector.shape_cast %753 : vector<1x8x8xf32> to vector<8x8xf32>
    %c38_426 = arith.constant 38 : index
    %755 = memref.load %arg0[%c38_426] : memref<81xf32, #tpu.memory_space<smem>>
    %756 = vector.broadcast %755 : f32 to vector<8x8xf32>
    %757 = arith.mulf %756, %754 : vector<8x8xf32>
    %758 = arith.addf %752, %757 : vector<8x8xf32>
    %c16_427 = arith.constant 16 : index
    %c0_428 = arith.constant 0 : index
    %c0_429 = arith.constant 0 : index
    %759 = vector.load %arg4[%c16_427, %c0_428, %c0_429] : memref<24x9x9xf32, #tpu.memory_space<vmem>>, vector<1x8x8xf32>
    %760 = vector.shape_cast %759 : vector<1x8x8xf32> to vector<8x8xf32>
    %c39_430 = arith.constant 39 : index
    %761 = memref.load %arg0[%c39_430] : memref<81xf32, #tpu.memory_space<smem>>
    %762 = vector.broadcast %761 : f32 to vector<8x8xf32>
    %763 = arith.mulf %762, %760 : vector<8x8xf32>
    %764 = arith.addf %758, %763 : vector<8x8xf32>
    %c22_431 = arith.constant 22 : index
    %c0_432 = arith.constant 0 : index
    %c0_433 = arith.constant 0 : index
    %765 = vector.load %arg4[%c22_431, %c0_432, %c0_433] : memref<24x9x9xf32, #tpu.memory_space<vmem>>, vector<1x8x8xf32>
    %766 = vector.shape_cast %765 : vector<1x8x8xf32> to vector<8x8xf32>
    %c40_434 = arith.constant 40 : index
    %767 = memref.load %arg0[%c40_434] : memref<81xf32, #tpu.memory_space<smem>>
    %768 = vector.broadcast %767 : f32 to vector<8x8xf32>
    %769 = arith.mulf %768, %766 : vector<8x8xf32>
    %770 = arith.addf %764, %769 : vector<8x8xf32>
    %c16_435 = arith.constant 16 : index
    %c0_436 = arith.constant 0 : index
    %c1_437 = arith.constant 1 : index
    %771 = vector.load %arg4[%c16_435, %c0_436, %c1_437] : memref<24x9x9xf32, #tpu.memory_space<vmem>>, vector<1x8x8xf32>
    %772 = vector.shape_cast %771 : vector<1x8x8xf32> to vector<8x8xf32>
    %c41_438 = arith.constant 41 : index
    %773 = memref.load %arg0[%c41_438] : memref<81xf32, #tpu.memory_space<smem>>
    %774 = vector.broadcast %773 : f32 to vector<8x8xf32>
    %775 = arith.mulf %774, %772 : vector<8x8xf32>
    %776 = arith.addf %770, %775 : vector<8x8xf32>
    %c4_439 = arith.constant 4 : index
    %c1_440 = arith.constant 1 : index
    %c0_441 = arith.constant 0 : index
    %777 = vector.load %arg4[%c4_439, %c1_440, %c0_441] : memref<24x9x9xf32, #tpu.memory_space<vmem>>, vector<1x8x8xf32>
    %778 = vector.shape_cast %777 : vector<1x8x8xf32> to vector<8x8xf32>
    %c42_442 = arith.constant 42 : index
    %779 = memref.load %arg0[%c42_442] : memref<81xf32, #tpu.memory_space<smem>>
    %780 = vector.broadcast %779 : f32 to vector<8x8xf32>
    %781 = arith.mulf %780, %778 : vector<8x8xf32>
    %782 = arith.addf %776, %781 : vector<8x8xf32>
    %c10_443 = arith.constant 10 : index
    %c1_444 = arith.constant 1 : index
    %c0_445 = arith.constant 0 : index
    %783 = vector.load %arg4[%c10_443, %c1_444, %c0_445] : memref<24x9x9xf32, #tpu.memory_space<vmem>>, vector<1x8x8xf32>
    %784 = vector.shape_cast %783 : vector<1x8x8xf32> to vector<8x8xf32>
    %c43_446 = arith.constant 43 : index
    %785 = memref.load %arg0[%c43_446] : memref<81xf32, #tpu.memory_space<smem>>
    %786 = vector.broadcast %785 : f32 to vector<8x8xf32>
    %787 = arith.mulf %786, %784 : vector<8x8xf32>
    %788 = arith.addf %782, %787 : vector<8x8xf32>
    %c4_447 = arith.constant 4 : index
    %c1_448 = arith.constant 1 : index
    %c1_449 = arith.constant 1 : index
    %789 = vector.load %arg4[%c4_447, %c1_448, %c1_449] : memref<24x9x9xf32, #tpu.memory_space<vmem>>, vector<1x8x8xf32>
    %790 = vector.shape_cast %789 : vector<1x8x8xf32> to vector<8x8xf32>
    %c44_450 = arith.constant 44 : index
    %791 = memref.load %arg0[%c44_450] : memref<81xf32, #tpu.memory_space<smem>>
    %792 = vector.broadcast %791 : f32 to vector<8x8xf32>
    %793 = arith.mulf %792, %790 : vector<8x8xf32>
    %794 = arith.addf %788, %793 : vector<8x8xf32>
    %c5_451 = arith.constant 5 : index
    %c0_452 = arith.constant 0 : index
    %c0_453 = arith.constant 0 : index
    %795 = vector.load %arg4[%c5_451, %c0_452, %c0_453] : memref<24x9x9xf32, #tpu.memory_space<vmem>>, vector<1x8x8xf32>
    %796 = vector.shape_cast %795 : vector<1x8x8xf32> to vector<8x8xf32>
    %c45_454 = arith.constant 45 : index
    %797 = memref.load %arg0[%c45_454] : memref<81xf32, #tpu.memory_space<smem>>
    %798 = vector.broadcast %797 : f32 to vector<8x8xf32>
    %799 = arith.mulf %798, %796 : vector<8x8xf32>
    %800 = arith.addf %794, %799 : vector<8x8xf32>
    %c11_455 = arith.constant 11 : index
    %c0_456 = arith.constant 0 : index
    %c0_457 = arith.constant 0 : index
    %801 = vector.load %arg4[%c11_455, %c0_456, %c0_457] : memref<24x9x9xf32, #tpu.memory_space<vmem>>, vector<1x8x8xf32>
    %802 = vector.shape_cast %801 : vector<1x8x8xf32> to vector<8x8xf32>
    %c46_458 = arith.constant 46 : index
    %803 = memref.load %arg0[%c46_458] : memref<81xf32, #tpu.memory_space<smem>>
    %804 = vector.broadcast %803 : f32 to vector<8x8xf32>
    %805 = arith.mulf %804, %802 : vector<8x8xf32>
    %806 = arith.addf %800, %805 : vector<8x8xf32>
    %c5_459 = arith.constant 5 : index
    %c0_460 = arith.constant 0 : index
    %c1_461 = arith.constant 1 : index
    %807 = vector.load %arg4[%c5_459, %c0_460, %c1_461] : memref<24x9x9xf32, #tpu.memory_space<vmem>>, vector<1x8x8xf32>
    %808 = vector.shape_cast %807 : vector<1x8x8xf32> to vector<8x8xf32>
    %c47_462 = arith.constant 47 : index
    %809 = memref.load %arg0[%c47_462] : memref<81xf32, #tpu.memory_space<smem>>
    %810 = vector.broadcast %809 : f32 to vector<8x8xf32>
    %811 = arith.mulf %810, %808 : vector<8x8xf32>
    %812 = arith.addf %806, %811 : vector<8x8xf32>
    %c17_463 = arith.constant 17 : index
    %c0_464 = arith.constant 0 : index
    %c0_465 = arith.constant 0 : index
    %813 = vector.load %arg4[%c17_463, %c0_464, %c0_465] : memref<24x9x9xf32, #tpu.memory_space<vmem>>, vector<1x8x8xf32>
    %814 = vector.shape_cast %813 : vector<1x8x8xf32> to vector<8x8xf32>
    %c48_466 = arith.constant 48 : index
    %815 = memref.load %arg0[%c48_466] : memref<81xf32, #tpu.memory_space<smem>>
    %816 = vector.broadcast %815 : f32 to vector<8x8xf32>
    %817 = arith.mulf %816, %814 : vector<8x8xf32>
    %818 = arith.addf %812, %817 : vector<8x8xf32>
    %c23_467 = arith.constant 23 : index
    %c0_468 = arith.constant 0 : index
    %c0_469 = arith.constant 0 : index
    %819 = vector.load %arg4[%c23_467, %c0_468, %c0_469] : memref<24x9x9xf32, #tpu.memory_space<vmem>>, vector<1x8x8xf32>
    %820 = vector.shape_cast %819 : vector<1x8x8xf32> to vector<8x8xf32>
    %c49_470 = arith.constant 49 : index
    %821 = memref.load %arg0[%c49_470] : memref<81xf32, #tpu.memory_space<smem>>
    %822 = vector.broadcast %821 : f32 to vector<8x8xf32>
    %823 = arith.mulf %822, %820 : vector<8x8xf32>
    %824 = arith.addf %818, %823 : vector<8x8xf32>
    %c17_471 = arith.constant 17 : index
    %c0_472 = arith.constant 0 : index
    %c1_473 = arith.constant 1 : index
    %825 = vector.load %arg4[%c17_471, %c0_472, %c1_473] : memref<24x9x9xf32, #tpu.memory_space<vmem>>, vector<1x8x8xf32>
    %826 = vector.shape_cast %825 : vector<1x8x8xf32> to vector<8x8xf32>
    %c50_474 = arith.constant 50 : index
    %827 = memref.load %arg0[%c50_474] : memref<81xf32, #tpu.memory_space<smem>>
    %828 = vector.broadcast %827 : f32 to vector<8x8xf32>
    %829 = arith.mulf %828, %826 : vector<8x8xf32>
    %830 = arith.addf %824, %829 : vector<8x8xf32>
    %c5_475 = arith.constant 5 : index
    %c1_476 = arith.constant 1 : index
    %c0_477 = arith.constant 0 : index
    %831 = vector.load %arg4[%c5_475, %c1_476, %c0_477] : memref<24x9x9xf32, #tpu.memory_space<vmem>>, vector<1x8x8xf32>
    %832 = vector.shape_cast %831 : vector<1x8x8xf32> to vector<8x8xf32>
    %c51_478 = arith.constant 51 : index
    %833 = memref.load %arg0[%c51_478] : memref<81xf32, #tpu.memory_space<smem>>
    %834 = vector.broadcast %833 : f32 to vector<8x8xf32>
    %835 = arith.mulf %834, %832 : vector<8x8xf32>
    %836 = arith.addf %830, %835 : vector<8x8xf32>
    %c11_479 = arith.constant 11 : index
    %c1_480 = arith.constant 1 : index
    %c0_481 = arith.constant 0 : index
    %837 = vector.load %arg4[%c11_479, %c1_480, %c0_481] : memref<24x9x9xf32, #tpu.memory_space<vmem>>, vector<1x8x8xf32>
    %838 = vector.shape_cast %837 : vector<1x8x8xf32> to vector<8x8xf32>
    %c52_482 = arith.constant 52 : index
    %839 = memref.load %arg0[%c52_482] : memref<81xf32, #tpu.memory_space<smem>>
    %840 = vector.broadcast %839 : f32 to vector<8x8xf32>
    %841 = arith.mulf %840, %838 : vector<8x8xf32>
    %842 = arith.addf %836, %841 : vector<8x8xf32>
    %c5_483 = arith.constant 5 : index
    %c1_484 = arith.constant 1 : index
    %c1_485 = arith.constant 1 : index
    %843 = vector.load %arg4[%c5_483, %c1_484, %c1_485] : memref<24x9x9xf32, #tpu.memory_space<vmem>>, vector<1x8x8xf32>
    %844 = vector.shape_cast %843 : vector<1x8x8xf32> to vector<8x8xf32>
    %c53_486 = arith.constant 53 : index
    %845 = memref.load %arg0[%c53_486] : memref<81xf32, #tpu.memory_space<smem>>
    %846 = vector.broadcast %845 : f32 to vector<8x8xf32>
    %847 = arith.mulf %846, %844 : vector<8x8xf32>
    %848 = arith.addf %842, %847 : vector<8x8xf32>
    %c1_487 = arith.constant 1 : index
    %849 = memref.load %arg1[%c1_487] : memref<3xf32, #tpu.memory_space<smem>>
    %850 = vector.broadcast %849 : f32 to vector<8x8xf32>
    %851 = arith.addf %848, %850 : vector<8x8xf32>
    %cst_488 = arith.constant 0.000000e+00 : f32
    %852 = vector.broadcast %cst_488 : f32 to vector<8x8xf32>
    %853 = arith.maximumf %851, %852 : vector<8x8xf32>
    %c4_489 = arith.constant 4 : index
    %c1_490 = arith.constant 1 : index
    %c1_491 = arith.constant 1 : index
    %854 = vector.load %arg6[%c4_489, %c1_490, %c1_491] : memref<6x10x10xf32, #tpu.memory_space<vmem>>, vector<1x8x8xf32>
    %855 = vector.shape_cast %854 : vector<1x8x8xf32> to vector<8x8xf32>
    %856 = vector.shape_cast %853 : vector<8x8xf32> to vector<1x8x8xf32>
    tpu.vector_store %arg6[%c4_489, %c1_490, %c1_491], %856 {strides = array<i32>} : memref<6x10x10xf32, #tpu.memory_space<vmem>>, vector<1x8x8xf32>,
    %cst_492 = arith.constant 0.000000e+00 : f32
    %857 = vector.broadcast %cst_492 : f32 to vector<8x8xf32>
    %c3_493 = arith.constant 3 : index
    %c0_494 = arith.constant 0 : index
    %c0_495 = arith.constant 0 : index
    %858 = vector.load %arg4[%c3_493, %c0_494, %c0_495] : memref<24x9x9xf32, #tpu.memory_space<vmem>>, vector<1x8x8xf32>
    %859 = vector.shape_cast %858 : vector<1x8x8xf32> to vector<8x8xf32>
    %c54_496 = arith.constant 54 : index
    %860 = memref.load %arg0[%c54_496] : memref<81xf32, #tpu.memory_space<smem>>
    %861 = vector.broadcast %860 : f32 to vector<8x8xf32>
    %862 = arith.mulf %861, %859 : vector<8x8xf32>
    %863 = arith.addf %857, %862 : vector<8x8xf32>
    %c9_497 = arith.constant 9 : index
    %c0_498 = arith.constant 0 : index
    %c0_499 = arith.constant 0 : index
    %864 = vector.load %arg4[%c9_497, %c0_498, %c0_499] : memref<24x9x9xf32, #tpu.memory_space<vmem>>, vector<1x8x8xf32>
    %865 = vector.shape_cast %864 : vector<1x8x8xf32> to vector<8x8xf32>
    %c55_500 = arith.constant 55 : index
    %866 = memref.load %arg0[%c55_500] : memref<81xf32, #tpu.memory_space<smem>>
    %867 = vector.broadcast %866 : f32 to vector<8x8xf32>
    %868 = arith.mulf %867, %865 : vector<8x8xf32>
    %869 = arith.addf %863, %868 : vector<8x8xf32>
    %c3_501 = arith.constant 3 : index
    %c0_502 = arith.constant 0 : index
    %c1_503 = arith.constant 1 : index
    %870 = vector.load %arg4[%c3_501, %c0_502, %c1_503] : memref<24x9x9xf32, #tpu.memory_space<vmem>>, vector<1x8x8xf32>
    %871 = vector.shape_cast %870 : vector<1x8x8xf32> to vector<8x8xf32>
    %c56_504 = arith.constant 56 : index
    %872 = memref.load %arg0[%c56_504] : memref<81xf32, #tpu.memory_space<smem>>
    %873 = vector.broadcast %872 : f32 to vector<8x8xf32>
    %874 = arith.mulf %873, %871 : vector<8x8xf32>
    %875 = arith.addf %869, %874 : vector<8x8xf32>
    %c15_505 = arith.constant 15 : index
    %c0_506 = arith.constant 0 : index
    %c0_507 = arith.constant 0 : index
    %876 = vector.load %arg4[%c15_505, %c0_506, %c0_507] : memref<24x9x9xf32, #tpu.memory_space<vmem>>, vector<1x8x8xf32>
    %877 = vector.shape_cast %876 : vector<1x8x8xf32> to vector<8x8xf32>
    %c57_508 = arith.constant 57 : index
    %878 = memref.load %arg0[%c57_508] : memref<81xf32, #tpu.memory_space<smem>>
    %879 = vector.broadcast %878 : f32 to vector<8x8xf32>
    %880 = arith.mulf %879, %877 : vector<8x8xf32>
    %881 = arith.addf %875, %880 : vector<8x8xf32>
    %c21_509 = arith.constant 21 : index
    %c0_510 = arith.constant 0 : index
    %c0_511 = arith.constant 0 : index
    %882 = vector.load %arg4[%c21_509, %c0_510, %c0_511] : memref<24x9x9xf32, #tpu.memory_space<vmem>>, vector<1x8x8xf32>
    %883 = vector.shape_cast %882 : vector<1x8x8xf32> to vector<8x8xf32>
    %c58_512 = arith.constant 58 : index
    %884 = memref.load %arg0[%c58_512] : memref<81xf32, #tpu.memory_space<smem>>
    %885 = vector.broadcast %884 : f32 to vector<8x8xf32>
    %886 = arith.mulf %885, %883 : vector<8x8xf32>
    %887 = arith.addf %881, %886 : vector<8x8xf32>
    %c15_513 = arith.constant 15 : index
    %c0_514 = arith.constant 0 : index
    %c1_515 = arith.constant 1 : index
    %888 = vector.load %arg4[%c15_513, %c0_514, %c1_515] : memref<24x9x9xf32, #tpu.memory_space<vmem>>, vector<1x8x8xf32>
    %889 = vector.shape_cast %888 : vector<1x8x8xf32> to vector<8x8xf32>
    %c59_516 = arith.constant 59 : index
    %890 = memref.load %arg0[%c59_516] : memref<81xf32, #tpu.memory_space<smem>>
    %891 = vector.broadcast %890 : f32 to vector<8x8xf32>
    %892 = arith.mulf %891, %889 : vector<8x8xf32>
    %893 = arith.addf %887, %892 : vector<8x8xf32>
    %c3_517 = arith.constant 3 : index
    %c1_518 = arith.constant 1 : index
    %c0_519 = arith.constant 0 : index
    %894 = vector.load %arg4[%c3_517, %c1_518, %c0_519] : memref<24x9x9xf32, #tpu.memory_space<vmem>>, vector<1x8x8xf32>
    %895 = vector.shape_cast %894 : vector<1x8x8xf32> to vector<8x8xf32>
    %c60_520 = arith.constant 60 : index
    %896 = memref.load %arg0[%c60_520] : memref<81xf32, #tpu.memory_space<smem>>
    %897 = vector.broadcast %896 : f32 to vector<8x8xf32>
    %898 = arith.mulf %897, %895 : vector<8x8xf32>
    %899 = arith.addf %893, %898 : vector<8x8xf32>
    %c9_521 = arith.constant 9 : index
    %c1_522 = arith.constant 1 : index
    %c0_523 = arith.constant 0 : index
    %900 = vector.load %arg4[%c9_521, %c1_522, %c0_523] : memref<24x9x9xf32, #tpu.memory_space<vmem>>, vector<1x8x8xf32>
    %901 = vector.shape_cast %900 : vector<1x8x8xf32> to vector<8x8xf32>
    %c61_524 = arith.constant 61 : index
    %902 = memref.load %arg0[%c61_524] : memref<81xf32, #tpu.memory_space<smem>>
    %903 = vector.broadcast %902 : f32 to vector<8x8xf32>
    %904 = arith.mulf %903, %901 : vector<8x8xf32>
    %905 = arith.addf %899, %904 : vector<8x8xf32>
    %c3_525 = arith.constant 3 : index
    %c1_526 = arith.constant 1 : index
    %c1_527 = arith.constant 1 : index
    %906 = vector.load %arg4[%c3_525, %c1_526, %c1_527] : memref<24x9x9xf32, #tpu.memory_space<vmem>>, vector<1x8x8xf32>
    %907 = vector.shape_cast %906 : vector<1x8x8xf32> to vector<8x8xf32>
    %c62_528 = arith.constant 62 : index
    %908 = memref.load %arg0[%c62_528] : memref<81xf32, #tpu.memory_space<smem>>
    %909 = vector.broadcast %908 : f32 to vector<8x8xf32>
    %910 = arith.mulf %909, %907 : vector<8x8xf32>
    %911 = arith.addf %905, %910 : vector<8x8xf32>
    %c4_529 = arith.constant 4 : index
    %c0_530 = arith.constant 0 : index
    %c0_531 = arith.constant 0 : index
    %912 = vector.load %arg4[%c4_529, %c0_530, %c0_531] : memref<24x9x9xf32, #tpu.memory_space<vmem>>, vector<1x8x8xf32>
    %913 = vector.shape_cast %912 : vector<1x8x8xf32> to vector<8x8xf32>
    %c63_532 = arith.constant 63 : index
    %914 = memref.load %arg0[%c63_532] : memref<81xf32, #tpu.memory_space<smem>>
    %915 = vector.broadcast %914 : f32 to vector<8x8xf32>
    %916 = arith.mulf %915, %913 : vector<8x8xf32>
    %917 = arith.addf %911, %916 : vector<8x8xf32>
    %c10_533 = arith.constant 10 : index
    %c0_534 = arith.constant 0 : index
    %c0_535 = arith.constant 0 : index
    %918 = vector.load %arg4[%c10_533, %c0_534, %c0_535] : memref<24x9x9xf32, #tpu.memory_space<vmem>>, vector<1x8x8xf32>
    %919 = vector.shape_cast %918 : vector<1x8x8xf32> to vector<8x8xf32>
    %c64_536 = arith.constant 64 : index
    %920 = memref.load %arg0[%c64_536] : memref<81xf32, #tpu.memory_space<smem>>
    %921 = vector.broadcast %920 : f32 to vector<8x8xf32>
    %922 = arith.mulf %921, %919 : vector<8x8xf32>
    %923 = arith.addf %917, %922 : vector<8x8xf32>
    %c4_537 = arith.constant 4 : index
    %c0_538 = arith.constant 0 : index
    %c1_539 = arith.constant 1 : index
    %924 = vector.load %arg4[%c4_537, %c0_538, %c1_539] : memref<24x9x9xf32, #tpu.memory_space<vmem>>, vector<1x8x8xf32>
    %925 = vector.shape_cast %924 : vector<1x8x8xf32> to vector<8x8xf32>
    %c65_540 = arith.constant 65 : index
    %926 = memref.load %arg0[%c65_540] : memref<81xf32, #tpu.memory_space<smem>>
    %927 = vector.broadcast %926 : f32 to vector<8x8xf32>
    %928 = arith.mulf %927, %925 : vector<8x8xf32>
    %929 = arith.addf %923, %928 : vector<8x8xf32>
    %c16_541 = arith.constant 16 : index
    %c0_542 = arith.constant 0 : index
    %c0_543 = arith.constant 0 : index
    %930 = vector.load %arg4[%c16_541, %c0_542, %c0_543] : memref<24x9x9xf32, #tpu.memory_space<vmem>>, vector<1x8x8xf32>
    %931 = vector.shape_cast %930 : vector<1x8x8xf32> to vector<8x8xf32>
    %c66_544 = arith.constant 66 : index
    %932 = memref.load %arg0[%c66_544] : memref<81xf32, #tpu.memory_space<smem>>
    %933 = vector.broadcast %932 : f32 to vector<8x8xf32>
    %934 = arith.mulf %933, %931 : vector<8x8xf32>
    %935 = arith.addf %929, %934 : vector<8x8xf32>
    %c22_545 = arith.constant 22 : index
    %c0_546 = arith.constant 0 : index
    %c0_547 = arith.constant 0 : index
    %936 = vector.load %arg4[%c22_545, %c0_546, %c0_547] : memref<24x9x9xf32, #tpu.memory_space<vmem>>, vector<1x8x8xf32>
    %937 = vector.shape_cast %936 : vector<1x8x8xf32> to vector<8x8xf32>
    %c67_548 = arith.constant 67 : index
    %938 = memref.load %arg0[%c67_548] : memref<81xf32, #tpu.memory_space<smem>>
    %939 = vector.broadcast %938 : f32 to vector<8x8xf32>
    %940 = arith.mulf %939, %937 : vector<8x8xf32>
    %941 = arith.addf %935, %940 : vector<8x8xf32>
    %c16_549 = arith.constant 16 : index
    %c0_550 = arith.constant 0 : index
    %c1_551 = arith.constant 1 : index
    %942 = vector.load %arg4[%c16_549, %c0_550, %c1_551] : memref<24x9x9xf32, #tpu.memory_space<vmem>>, vector<1x8x8xf32>
    %943 = vector.shape_cast %942 : vector<1x8x8xf32> to vector<8x8xf32>
    %c68_552 = arith.constant 68 : index
    %944 = memref.load %arg0[%c68_552] : memref<81xf32, #tpu.memory_space<smem>>
    %945 = vector.broadcast %944 : f32 to vector<8x8xf32>
    %946 = arith.mulf %945, %943 : vector<8x8xf32>
    %947 = arith.addf %941, %946 : vector<8x8xf32>
    %c4_553 = arith.constant 4 : index
    %c1_554 = arith.constant 1 : index
    %c0_555 = arith.constant 0 : index
    %948 = vector.load %arg4[%c4_553, %c1_554, %c0_555] : memref<24x9x9xf32, #tpu.memory_space<vmem>>, vector<1x8x8xf32>
    %949 = vector.shape_cast %948 : vector<1x8x8xf32> to vector<8x8xf32>
    %c69_556 = arith.constant 69 : index
    %950 = memref.load %arg0[%c69_556] : memref<81xf32, #tpu.memory_space<smem>>
    %951 = vector.broadcast %950 : f32 to vector<8x8xf32>
    %952 = arith.mulf %951, %949 : vector<8x8xf32>
    %953 = arith.addf %947, %952 : vector<8x8xf32>
    %c10_557 = arith.constant 10 : index
    %c1_558 = arith.constant 1 : index
    %c0_559 = arith.constant 0 : index
    %954 = vector.load %arg4[%c10_557, %c1_558, %c0_559] : memref<24x9x9xf32, #tpu.memory_space<vmem>>, vector<1x8x8xf32>
    %955 = vector.shape_cast %954 : vector<1x8x8xf32> to vector<8x8xf32>
    %c70_560 = arith.constant 70 : index
    %956 = memref.load %arg0[%c70_560] : memref<81xf32, #tpu.memory_space<smem>>
    %957 = vector.broadcast %956 : f32 to vector<8x8xf32>
    %958 = arith.mulf %957, %955 : vector<8x8xf32>
    %959 = arith.addf %953, %958 : vector<8x8xf32>
    %c4_561 = arith.constant 4 : index
    %c1_562 = arith.constant 1 : index
    %c1_563 = arith.constant 1 : index
    %960 = vector.load %arg4[%c4_561, %c1_562, %c1_563] : memref<24x9x9xf32, #tpu.memory_space<vmem>>, vector<1x8x8xf32>
    %961 = vector.shape_cast %960 : vector<1x8x8xf32> to vector<8x8xf32>
    %c71_564 = arith.constant 71 : index
    %962 = memref.load %arg0[%c71_564] : memref<81xf32, #tpu.memory_space<smem>>
    %963 = vector.broadcast %962 : f32 to vector<8x8xf32>
    %964 = arith.mulf %963, %961 : vector<8x8xf32>
    %965 = arith.addf %959, %964 : vector<8x8xf32>
    %c5_565 = arith.constant 5 : index
    %c0_566 = arith.constant 0 : index
    %c0_567 = arith.constant 0 : index
    %966 = vector.load %arg4[%c5_565, %c0_566, %c0_567] : memref<24x9x9xf32, #tpu.memory_space<vmem>>, vector<1x8x8xf32>
    %967 = vector.shape_cast %966 : vector<1x8x8xf32> to vector<8x8xf32>
    %c72_568 = arith.constant 72 : index
    %968 = memref.load %arg0[%c72_568] : memref<81xf32, #tpu.memory_space<smem>>
    %969 = vector.broadcast %968 : f32 to vector<8x8xf32>
    %970 = arith.mulf %969, %967 : vector<8x8xf32>
    %971 = arith.addf %965, %970 : vector<8x8xf32>
    %c11_569 = arith.constant 11 : index
    %c0_570 = arith.constant 0 : index
    %c0_571 = arith.constant 0 : index
    %972 = vector.load %arg4[%c11_569, %c0_570, %c0_571] : memref<24x9x9xf32, #tpu.memory_space<vmem>>, vector<1x8x8xf32>
    %973 = vector.shape_cast %972 : vector<1x8x8xf32> to vector<8x8xf32>
    %c73_572 = arith.constant 73 : index
    %974 = memref.load %arg0[%c73_572] : memref<81xf32, #tpu.memory_space<smem>>
    %975 = vector.broadcast %974 : f32 to vector<8x8xf32>
    %976 = arith.mulf %975, %973 : vector<8x8xf32>
    %977 = arith.addf %971, %976 : vector<8x8xf32>
    %c5_573 = arith.constant 5 : index
    %c0_574 = arith.constant 0 : index
    %c1_575 = arith.constant 1 : index
    %978 = vector.load %arg4[%c5_573, %c0_574, %c1_575] : memref<24x9x9xf32, #tpu.memory_space<vmem>>, vector<1x8x8xf32>
    %979 = vector.shape_cast %978 : vector<1x8x8xf32> to vector<8x8xf32>
    %c74_576 = arith.constant 74 : index
    %980 = memref.load %arg0[%c74_576] : memref<81xf32, #tpu.memory_space<smem>>
    %981 = vector.broadcast %980 : f32 to vector<8x8xf32>
    %982 = arith.mulf %981, %979 : vector<8x8xf32>
    %983 = arith.addf %977, %982 : vector<8x8xf32>
    %c17_577 = arith.constant 17 : index
    %c0_578 = arith.constant 0 : index
    %c0_579 = arith.constant 0 : index
    %984 = vector.load %arg4[%c17_577, %c0_578, %c0_579] : memref<24x9x9xf32, #tpu.memory_space<vmem>>, vector<1x8x8xf32>
    %985 = vector.shape_cast %984 : vector<1x8x8xf32> to vector<8x8xf32>
    %c75_580 = arith.constant 75 : index
    %986 = memref.load %arg0[%c75_580] : memref<81xf32, #tpu.memory_space<smem>>
    %987 = vector.broadcast %986 : f32 to vector<8x8xf32>
    %988 = arith.mulf %987, %985 : vector<8x8xf32>
    %989 = arith.addf %983, %988 : vector<8x8xf32>
    %c23_581 = arith.constant 23 : index
    %c0_582 = arith.constant 0 : index
    %c0_583 = arith.constant 0 : index
    %990 = vector.load %arg4[%c23_581, %c0_582, %c0_583] : memref<24x9x9xf32, #tpu.memory_space<vmem>>, vector<1x8x8xf32>
    %991 = vector.shape_cast %990 : vector<1x8x8xf32> to vector<8x8xf32>
    %c76_584 = arith.constant 76 : index
    %992 = memref.load %arg0[%c76_584] : memref<81xf32, #tpu.memory_space<smem>>
    %993 = vector.broadcast %992 : f32 to vector<8x8xf32>
    %994 = arith.mulf %993, %991 : vector<8x8xf32>
    %995 = arith.addf %989, %994 : vector<8x8xf32>
    %c17_585 = arith.constant 17 : index
    %c0_586 = arith.constant 0 : index
    %c1_587 = arith.constant 1 : index
    %996 = vector.load %arg4[%c17_585, %c0_586, %c1_587] : memref<24x9x9xf32, #tpu.memory_space<vmem>>, vector<1x8x8xf32>
    %997 = vector.shape_cast %996 : vector<1x8x8xf32> to vector<8x8xf32>
    %c77_588 = arith.constant 77 : index
    %998 = memref.load %arg0[%c77_588] : memref<81xf32, #tpu.memory_space<smem>>
    %999 = vector.broadcast %998 : f32 to vector<8x8xf32>
    %1000 = arith.mulf %999, %997 : vector<8x8xf32>
    %1001 = arith.addf %995, %1000 : vector<8x8xf32>
    %c5_589 = arith.constant 5 : index
    %c1_590 = arith.constant 1 : index
    %c0_591 = arith.constant 0 : index
    %1002 = vector.load %arg4[%c5_589, %c1_590, %c0_591] : memref<24x9x9xf32, #tpu.memory_space<vmem>>, vector<1x8x8xf32>
    %1003 = vector.shape_cast %1002 : vector<1x8x8xf32> to vector<8x8xf32>
    %c78_592 = arith.constant 78 : index
    %1004 = memref.load %arg0[%c78_592] : memref<81xf32, #tpu.memory_space<smem>>
    %1005 = vector.broadcast %1004 : f32 to vector<8x8xf32>
    %1006 = arith.mulf %1005, %1003 : vector<8x8xf32>
    %1007 = arith.addf %1001, %1006 : vector<8x8xf32>
    %c11_593 = arith.constant 11 : index
    %c1_594 = arith.constant 1 : index
    %c0_595 = arith.constant 0 : index
    %1008 = vector.load %arg4[%c11_593, %c1_594, %c0_595] : memref<24x9x9xf32, #tpu.memory_space<vmem>>, vector<1x8x8xf32>
    %1009 = vector.shape_cast %1008 : vector<1x8x8xf32> to vector<8x8xf32>
    %c79_596 = arith.constant 79 : index
    %1010 = memref.load %arg0[%c79_596] : memref<81xf32, #tpu.memory_space<smem>>
    %1011 = vector.broadcast %1010 : f32 to vector<8x8xf32>
    %1012 = arith.mulf %1011, %1009 : vector<8x8xf32>
    %1013 = arith.addf %1007, %1012 : vector<8x8xf32>
    %c5_597 = arith.constant 5 : index
    %c1_598 = arith.constant 1 : index
    %c1_599 = arith.constant 1 : index
    %1014 = vector.load %arg4[%c5_597, %c1_598, %c1_599] : memref<24x9x9xf32, #tpu.memory_space<vmem>>, vector<1x8x8xf32>
    %1015 = vector.shape_cast %1014 : vector<1x8x8xf32> to vector<8x8xf32>
    %c80_600 = arith.constant 80 : index
    %1016 = memref.load %arg0[%c80_600] : memref<81xf32, #tpu.memory_space<smem>>
    %1017 = vector.broadcast %1016 : f32 to vector<8x8xf32>
    %1018 = arith.mulf %1017, %1015 : vector<8x8xf32>
    %1019 = arith.addf %1013, %1018 : vector<8x8xf32>
    %c2_601 = arith.constant 2 : index
    %1020 = memref.load %arg1[%c2_601] : memref<3xf32, #tpu.memory_space<smem>>
    %1021 = vector.broadcast %1020 : f32 to vector<8x8xf32>
    %1022 = arith.addf %1019, %1021 : vector<8x8xf32>
    %cst_602 = arith.constant 0.000000e+00 : f32
    %1023 = vector.broadcast %cst_602 : f32 to vector<8x8xf32>
    %1024 = arith.maximumf %1022, %1023 : vector<8x8xf32>
    %c5_603 = arith.constant 5 : index
    %c1_604 = arith.constant 1 : index
    %c1_605 = arith.constant 1 : index
    %1025 = vector.load %arg6[%c5_603, %c1_604, %c1_605] : memref<6x10x10xf32, #tpu.memory_space<vmem>>, vector<1x8x8xf32>
    %1026 = vector.shape_cast %1025 : vector<1x8x8xf32> to vector<8x8xf32>
    %1027 = vector.shape_cast %1024 : vector<8x8xf32> to vector<1x8x8xf32>
    tpu.vector_store %arg6[%c5_603, %c1_604, %c1_605], %1027 {strides = array<i32>} : memref<6x10x10xf32, #tpu.memory_space<vmem>>, vector<1x8x8xf32>,
    %cst_606 = arith.constant 0.000000e+00 : f32
    %1028 = vector.broadcast %cst_606 : f32 to vector<8x8xf32>
    %c0_607 = arith.constant 0 : index
    %c0_608 = arith.constant 0 : index
    %c0_609 = arith.constant 0 : index
    %1029 = vector.load %arg6[%c0_607, %c0_608, %c0_609] : memref<6x10x10xf32, #tpu.memory_space<vmem>>, vector<1x8x8xf32>
    %1030 = vector.shape_cast %1029 : vector<1x8x8xf32> to vector<8x8xf32>
    %c0_610 = arith.constant 0 : index
    %1031 = memref.load %arg2[%c0_610] : memref<81xf32, #tpu.memory_space<smem>>
    %1032 = vector.broadcast %1031 : f32 to vector<8x8xf32>
    %1033 = arith.mulf %1032, %1030 : vector<8x8xf32>
    %1034 = arith.addf %1028, %1033 : vector<8x8xf32>
    %c0_611 = arith.constant 0 : index
    %c0_612 = arith.constant 0 : index
    %c1_613 = arith.constant 1 : index
    %1035 = vector.load %arg6[%c0_611, %c0_612, %c1_613] : memref<6x10x10xf32, #tpu.memory_space<vmem>>, vector<1x8x8xf32>
    %1036 = vector.shape_cast %1035 : vector<1x8x8xf32> to vector<8x8xf32>
    %c1_614 = arith.constant 1 : index
    %1037 = memref.load %arg2[%c1_614] : memref<81xf32, #tpu.memory_space<smem>>
    %1038 = vector.broadcast %1037 : f32 to vector<8x8xf32>
    %1039 = arith.mulf %1038, %1036 : vector<8x8xf32>
    %1040 = arith.addf %1034, %1039 : vector<8x8xf32>
    %c0_615 = arith.constant 0 : index
    %c0_616 = arith.constant 0 : index
    %c2_617 = arith.constant 2 : index
    %1041 = vector.load %arg6[%c0_615, %c0_616, %c2_617] : memref<6x10x10xf32, #tpu.memory_space<vmem>>, vector<1x8x8xf32>
    %1042 = vector.shape_cast %1041 : vector<1x8x8xf32> to vector<8x8xf32>
    %c2_618 = arith.constant 2 : index
    %1043 = memref.load %arg2[%c2_618] : memref<81xf32, #tpu.memory_space<smem>>
    %1044 = vector.broadcast %1043 : f32 to vector<8x8xf32>
    %1045 = arith.mulf %1044, %1042 : vector<8x8xf32>
    %1046 = arith.addf %1040, %1045 : vector<8x8xf32>
    %c0_619 = arith.constant 0 : index
    %c1_620 = arith.constant 1 : index
    %c0_621 = arith.constant 0 : index
    %1047 = vector.load %arg6[%c0_619, %c1_620, %c0_621] : memref<6x10x10xf32, #tpu.memory_space<vmem>>, vector<1x8x8xf32>
    %1048 = vector.shape_cast %1047 : vector<1x8x8xf32> to vector<8x8xf32>
    %c3_622 = arith.constant 3 : index
    %1049 = memref.load %arg2[%c3_622] : memref<81xf32, #tpu.memory_space<smem>>
    %1050 = vector.broadcast %1049 : f32 to vector<8x8xf32>
    %1051 = arith.mulf %1050, %1048 : vector<8x8xf32>
    %1052 = arith.addf %1046, %1051 : vector<8x8xf32>
    %c0_623 = arith.constant 0 : index
    %c1_624 = arith.constant 1 : index
    %c1_625 = arith.constant 1 : index
    %1053 = vector.load %arg6[%c0_623, %c1_624, %c1_625] : memref<6x10x10xf32, #tpu.memory_space<vmem>>, vector<1x8x8xf32>
    %1054 = vector.shape_cast %1053 : vector<1x8x8xf32> to vector<8x8xf32>
    %c4_626 = arith.constant 4 : index
    %1055 = memref.load %arg2[%c4_626] : memref<81xf32, #tpu.memory_space<smem>>
    %1056 = vector.broadcast %1055 : f32 to vector<8x8xf32>
    %1057 = arith.mulf %1056, %1054 : vector<8x8xf32>
    %1058 = arith.addf %1052, %1057 : vector<8x8xf32>
    %c0_627 = arith.constant 0 : index
    %c1_628 = arith.constant 1 : index
    %c2_629 = arith.constant 2 : index
    %1059 = vector.load %arg6[%c0_627, %c1_628, %c2_629] : memref<6x10x10xf32, #tpu.memory_space<vmem>>, vector<1x8x8xf32>
    %1060 = vector.shape_cast %1059 : vector<1x8x8xf32> to vector<8x8xf32>
    %c5_630 = arith.constant 5 : index
    %1061 = memref.load %arg2[%c5_630] : memref<81xf32, #tpu.memory_space<smem>>
    %1062 = vector.broadcast %1061 : f32 to vector<8x8xf32>
    %1063 = arith.mulf %1062, %1060 : vector<8x8xf32>
    %1064 = arith.addf %1058, %1063 : vector<8x8xf32>
    %c0_631 = arith.constant 0 : index
    %c2_632 = arith.constant 2 : index
    %c0_633 = arith.constant 0 : index
    %1065 = vector.load %arg6[%c0_631, %c2_632, %c0_633] : memref<6x10x10xf32, #tpu.memory_space<vmem>>, vector<1x8x8xf32>
    %1066 = vector.shape_cast %1065 : vector<1x8x8xf32> to vector<8x8xf32>
    %c6_634 = arith.constant 6 : index
    %1067 = memref.load %arg2[%c6_634] : memref<81xf32, #tpu.memory_space<smem>>
    %1068 = vector.broadcast %1067 : f32 to vector<8x8xf32>
    %1069 = arith.mulf %1068, %1066 : vector<8x8xf32>
    %1070 = arith.addf %1064, %1069 : vector<8x8xf32>
    %c0_635 = arith.constant 0 : index
    %c2_636 = arith.constant 2 : index
    %c1_637 = arith.constant 1 : index
    %1071 = vector.load %arg6[%c0_635, %c2_636, %c1_637] : memref<6x10x10xf32, #tpu.memory_space<vmem>>, vector<1x8x8xf32>
    %1072 = vector.shape_cast %1071 : vector<1x8x8xf32> to vector<8x8xf32>
    %c7_638 = arith.constant 7 : index
    %1073 = memref.load %arg2[%c7_638] : memref<81xf32, #tpu.memory_space<smem>>
    %1074 = vector.broadcast %1073 : f32 to vector<8x8xf32>
    %1075 = arith.mulf %1074, %1072 : vector<8x8xf32>
    %1076 = arith.addf %1070, %1075 : vector<8x8xf32>
    %c0_639 = arith.constant 0 : index
    %c2_640 = arith.constant 2 : index
    %c2_641 = arith.constant 2 : index
    %1077 = vector.load %arg6[%c0_639, %c2_640, %c2_641] : memref<6x10x10xf32, #tpu.memory_space<vmem>>, vector<1x8x8xf32>
    %1078 = vector.shape_cast %1077 : vector<1x8x8xf32> to vector<8x8xf32>
    %c8_642 = arith.constant 8 : index
    %1079 = memref.load %arg2[%c8_642] : memref<81xf32, #tpu.memory_space<smem>>
    %1080 = vector.broadcast %1079 : f32 to vector<8x8xf32>
    %1081 = arith.mulf %1080, %1078 : vector<8x8xf32>
    %1082 = arith.addf %1076, %1081 : vector<8x8xf32>
    %c1_643 = arith.constant 1 : index
    %c0_644 = arith.constant 0 : index
    %c0_645 = arith.constant 0 : index
    %1083 = vector.load %arg6[%c1_643, %c0_644, %c0_645] : memref<6x10x10xf32, #tpu.memory_space<vmem>>, vector<1x8x8xf32>
    %1084 = vector.shape_cast %1083 : vector<1x8x8xf32> to vector<8x8xf32>
    %c9_646 = arith.constant 9 : index
    %1085 = memref.load %arg2[%c9_646] : memref<81xf32, #tpu.memory_space<smem>>
    %1086 = vector.broadcast %1085 : f32 to vector<8x8xf32>
    %1087 = arith.mulf %1086, %1084 : vector<8x8xf32>
    %1088 = arith.addf %1082, %1087 : vector<8x8xf32>
    %c1_647 = arith.constant 1 : index
    %c0_648 = arith.constant 0 : index
    %c1_649 = arith.constant 1 : index
    %1089 = vector.load %arg6[%c1_647, %c0_648, %c1_649] : memref<6x10x10xf32, #tpu.memory_space<vmem>>, vector<1x8x8xf32>
    %1090 = vector.shape_cast %1089 : vector<1x8x8xf32> to vector<8x8xf32>
    %c10_650 = arith.constant 10 : index
    %1091 = memref.load %arg2[%c10_650] : memref<81xf32, #tpu.memory_space<smem>>
    %1092 = vector.broadcast %1091 : f32 to vector<8x8xf32>
    %1093 = arith.mulf %1092, %1090 : vector<8x8xf32>
    %1094 = arith.addf %1088, %1093 : vector<8x8xf32>
    %c1_651 = arith.constant 1 : index
    %c0_652 = arith.constant 0 : index
    %c2_653 = arith.constant 2 : index
    %1095 = vector.load %arg6[%c1_651, %c0_652, %c2_653] : memref<6x10x10xf32, #tpu.memory_space<vmem>>, vector<1x8x8xf32>
    %1096 = vector.shape_cast %1095 : vector<1x8x8xf32> to vector<8x8xf32>
    %c11_654 = arith.constant 11 : index
    %1097 = memref.load %arg2[%c11_654] : memref<81xf32, #tpu.memory_space<smem>>
    %1098 = vector.broadcast %1097 : f32 to vector<8x8xf32>
    %1099 = arith.mulf %1098, %1096 : vector<8x8xf32>
    %1100 = arith.addf %1094, %1099 : vector<8x8xf32>
    %c1_655 = arith.constant 1 : index
    %c1_656 = arith.constant 1 : index
    %c0_657 = arith.constant 0 : index
    %1101 = vector.load %arg6[%c1_655, %c1_656, %c0_657] : memref<6x10x10xf32, #tpu.memory_space<vmem>>, vector<1x8x8xf32>
    %1102 = vector.shape_cast %1101 : vector<1x8x8xf32> to vector<8x8xf32>
    %c12_658 = arith.constant 12 : index
    %1103 = memref.load %arg2[%c12_658] : memref<81xf32, #tpu.memory_space<smem>>
    %1104 = vector.broadcast %1103 : f32 to vector<8x8xf32>
    %1105 = arith.mulf %1104, %1102 : vector<8x8xf32>
    %1106 = arith.addf %1100, %1105 : vector<8x8xf32>
    %c1_659 = arith.constant 1 : index
    %c1_660 = arith.constant 1 : index
    %c1_661 = arith.constant 1 : index
    %1107 = vector.load %arg6[%c1_659, %c1_660, %c1_661] : memref<6x10x10xf32, #tpu.memory_space<vmem>>, vector<1x8x8xf32>
    %1108 = vector.shape_cast %1107 : vector<1x8x8xf32> to vector<8x8xf32>
    %c13_662 = arith.constant 13 : index
    %1109 = memref.load %arg2[%c13_662] : memref<81xf32, #tpu.memory_space<smem>>
    %1110 = vector.broadcast %1109 : f32 to vector<8x8xf32>
    %1111 = arith.mulf %1110, %1108 : vector<8x8xf32>
    %1112 = arith.addf %1106, %1111 : vector<8x8xf32>
    %c1_663 = arith.constant 1 : index
    %c1_664 = arith.constant 1 : index
    %c2_665 = arith.constant 2 : index
    %1113 = vector.load %arg6[%c1_663, %c1_664, %c2_665] : memref<6x10x10xf32, #tpu.memory_space<vmem>>, vector<1x8x8xf32>
    %1114 = vector.shape_cast %1113 : vector<1x8x8xf32> to vector<8x8xf32>
    %c14_666 = arith.constant 14 : index
    %1115 = memref.load %arg2[%c14_666] : memref<81xf32, #tpu.memory_space<smem>>
    %1116 = vector.broadcast %1115 : f32 to vector<8x8xf32>
    %1117 = arith.mulf %1116, %1114 : vector<8x8xf32>
    %1118 = arith.addf %1112, %1117 : vector<8x8xf32>
    %c1_667 = arith.constant 1 : index
    %c2_668 = arith.constant 2 : index
    %c0_669 = arith.constant 0 : index
    %1119 = vector.load %arg6[%c1_667, %c2_668, %c0_669] : memref<6x10x10xf32, #tpu.memory_space<vmem>>, vector<1x8x8xf32>
    %1120 = vector.shape_cast %1119 : vector<1x8x8xf32> to vector<8x8xf32>
    %c15_670 = arith.constant 15 : index
    %1121 = memref.load %arg2[%c15_670] : memref<81xf32, #tpu.memory_space<smem>>
    %1122 = vector.broadcast %1121 : f32 to vector<8x8xf32>
    %1123 = arith.mulf %1122, %1120 : vector<8x8xf32>
    %1124 = arith.addf %1118, %1123 : vector<8x8xf32>
    %c1_671 = arith.constant 1 : index
    %c2_672 = arith.constant 2 : index
    %c1_673 = arith.constant 1 : index
    %1125 = vector.load %arg6[%c1_671, %c2_672, %c1_673] : memref<6x10x10xf32, #tpu.memory_space<vmem>>, vector<1x8x8xf32>
    %1126 = vector.shape_cast %1125 : vector<1x8x8xf32> to vector<8x8xf32>
    %c16_674 = arith.constant 16 : index
    %1127 = memref.load %arg2[%c16_674] : memref<81xf32, #tpu.memory_space<smem>>
    %1128 = vector.broadcast %1127 : f32 to vector<8x8xf32>
    %1129 = arith.mulf %1128, %1126 : vector<8x8xf32>
    %1130 = arith.addf %1124, %1129 : vector<8x8xf32>
    %c1_675 = arith.constant 1 : index
    %c2_676 = arith.constant 2 : index
    %c2_677 = arith.constant 2 : index
    %1131 = vector.load %arg6[%c1_675, %c2_676, %c2_677] : memref<6x10x10xf32, #tpu.memory_space<vmem>>, vector<1x8x8xf32>
    %1132 = vector.shape_cast %1131 : vector<1x8x8xf32> to vector<8x8xf32>
    %c17_678 = arith.constant 17 : index
    %1133 = memref.load %arg2[%c17_678] : memref<81xf32, #tpu.memory_space<smem>>
    %1134 = vector.broadcast %1133 : f32 to vector<8x8xf32>
    %1135 = arith.mulf %1134, %1132 : vector<8x8xf32>
    %1136 = arith.addf %1130, %1135 : vector<8x8xf32>
    %c2_679 = arith.constant 2 : index
    %c0_680 = arith.constant 0 : index
    %c0_681 = arith.constant 0 : index
    %1137 = vector.load %arg6[%c2_679, %c0_680, %c0_681] : memref<6x10x10xf32, #tpu.memory_space<vmem>>, vector<1x8x8xf32>
    %1138 = vector.shape_cast %1137 : vector<1x8x8xf32> to vector<8x8xf32>
    %c18_682 = arith.constant 18 : index
    %1139 = memref.load %arg2[%c18_682] : memref<81xf32, #tpu.memory_space<smem>>
    %1140 = vector.broadcast %1139 : f32 to vector<8x8xf32>
    %1141 = arith.mulf %1140, %1138 : vector<8x8xf32>
    %1142 = arith.addf %1136, %1141 : vector<8x8xf32>
    %c2_683 = arith.constant 2 : index
    %c0_684 = arith.constant 0 : index
    %c1_685 = arith.constant 1 : index
    %1143 = vector.load %arg6[%c2_683, %c0_684, %c1_685] : memref<6x10x10xf32, #tpu.memory_space<vmem>>, vector<1x8x8xf32>
    %1144 = vector.shape_cast %1143 : vector<1x8x8xf32> to vector<8x8xf32>
    %c19_686 = arith.constant 19 : index
    %1145 = memref.load %arg2[%c19_686] : memref<81xf32, #tpu.memory_space<smem>>
    %1146 = vector.broadcast %1145 : f32 to vector<8x8xf32>
    %1147 = arith.mulf %1146, %1144 : vector<8x8xf32>
    %1148 = arith.addf %1142, %1147 : vector<8x8xf32>
    %c2_687 = arith.constant 2 : index
    %c0_688 = arith.constant 0 : index
    %c2_689 = arith.constant 2 : index
    %1149 = vector.load %arg6[%c2_687, %c0_688, %c2_689] : memref<6x10x10xf32, #tpu.memory_space<vmem>>, vector<1x8x8xf32>
    %1150 = vector.shape_cast %1149 : vector<1x8x8xf32> to vector<8x8xf32>
    %c20_690 = arith.constant 20 : index
    %1151 = memref.load %arg2[%c20_690] : memref<81xf32, #tpu.memory_space<smem>>
    %1152 = vector.broadcast %1151 : f32 to vector<8x8xf32>
    %1153 = arith.mulf %1152, %1150 : vector<8x8xf32>
    %1154 = arith.addf %1148, %1153 : vector<8x8xf32>
    %c2_691 = arith.constant 2 : index
    %c1_692 = arith.constant 1 : index
    %c0_693 = arith.constant 0 : index
    %1155 = vector.load %arg6[%c2_691, %c1_692, %c0_693] : memref<6x10x10xf32, #tpu.memory_space<vmem>>, vector<1x8x8xf32>
    %1156 = vector.shape_cast %1155 : vector<1x8x8xf32> to vector<8x8xf32>
    %c21_694 = arith.constant 21 : index
    %1157 = memref.load %arg2[%c21_694] : memref<81xf32, #tpu.memory_space<smem>>
    %1158 = vector.broadcast %1157 : f32 to vector<8x8xf32>
    %1159 = arith.mulf %1158, %1156 : vector<8x8xf32>
    %1160 = arith.addf %1154, %1159 : vector<8x8xf32>
    %c2_695 = arith.constant 2 : index
    %c1_696 = arith.constant 1 : index
    %c1_697 = arith.constant 1 : index
    %1161 = vector.load %arg6[%c2_695, %c1_696, %c1_697] : memref<6x10x10xf32, #tpu.memory_space<vmem>>, vector<1x8x8xf32>
    %1162 = vector.shape_cast %1161 : vector<1x8x8xf32> to vector<8x8xf32>
    %c22_698 = arith.constant 22 : index
    %1163 = memref.load %arg2[%c22_698] : memref<81xf32, #tpu.memory_space<smem>>
    %1164 = vector.broadcast %1163 : f32 to vector<8x8xf32>
    %1165 = arith.mulf %1164, %1162 : vector<8x8xf32>
    %1166 = arith.addf %1160, %1165 : vector<8x8xf32>
    %c2_699 = arith.constant 2 : index
    %c1_700 = arith.constant 1 : index
    %c2_701 = arith.constant 2 : index
    %1167 = vector.load %arg6[%c2_699, %c1_700, %c2_701] : memref<6x10x10xf32, #tpu.memory_space<vmem>>, vector<1x8x8xf32>
    %1168 = vector.shape_cast %1167 : vector<1x8x8xf32> to vector<8x8xf32>
    %c23_702 = arith.constant 23 : index
    %1169 = memref.load %arg2[%c23_702] : memref<81xf32, #tpu.memory_space<smem>>
    %1170 = vector.broadcast %1169 : f32 to vector<8x8xf32>
    %1171 = arith.mulf %1170, %1168 : vector<8x8xf32>
    %1172 = arith.addf %1166, %1171 : vector<8x8xf32>
    %c2_703 = arith.constant 2 : index
    %c2_704 = arith.constant 2 : index
    %c0_705 = arith.constant 0 : index
    %1173 = vector.load %arg6[%c2_703, %c2_704, %c0_705] : memref<6x10x10xf32, #tpu.memory_space<vmem>>, vector<1x8x8xf32>
    %1174 = vector.shape_cast %1173 : vector<1x8x8xf32> to vector<8x8xf32>
    %c24_706 = arith.constant 24 : index
    %1175 = memref.load %arg2[%c24_706] : memref<81xf32, #tpu.memory_space<smem>>
    %1176 = vector.broadcast %1175 : f32 to vector<8x8xf32>
    %1177 = arith.mulf %1176, %1174 : vector<8x8xf32>
    %1178 = arith.addf %1172, %1177 : vector<8x8xf32>
    %c2_707 = arith.constant 2 : index
    %c2_708 = arith.constant 2 : index
    %c1_709 = arith.constant 1 : index
    %1179 = vector.load %arg6[%c2_707, %c2_708, %c1_709] : memref<6x10x10xf32, #tpu.memory_space<vmem>>, vector<1x8x8xf32>
    %1180 = vector.shape_cast %1179 : vector<1x8x8xf32> to vector<8x8xf32>
    %c25_710 = arith.constant 25 : index
    %1181 = memref.load %arg2[%c25_710] : memref<81xf32, #tpu.memory_space<smem>>
    %1182 = vector.broadcast %1181 : f32 to vector<8x8xf32>
    %1183 = arith.mulf %1182, %1180 : vector<8x8xf32>
    %1184 = arith.addf %1178, %1183 : vector<8x8xf32>
    %c2_711 = arith.constant 2 : index
    %c2_712 = arith.constant 2 : index
    %c2_713 = arith.constant 2 : index
    %1185 = vector.load %arg6[%c2_711, %c2_712, %c2_713] : memref<6x10x10xf32, #tpu.memory_space<vmem>>, vector<1x8x8xf32>
    %1186 = vector.shape_cast %1185 : vector<1x8x8xf32> to vector<8x8xf32>
    %c26_714 = arith.constant 26 : index
    %1187 = memref.load %arg2[%c26_714] : memref<81xf32, #tpu.memory_space<smem>>
    %1188 = vector.broadcast %1187 : f32 to vector<8x8xf32>
    %1189 = arith.mulf %1188, %1186 : vector<8x8xf32>
    %1190 = arith.addf %1184, %1189 : vector<8x8xf32>
    %c0_715 = arith.constant 0 : index
    %1191 = memref.load %arg3[%c0_715] : memref<3xf32, #tpu.memory_space<smem>>
    %1192 = vector.broadcast %1191 : f32 to vector<8x8xf32>
    %1193 = arith.addf %1190, %1192 : vector<8x8xf32>
    %cst_716 = arith.constant 0.000000e+00 : f32
    %1194 = vector.broadcast %cst_716 : f32 to vector<8x8xf32>
    %1195 = arith.maximumf %1193, %1194 : vector<8x8xf32>
    %c0_717 = arith.constant 0 : index
    %c0_718 = arith.constant 0 : index
    %c0_719 = arith.constant 0 : index
    %c0_720 = arith.constant 0 : index
    %1196 = vector.load %arg5[%c0_717, %c0_718, %c0_719, %c0_720] : memref<2x3x8x8xf32, #tpu.memory_space<vmem>>, vector<1x1x8x8xf32>
    %1197 = vector.shape_cast %1196 : vector<1x1x8x8xf32> to vector<8x8xf32>
    %1198 = vector.shape_cast %1195 : vector<8x8xf32> to vector<1x1x8x8xf32>
    tpu.vector_store %arg5[%c0_717, %c0_718, %c0_719, %c0_720], %1198 {strides = array<i32>} : memref<2x3x8x8xf32, #tpu.memory_space<vmem>>, vector<1x1x8x8xf32>,
    %cst_721 = arith.constant 0.000000e+00 : f32
    %1199 = vector.broadcast %cst_721 : f32 to vector<8x8xf32>
    %c0_722 = arith.constant 0 : index
    %c0_723 = arith.constant 0 : index
    %c0_724 = arith.constant 0 : index
    %1200 = vector.load %arg6[%c0_722, %c0_723, %c0_724] : memref<6x10x10xf32, #tpu.memory_space<vmem>>, vector<1x8x8xf32>
    %1201 = vector.shape_cast %1200 : vector<1x8x8xf32> to vector<8x8xf32>
    %c27_725 = arith.constant 27 : index
    %1202 = memref.load %arg2[%c27_725] : memref<81xf32, #tpu.memory_space<smem>>
    %1203 = vector.broadcast %1202 : f32 to vector<8x8xf32>
    %1204 = arith.mulf %1203, %1201 : vector<8x8xf32>
    %1205 = arith.addf %1199, %1204 : vector<8x8xf32>
    %c0_726 = arith.constant 0 : index
    %c0_727 = arith.constant 0 : index
    %c1_728 = arith.constant 1 : index
    %1206 = vector.load %arg6[%c0_726, %c0_727, %c1_728] : memref<6x10x10xf32, #tpu.memory_space<vmem>>, vector<1x8x8xf32>
    %1207 = vector.shape_cast %1206 : vector<1x8x8xf32> to vector<8x8xf32>
    %c28_729 = arith.constant 28 : index
    %1208 = memref.load %arg2[%c28_729] : memref<81xf32, #tpu.memory_space<smem>>
    %1209 = vector.broadcast %1208 : f32 to vector<8x8xf32>
    %1210 = arith.mulf %1209, %1207 : vector<8x8xf32>
    %1211 = arith.addf %1205, %1210 : vector<8x8xf32>
    %c0_730 = arith.constant 0 : index
    %c0_731 = arith.constant 0 : index
    %c2_732 = arith.constant 2 : index
    %1212 = vector.load %arg6[%c0_730, %c0_731, %c2_732] : memref<6x10x10xf32, #tpu.memory_space<vmem>>, vector<1x8x8xf32>
    %1213 = vector.shape_cast %1212 : vector<1x8x8xf32> to vector<8x8xf32>
    %c29_733 = arith.constant 29 : index
    %1214 = memref.load %arg2[%c29_733] : memref<81xf32, #tpu.memory_space<smem>>
    %1215 = vector.broadcast %1214 : f32 to vector<8x8xf32>
    %1216 = arith.mulf %1215, %1213 : vector<8x8xf32>
    %1217 = arith.addf %1211, %1216 : vector<8x8xf32>
    %c0_734 = arith.constant 0 : index
    %c1_735 = arith.constant 1 : index
    %c0_736 = arith.constant 0 : index
    %1218 = vector.load %arg6[%c0_734, %c1_735, %c0_736] : memref<6x10x10xf32, #tpu.memory_space<vmem>>, vector<1x8x8xf32>
    %1219 = vector.shape_cast %1218 : vector<1x8x8xf32> to vector<8x8xf32>
    %c30_737 = arith.constant 30 : index
    %1220 = memref.load %arg2[%c30_737] : memref<81xf32, #tpu.memory_space<smem>>
    %1221 = vector.broadcast %1220 : f32 to vector<8x8xf32>
    %1222 = arith.mulf %1221, %1219 : vector<8x8xf32>
    %1223 = arith.addf %1217, %1222 : vector<8x8xf32>
    %c0_738 = arith.constant 0 : index
    %c1_739 = arith.constant 1 : index
    %c1_740 = arith.constant 1 : index
    %1224 = vector.load %arg6[%c0_738, %c1_739, %c1_740] : memref<6x10x10xf32, #tpu.memory_space<vmem>>, vector<1x8x8xf32>
    %1225 = vector.shape_cast %1224 : vector<1x8x8xf32> to vector<8x8xf32>
    %c31_741 = arith.constant 31 : index
    %1226 = memref.load %arg2[%c31_741] : memref<81xf32, #tpu.memory_space<smem>>
    %1227 = vector.broadcast %1226 : f32 to vector<8x8xf32>
    %1228 = arith.mulf %1227, %1225 : vector<8x8xf32>
    %1229 = arith.addf %1223, %1228 : vector<8x8xf32>
    %c0_742 = arith.constant 0 : index
    %c1_743 = arith.constant 1 : index
    %c2_744 = arith.constant 2 : index
    %1230 = vector.load %arg6[%c0_742, %c1_743, %c2_744] : memref<6x10x10xf32, #tpu.memory_space<vmem>>, vector<1x8x8xf32>
    %1231 = vector.shape_cast %1230 : vector<1x8x8xf32> to vector<8x8xf32>
    %c32_745 = arith.constant 32 : index
    %1232 = memref.load %arg2[%c32_745] : memref<81xf32, #tpu.memory_space<smem>>
    %1233 = vector.broadcast %1232 : f32 to vector<8x8xf32>
    %1234 = arith.mulf %1233, %1231 : vector<8x8xf32>
    %1235 = arith.addf %1229, %1234 : vector<8x8xf32>
    %c0_746 = arith.constant 0 : index
    %c2_747 = arith.constant 2 : index
    %c0_748 = arith.constant 0 : index
    %1236 = vector.load %arg6[%c0_746, %c2_747, %c0_748] : memref<6x10x10xf32, #tpu.memory_space<vmem>>, vector<1x8x8xf32>
    %1237 = vector.shape_cast %1236 : vector<1x8x8xf32> to vector<8x8xf32>
    %c33_749 = arith.constant 33 : index
    %1238 = memref.load %arg2[%c33_749] : memref<81xf32, #tpu.memory_space<smem>>
    %1239 = vector.broadcast %1238 : f32 to vector<8x8xf32>
    %1240 = arith.mulf %1239, %1237 : vector<8x8xf32>
    %1241 = arith.addf %1235, %1240 : vector<8x8xf32>
    %c0_750 = arith.constant 0 : index
    %c2_751 = arith.constant 2 : index
    %c1_752 = arith.constant 1 : index
    %1242 = vector.load %arg6[%c0_750, %c2_751, %c1_752] : memref<6x10x10xf32, #tpu.memory_space<vmem>>, vector<1x8x8xf32>
    %1243 = vector.shape_cast %1242 : vector<1x8x8xf32> to vector<8x8xf32>
    %c34_753 = arith.constant 34 : index
    %1244 = memref.load %arg2[%c34_753] : memref<81xf32, #tpu.memory_space<smem>>
    %1245 = vector.broadcast %1244 : f32 to vector<8x8xf32>
    %1246 = arith.mulf %1245, %1243 : vector<8x8xf32>
    %1247 = arith.addf %1241, %1246 : vector<8x8xf32>
    %c0_754 = arith.constant 0 : index
    %c2_755 = arith.constant 2 : index
    %c2_756 = arith.constant 2 : index
    %1248 = vector.load %arg6[%c0_754, %c2_755, %c2_756] : memref<6x10x10xf32, #tpu.memory_space<vmem>>, vector<1x8x8xf32>
    %1249 = vector.shape_cast %1248 : vector<1x8x8xf32> to vector<8x8xf32>
    %c35_757 = arith.constant 35 : index
    %1250 = memref.load %arg2[%c35_757] : memref<81xf32, #tpu.memory_space<smem>>
    %1251 = vector.broadcast %1250 : f32 to vector<8x8xf32>
    %1252 = arith.mulf %1251, %1249 : vector<8x8xf32>
    %1253 = arith.addf %1247, %1252 : vector<8x8xf32>
    %c1_758 = arith.constant 1 : index
    %c0_759 = arith.constant 0 : index
    %c0_760 = arith.constant 0 : index
    %1254 = vector.load %arg6[%c1_758, %c0_759, %c0_760] : memref<6x10x10xf32, #tpu.memory_space<vmem>>, vector<1x8x8xf32>
    %1255 = vector.shape_cast %1254 : vector<1x8x8xf32> to vector<8x8xf32>
    %c36_761 = arith.constant 36 : index
    %1256 = memref.load %arg2[%c36_761] : memref<81xf32, #tpu.memory_space<smem>>
    %1257 = vector.broadcast %1256 : f32 to vector<8x8xf32>
    %1258 = arith.mulf %1257, %1255 : vector<8x8xf32>
    %1259 = arith.addf %1253, %1258 : vector<8x8xf32>
    %c1_762 = arith.constant 1 : index
    %c0_763 = arith.constant 0 : index
    %c1_764 = arith.constant 1 : index
    %1260 = vector.load %arg6[%c1_762, %c0_763, %c1_764] : memref<6x10x10xf32, #tpu.memory_space<vmem>>, vector<1x8x8xf32>
    %1261 = vector.shape_cast %1260 : vector<1x8x8xf32> to vector<8x8xf32>
    %c37_765 = arith.constant 37 : index
    %1262 = memref.load %arg2[%c37_765] : memref<81xf32, #tpu.memory_space<smem>>
    %1263 = vector.broadcast %1262 : f32 to vector<8x8xf32>
    %1264 = arith.mulf %1263, %1261 : vector<8x8xf32>
    %1265 = arith.addf %1259, %1264 : vector<8x8xf32>
    %c1_766 = arith.constant 1 : index
    %c0_767 = arith.constant 0 : index
    %c2_768 = arith.constant 2 : index
    %1266 = vector.load %arg6[%c1_766, %c0_767, %c2_768] : memref<6x10x10xf32, #tpu.memory_space<vmem>>, vector<1x8x8xf32>
    %1267 = vector.shape_cast %1266 : vector<1x8x8xf32> to vector<8x8xf32>
    %c38_769 = arith.constant 38 : index
    %1268 = memref.load %arg2[%c38_769] : memref<81xf32, #tpu.memory_space<smem>>
    %1269 = vector.broadcast %1268 : f32 to vector<8x8xf32>
    %1270 = arith.mulf %1269, %1267 : vector<8x8xf32>
    %1271 = arith.addf %1265, %1270 : vector<8x8xf32>
    %c1_770 = arith.constant 1 : index
    %c1_771 = arith.constant 1 : index
    %c0_772 = arith.constant 0 : index
    %1272 = vector.load %arg6[%c1_770, %c1_771, %c0_772] : memref<6x10x10xf32, #tpu.memory_space<vmem>>, vector<1x8x8xf32>
    %1273 = vector.shape_cast %1272 : vector<1x8x8xf32> to vector<8x8xf32>
    %c39_773 = arith.constant 39 : index
    %1274 = memref.load %arg2[%c39_773] : memref<81xf32, #tpu.memory_space<smem>>
    %1275 = vector.broadcast %1274 : f32 to vector<8x8xf32>
    %1276 = arith.mulf %1275, %1273 : vector<8x8xf32>
    %1277 = arith.addf %1271, %1276 : vector<8x8xf32>
    %c1_774 = arith.constant 1 : index
    %c1_775 = arith.constant 1 : index
    %c1_776 = arith.constant 1 : index
    %1278 = vector.load %arg6[%c1_774, %c1_775, %c1_776] : memref<6x10x10xf32, #tpu.memory_space<vmem>>, vector<1x8x8xf32>
    %1279 = vector.shape_cast %1278 : vector<1x8x8xf32> to vector<8x8xf32>
    %c40_777 = arith.constant 40 : index
    %1280 = memref.load %arg2[%c40_777] : memref<81xf32, #tpu.memory_space<smem>>
    %1281 = vector.broadcast %1280 : f32 to vector<8x8xf32>
    %1282 = arith.mulf %1281, %1279 : vector<8x8xf32>
    %1283 = arith.addf %1277, %1282 : vector<8x8xf32>
    %c1_778 = arith.constant 1 : index
    %c1_779 = arith.constant 1 : index
    %c2_780 = arith.constant 2 : index
    %1284 = vector.load %arg6[%c1_778, %c1_779, %c2_780] : memref<6x10x10xf32, #tpu.memory_space<vmem>>, vector<1x8x8xf32>
    %1285 = vector.shape_cast %1284 : vector<1x8x8xf32> to vector<8x8xf32>
    %c41_781 = arith.constant 41 : index
    %1286 = memref.load %arg2[%c41_781] : memref<81xf32, #tpu.memory_space<smem>>
    %1287 = vector.broadcast %1286 : f32 to vector<8x8xf32>
    %1288 = arith.mulf %1287, %1285 : vector<8x8xf32>
    %1289 = arith.addf %1283, %1288 : vector<8x8xf32>
    %c1_782 = arith.constant 1 : index
    %c2_783 = arith.constant 2 : index
    %c0_784 = arith.constant 0 : index
    %1290 = vector.load %arg6[%c1_782, %c2_783, %c0_784] : memref<6x10x10xf32, #tpu.memory_space<vmem>>, vector<1x8x8xf32>
    %1291 = vector.shape_cast %1290 : vector<1x8x8xf32> to vector<8x8xf32>
    %c42_785 = arith.constant 42 : index
    %1292 = memref.load %arg2[%c42_785] : memref<81xf32, #tpu.memory_space<smem>>
    %1293 = vector.broadcast %1292 : f32 to vector<8x8xf32>
    %1294 = arith.mulf %1293, %1291 : vector<8x8xf32>
    %1295 = arith.addf %1289, %1294 : vector<8x8xf32>
    %c1_786 = arith.constant 1 : index
    %c2_787 = arith.constant 2 : index
    %c1_788 = arith.constant 1 : index
    %1296 = vector.load %arg6[%c1_786, %c2_787, %c1_788] : memref<6x10x10xf32, #tpu.memory_space<vmem>>, vector<1x8x8xf32>
    %1297 = vector.shape_cast %1296 : vector<1x8x8xf32> to vector<8x8xf32>
    %c43_789 = arith.constant 43 : index
    %1298 = memref.load %arg2[%c43_789] : memref<81xf32, #tpu.memory_space<smem>>
    %1299 = vector.broadcast %1298 : f32 to vector<8x8xf32>
    %1300 = arith.mulf %1299, %1297 : vector<8x8xf32>
    %1301 = arith.addf %1295, %1300 : vector<8x8xf32>
    %c1_790 = arith.constant 1 : index
    %c2_791 = arith.constant 2 : index
    %c2_792 = arith.constant 2 : index
    %1302 = vector.load %arg6[%c1_790, %c2_791, %c2_792] : memref<6x10x10xf32, #tpu.memory_space<vmem>>, vector<1x8x8xf32>
    %1303 = vector.shape_cast %1302 : vector<1x8x8xf32> to vector<8x8xf32>
    %c44_793 = arith.constant 44 : index
    %1304 = memref.load %arg2[%c44_793] : memref<81xf32, #tpu.memory_space<smem>>
    %1305 = vector.broadcast %1304 : f32 to vector<8x8xf32>
    %1306 = arith.mulf %1305, %1303 : vector<8x8xf32>
    %1307 = arith.addf %1301, %1306 : vector<8x8xf32>
    %c2_794 = arith.constant 2 : index
    %c0_795 = arith.constant 0 : index
    %c0_796 = arith.constant 0 : index
    %1308 = vector.load %arg6[%c2_794, %c0_795, %c0_796] : memref<6x10x10xf32, #tpu.memory_space<vmem>>, vector<1x8x8xf32>
    %1309 = vector.shape_cast %1308 : vector<1x8x8xf32> to vector<8x8xf32>
    %c45_797 = arith.constant 45 : index
    %1310 = memref.load %arg2[%c45_797] : memref<81xf32, #tpu.memory_space<smem>>
    %1311 = vector.broadcast %1310 : f32 to vector<8x8xf32>
    %1312 = arith.mulf %1311, %1309 : vector<8x8xf32>
    %1313 = arith.addf %1307, %1312 : vector<8x8xf32>
    %c2_798 = arith.constant 2 : index
    %c0_799 = arith.constant 0 : index
    %c1_800 = arith.constant 1 : index
    %1314 = vector.load %arg6[%c2_798, %c0_799, %c1_800] : memref<6x10x10xf32, #tpu.memory_space<vmem>>, vector<1x8x8xf32>
    %1315 = vector.shape_cast %1314 : vector<1x8x8xf32> to vector<8x8xf32>
    %c46_801 = arith.constant 46 : index
    %1316 = memref.load %arg2[%c46_801] : memref<81xf32, #tpu.memory_space<smem>>
    %1317 = vector.broadcast %1316 : f32 to vector<8x8xf32>
    %1318 = arith.mulf %1317, %1315 : vector<8x8xf32>
    %1319 = arith.addf %1313, %1318 : vector<8x8xf32>
    %c2_802 = arith.constant 2 : index
    %c0_803 = arith.constant 0 : index
    %c2_804 = arith.constant 2 : index
    %1320 = vector.load %arg6[%c2_802, %c0_803, %c2_804] : memref<6x10x10xf32, #tpu.memory_space<vmem>>, vector<1x8x8xf32>
    %1321 = vector.shape_cast %1320 : vector<1x8x8xf32> to vector<8x8xf32>
    %c47_805 = arith.constant 47 : index
    %1322 = memref.load %arg2[%c47_805] : memref<81xf32, #tpu.memory_space<smem>>
    %1323 = vector.broadcast %1322 : f32 to vector<8x8xf32>
    %1324 = arith.mulf %1323, %1321 : vector<8x8xf32>
    %1325 = arith.addf %1319, %1324 : vector<8x8xf32>
    %c2_806 = arith.constant 2 : index
    %c1_807 = arith.constant 1 : index
    %c0_808 = arith.constant 0 : index
    %1326 = vector.load %arg6[%c2_806, %c1_807, %c0_808] : memref<6x10x10xf32, #tpu.memory_space<vmem>>, vector<1x8x8xf32>
    %1327 = vector.shape_cast %1326 : vector<1x8x8xf32> to vector<8x8xf32>
    %c48_809 = arith.constant 48 : index
    %1328 = memref.load %arg2[%c48_809] : memref<81xf32, #tpu.memory_space<smem>>
    %1329 = vector.broadcast %1328 : f32 to vector<8x8xf32>
    %1330 = arith.mulf %1329, %1327 : vector<8x8xf32>
    %1331 = arith.addf %1325, %1330 : vector<8x8xf32>
    %c2_810 = arith.constant 2 : index
    %c1_811 = arith.constant 1 : index
    %c1_812 = arith.constant 1 : index
    %1332 = vector.load %arg6[%c2_810, %c1_811, %c1_812] : memref<6x10x10xf32, #tpu.memory_space<vmem>>, vector<1x8x8xf32>
    %1333 = vector.shape_cast %1332 : vector<1x8x8xf32> to vector<8x8xf32>
    %c49_813 = arith.constant 49 : index
    %1334 = memref.load %arg2[%c49_813] : memref<81xf32, #tpu.memory_space<smem>>
    %1335 = vector.broadcast %1334 : f32 to vector<8x8xf32>
    %1336 = arith.mulf %1335, %1333 : vector<8x8xf32>
    %1337 = arith.addf %1331, %1336 : vector<8x8xf32>
    %c2_814 = arith.constant 2 : index
    %c1_815 = arith.constant 1 : index
    %c2_816 = arith.constant 2 : index
    %1338 = vector.load %arg6[%c2_814, %c1_815, %c2_816] : memref<6x10x10xf32, #tpu.memory_space<vmem>>, vector<1x8x8xf32>
    %1339 = vector.shape_cast %1338 : vector<1x8x8xf32> to vector<8x8xf32>
    %c50_817 = arith.constant 50 : index
    %1340 = memref.load %arg2[%c50_817] : memref<81xf32, #tpu.memory_space<smem>>
    %1341 = vector.broadcast %1340 : f32 to vector<8x8xf32>
    %1342 = arith.mulf %1341, %1339 : vector<8x8xf32>
    %1343 = arith.addf %1337, %1342 : vector<8x8xf32>
    %c2_818 = arith.constant 2 : index
    %c2_819 = arith.constant 2 : index
    %c0_820 = arith.constant 0 : index
    %1344 = vector.load %arg6[%c2_818, %c2_819, %c0_820] : memref<6x10x10xf32, #tpu.memory_space<vmem>>, vector<1x8x8xf32>
    %1345 = vector.shape_cast %1344 : vector<1x8x8xf32> to vector<8x8xf32>
    %c51_821 = arith.constant 51 : index
    %1346 = memref.load %arg2[%c51_821] : memref<81xf32, #tpu.memory_space<smem>>
    %1347 = vector.broadcast %1346 : f32 to vector<8x8xf32>
    %1348 = arith.mulf %1347, %1345 : vector<8x8xf32>
    %1349 = arith.addf %1343, %1348 : vector<8x8xf32>
    %c2_822 = arith.constant 2 : index
    %c2_823 = arith.constant 2 : index
    %c1_824 = arith.constant 1 : index
    %1350 = vector.load %arg6[%c2_822, %c2_823, %c1_824] : memref<6x10x10xf32, #tpu.memory_space<vmem>>, vector<1x8x8xf32>
    %1351 = vector.shape_cast %1350 : vector<1x8x8xf32> to vector<8x8xf32>
    %c52_825 = arith.constant 52 : index
    %1352 = memref.load %arg2[%c52_825] : memref<81xf32, #tpu.memory_space<smem>>
    %1353 = vector.broadcast %1352 : f32 to vector<8x8xf32>
    %1354 = arith.mulf %1353, %1351 : vector<8x8xf32>
    %1355 = arith.addf %1349, %1354 : vector<8x8xf32>
    %c2_826 = arith.constant 2 : index
    %c2_827 = arith.constant 2 : index
    %c2_828 = arith.constant 2 : index
    %1356 = vector.load %arg6[%c2_826, %c2_827, %c2_828] : memref<6x10x10xf32, #tpu.memory_space<vmem>>, vector<1x8x8xf32>
    %1357 = vector.shape_cast %1356 : vector<1x8x8xf32> to vector<8x8xf32>
    %c53_829 = arith.constant 53 : index
    %1358 = memref.load %arg2[%c53_829] : memref<81xf32, #tpu.memory_space<smem>>
    %1359 = vector.broadcast %1358 : f32 to vector<8x8xf32>
    %1360 = arith.mulf %1359, %1357 : vector<8x8xf32>
    %1361 = arith.addf %1355, %1360 : vector<8x8xf32>
    %c1_830 = arith.constant 1 : index
    %1362 = memref.load %arg3[%c1_830] : memref<3xf32, #tpu.memory_space<smem>>
    %1363 = vector.broadcast %1362 : f32 to vector<8x8xf32>
    %1364 = arith.addf %1361, %1363 : vector<8x8xf32>
    %cst_831 = arith.constant 0.000000e+00 : f32
    %1365 = vector.broadcast %cst_831 : f32 to vector<8x8xf32>
    %1366 = arith.maximumf %1364, %1365 : vector<8x8xf32>
    %c0_832 = arith.constant 0 : index
    %c1_833 = arith.constant 1 : index
    %c0_834 = arith.constant 0 : index
    %c0_835 = arith.constant 0 : index
    %1367 = vector.load %arg5[%c0_832, %c1_833, %c0_834, %c0_835] : memref<2x3x8x8xf32, #tpu.memory_space<vmem>>, vector<1x1x8x8xf32>
    %1368 = vector.shape_cast %1367 : vector<1x1x8x8xf32> to vector<8x8xf32>
    %1369 = vector.shape_cast %1366 : vector<8x8xf32> to vector<1x1x8x8xf32>
    tpu.vector_store %arg5[%c0_832, %c1_833, %c0_834, %c0_835], %1369 {strides = array<i32>} : memref<2x3x8x8xf32, #tpu.memory_space<vmem>>, vector<1x1x8x8xf32>,
    %cst_836 = arith.constant 0.000000e+00 : f32
    %1370 = vector.broadcast %cst_836 : f32 to vector<8x8xf32>
    %c0_837 = arith.constant 0 : index
    %c0_838 = arith.constant 0 : index
    %c0_839 = arith.constant 0 : index
    %1371 = vector.load %arg6[%c0_837, %c0_838, %c0_839] : memref<6x10x10xf32, #tpu.memory_space<vmem>>, vector<1x8x8xf32>
    %1372 = vector.shape_cast %1371 : vector<1x8x8xf32> to vector<8x8xf32>
    %c54_840 = arith.constant 54 : index
    %1373 = memref.load %arg2[%c54_840] : memref<81xf32, #tpu.memory_space<smem>>
    %1374 = vector.broadcast %1373 : f32 to vector<8x8xf32>
    %1375 = arith.mulf %1374, %1372 : vector<8x8xf32>
    %1376 = arith.addf %1370, %1375 : vector<8x8xf32>
    %c0_841 = arith.constant 0 : index
    %c0_842 = arith.constant 0 : index
    %c1_843 = arith.constant 1 : index
    %1377 = vector.load %arg6[%c0_841, %c0_842, %c1_843] : memref<6x10x10xf32, #tpu.memory_space<vmem>>, vector<1x8x8xf32>
    %1378 = vector.shape_cast %1377 : vector<1x8x8xf32> to vector<8x8xf32>
    %c55_844 = arith.constant 55 : index
    %1379 = memref.load %arg2[%c55_844] : memref<81xf32, #tpu.memory_space<smem>>
    %1380 = vector.broadcast %1379 : f32 to vector<8x8xf32>
    %1381 = arith.mulf %1380, %1378 : vector<8x8xf32>
    %1382 = arith.addf %1376, %1381 : vector<8x8xf32>
    %c0_845 = arith.constant 0 : index
    %c0_846 = arith.constant 0 : index
    %c2_847 = arith.constant 2 : index
    %1383 = vector.load %arg6[%c0_845, %c0_846, %c2_847] : memref<6x10x10xf32, #tpu.memory_space<vmem>>, vector<1x8x8xf32>
    %1384 = vector.shape_cast %1383 : vector<1x8x8xf32> to vector<8x8xf32>
    %c56_848 = arith.constant 56 : index
    %1385 = memref.load %arg2[%c56_848] : memref<81xf32, #tpu.memory_space<smem>>
    %1386 = vector.broadcast %1385 : f32 to vector<8x8xf32>
    %1387 = arith.mulf %1386, %1384 : vector<8x8xf32>
    %1388 = arith.addf %1382, %1387 : vector<8x8xf32>
    %c0_849 = arith.constant 0 : index
    %c1_850 = arith.constant 1 : index
    %c0_851 = arith.constant 0 : index
    %1389 = vector.load %arg6[%c0_849, %c1_850, %c0_851] : memref<6x10x10xf32, #tpu.memory_space<vmem>>, vector<1x8x8xf32>
    %1390 = vector.shape_cast %1389 : vector<1x8x8xf32> to vector<8x8xf32>
    %c57_852 = arith.constant 57 : index
    %1391 = memref.load %arg2[%c57_852] : memref<81xf32, #tpu.memory_space<smem>>
    %1392 = vector.broadcast %1391 : f32 to vector<8x8xf32>
    %1393 = arith.mulf %1392, %1390 : vector<8x8xf32>
    %1394 = arith.addf %1388, %1393 : vector<8x8xf32>
    %c0_853 = arith.constant 0 : index
    %c1_854 = arith.constant 1 : index
    %c1_855 = arith.constant 1 : index
    %1395 = vector.load %arg6[%c0_853, %c1_854, %c1_855] : memref<6x10x10xf32, #tpu.memory_space<vmem>>, vector<1x8x8xf32>
    %1396 = vector.shape_cast %1395 : vector<1x8x8xf32> to vector<8x8xf32>
    %c58_856 = arith.constant 58 : index
    %1397 = memref.load %arg2[%c58_856] : memref<81xf32, #tpu.memory_space<smem>>
    %1398 = vector.broadcast %1397 : f32 to vector<8x8xf32>
    %1399 = arith.mulf %1398, %1396 : vector<8x8xf32>
    %1400 = arith.addf %1394, %1399 : vector<8x8xf32>
    %c0_857 = arith.constant 0 : index
    %c1_858 = arith.constant 1 : index
    %c2_859 = arith.constant 2 : index
    %1401 = vector.load %arg6[%c0_857, %c1_858, %c2_859] : memref<6x10x10xf32, #tpu.memory_space<vmem>>, vector<1x8x8xf32>
    %1402 = vector.shape_cast %1401 : vector<1x8x8xf32> to vector<8x8xf32>
    %c59_860 = arith.constant 59 : index
    %1403 = memref.load %arg2[%c59_860] : memref<81xf32, #tpu.memory_space<smem>>
    %1404 = vector.broadcast %1403 : f32 to vector<8x8xf32>
    %1405 = arith.mulf %1404, %1402 : vector<8x8xf32>
    %1406 = arith.addf %1400, %1405 : vector<8x8xf32>
    %c0_861 = arith.constant 0 : index
    %c2_862 = arith.constant 2 : index
    %c0_863 = arith.constant 0 : index
    %1407 = vector.load %arg6[%c0_861, %c2_862, %c0_863] : memref<6x10x10xf32, #tpu.memory_space<vmem>>, vector<1x8x8xf32>
    %1408 = vector.shape_cast %1407 : vector<1x8x8xf32> to vector<8x8xf32>
    %c60_864 = arith.constant 60 : index
    %1409 = memref.load %arg2[%c60_864] : memref<81xf32, #tpu.memory_space<smem>>
    %1410 = vector.broadcast %1409 : f32 to vector<8x8xf32>
    %1411 = arith.mulf %1410, %1408 : vector<8x8xf32>
    %1412 = arith.addf %1406, %1411 : vector<8x8xf32>
    %c0_865 = arith.constant 0 : index
    %c2_866 = arith.constant 2 : index
    %c1_867 = arith.constant 1 : index
    %1413 = vector.load %arg6[%c0_865, %c2_866, %c1_867] : memref<6x10x10xf32, #tpu.memory_space<vmem>>, vector<1x8x8xf32>
    %1414 = vector.shape_cast %1413 : vector<1x8x8xf32> to vector<8x8xf32>
    %c61_868 = arith.constant 61 : index
    %1415 = memref.load %arg2[%c61_868] : memref<81xf32, #tpu.memory_space<smem>>
    %1416 = vector.broadcast %1415 : f32 to vector<8x8xf32>
    %1417 = arith.mulf %1416, %1414 : vector<8x8xf32>
    %1418 = arith.addf %1412, %1417 : vector<8x8xf32>
    %c0_869 = arith.constant 0 : index
    %c2_870 = arith.constant 2 : index
    %c2_871 = arith.constant 2 : index
    %1419 = vector.load %arg6[%c0_869, %c2_870, %c2_871] : memref<6x10x10xf32, #tpu.memory_space<vmem>>, vector<1x8x8xf32>
    %1420 = vector.shape_cast %1419 : vector<1x8x8xf32> to vector<8x8xf32>
    %c62_872 = arith.constant 62 : index
    %1421 = memref.load %arg2[%c62_872] : memref<81xf32, #tpu.memory_space<smem>>
    %1422 = vector.broadcast %1421 : f32 to vector<8x8xf32>
    %1423 = arith.mulf %1422, %1420 : vector<8x8xf32>
    %1424 = arith.addf %1418, %1423 : vector<8x8xf32>
    %c1_873 = arith.constant 1 : index
    %c0_874 = arith.constant 0 : index
    %c0_875 = arith.constant 0 : index
    %1425 = vector.load %arg6[%c1_873, %c0_874, %c0_875] : memref<6x10x10xf32, #tpu.memory_space<vmem>>, vector<1x8x8xf32>
    %1426 = vector.shape_cast %1425 : vector<1x8x8xf32> to vector<8x8xf32>
    %c63_876 = arith.constant 63 : index
    %1427 = memref.load %arg2[%c63_876] : memref<81xf32, #tpu.memory_space<smem>>
    %1428 = vector.broadcast %1427 : f32 to vector<8x8xf32>
    %1429 = arith.mulf %1428, %1426 : vector<8x8xf32>
    %1430 = arith.addf %1424, %1429 : vector<8x8xf32>
    %c1_877 = arith.constant 1 : index
    %c0_878 = arith.constant 0 : index
    %c1_879 = arith.constant 1 : index
    %1431 = vector.load %arg6[%c1_877, %c0_878, %c1_879] : memref<6x10x10xf32, #tpu.memory_space<vmem>>, vector<1x8x8xf32>
    %1432 = vector.shape_cast %1431 : vector<1x8x8xf32> to vector<8x8xf32>
    %c64_880 = arith.constant 64 : index
    %1433 = memref.load %arg2[%c64_880] : memref<81xf32, #tpu.memory_space<smem>>
    %1434 = vector.broadcast %1433 : f32 to vector<8x8xf32>
    %1435 = arith.mulf %1434, %1432 : vector<8x8xf32>
    %1436 = arith.addf %1430, %1435 : vector<8x8xf32>
    %c1_881 = arith.constant 1 : index
    %c0_882 = arith.constant 0 : index
    %c2_883 = arith.constant 2 : index
    %1437 = vector.load %arg6[%c1_881, %c0_882, %c2_883] : memref<6x10x10xf32, #tpu.memory_space<vmem>>, vector<1x8x8xf32>
    %1438 = vector.shape_cast %1437 : vector<1x8x8xf32> to vector<8x8xf32>
    %c65_884 = arith.constant 65 : index
    %1439 = memref.load %arg2[%c65_884] : memref<81xf32, #tpu.memory_space<smem>>
    %1440 = vector.broadcast %1439 : f32 to vector<8x8xf32>
    %1441 = arith.mulf %1440, %1438 : vector<8x8xf32>
    %1442 = arith.addf %1436, %1441 : vector<8x8xf32>
    %c1_885 = arith.constant 1 : index
    %c1_886 = arith.constant 1 : index
    %c0_887 = arith.constant 0 : index
    %1443 = vector.load %arg6[%c1_885, %c1_886, %c0_887] : memref<6x10x10xf32, #tpu.memory_space<vmem>>, vector<1x8x8xf32>
    %1444 = vector.shape_cast %1443 : vector<1x8x8xf32> to vector<8x8xf32>
    %c66_888 = arith.constant 66 : index
    %1445 = memref.load %arg2[%c66_888] : memref<81xf32, #tpu.memory_space<smem>>
    %1446 = vector.broadcast %1445 : f32 to vector<8x8xf32>
    %1447 = arith.mulf %1446, %1444 : vector<8x8xf32>
    %1448 = arith.addf %1442, %1447 : vector<8x8xf32>
    %c1_889 = arith.constant 1 : index
    %c1_890 = arith.constant 1 : index
    %c1_891 = arith.constant 1 : index
    %1449 = vector.load %arg6[%c1_889, %c1_890, %c1_891] : memref<6x10x10xf32, #tpu.memory_space<vmem>>, vector<1x8x8xf32>
    %1450 = vector.shape_cast %1449 : vector<1x8x8xf32> to vector<8x8xf32>
    %c67_892 = arith.constant 67 : index
    %1451 = memref.load %arg2[%c67_892] : memref<81xf32, #tpu.memory_space<smem>>
    %1452 = vector.broadcast %1451 : f32 to vector<8x8xf32>
    %1453 = arith.mulf %1452, %1450 : vector<8x8xf32>
    %1454 = arith.addf %1448, %1453 : vector<8x8xf32>
    %c1_893 = arith.constant 1 : index
    %c1_894 = arith.constant 1 : index
    %c2_895 = arith.constant 2 : index
    %1455 = vector.load %arg6[%c1_893, %c1_894, %c2_895] : memref<6x10x10xf32, #tpu.memory_space<vmem>>, vector<1x8x8xf32>
    %1456 = vector.shape_cast %1455 : vector<1x8x8xf32> to vector<8x8xf32>
    %c68_896 = arith.constant 68 : index
    %1457 = memref.load %arg2[%c68_896] : memref<81xf32, #tpu.memory_space<smem>>
    %1458 = vector.broadcast %1457 : f32 to vector<8x8xf32>
    %1459 = arith.mulf %1458, %1456 : vector<8x8xf32>
    %1460 = arith.addf %1454, %1459 : vector<8x8xf32>
    %c1_897 = arith.constant 1 : index
    %c2_898 = arith.constant 2 : index
    %c0_899 = arith.constant 0 : index
    %1461 = vector.load %arg6[%c1_897, %c2_898, %c0_899] : memref<6x10x10xf32, #tpu.memory_space<vmem>>, vector<1x8x8xf32>
    %1462 = vector.shape_cast %1461 : vector<1x8x8xf32> to vector<8x8xf32>
    %c69_900 = arith.constant 69 : index
    %1463 = memref.load %arg2[%c69_900] : memref<81xf32, #tpu.memory_space<smem>>
    %1464 = vector.broadcast %1463 : f32 to vector<8x8xf32>
    %1465 = arith.mulf %1464, %1462 : vector<8x8xf32>
    %1466 = arith.addf %1460, %1465 : vector<8x8xf32>
    %c1_901 = arith.constant 1 : index
    %c2_902 = arith.constant 2 : index
    %c1_903 = arith.constant 1 : index
    %1467 = vector.load %arg6[%c1_901, %c2_902, %c1_903] : memref<6x10x10xf32, #tpu.memory_space<vmem>>, vector<1x8x8xf32>
    %1468 = vector.shape_cast %1467 : vector<1x8x8xf32> to vector<8x8xf32>
    %c70_904 = arith.constant 70 : index
    %1469 = memref.load %arg2[%c70_904] : memref<81xf32, #tpu.memory_space<smem>>
    %1470 = vector.broadcast %1469 : f32 to vector<8x8xf32>
    %1471 = arith.mulf %1470, %1468 : vector<8x8xf32>
    %1472 = arith.addf %1466, %1471 : vector<8x8xf32>
    %c1_905 = arith.constant 1 : index
    %c2_906 = arith.constant 2 : index
    %c2_907 = arith.constant 2 : index
    %1473 = vector.load %arg6[%c1_905, %c2_906, %c2_907] : memref<6x10x10xf32, #tpu.memory_space<vmem>>, vector<1x8x8xf32>
    %1474 = vector.shape_cast %1473 : vector<1x8x8xf32> to vector<8x8xf32>
    %c71_908 = arith.constant 71 : index
    %1475 = memref.load %arg2[%c71_908] : memref<81xf32, #tpu.memory_space<smem>>
    %1476 = vector.broadcast %1475 : f32 to vector<8x8xf32>
    %1477 = arith.mulf %1476, %1474 : vector<8x8xf32>
    %1478 = arith.addf %1472, %1477 : vector<8x8xf32>
    %c2_909 = arith.constant 2 : index
    %c0_910 = arith.constant 0 : index
    %c0_911 = arith.constant 0 : index
    %1479 = vector.load %arg6[%c2_909, %c0_910, %c0_911] : memref<6x10x10xf32, #tpu.memory_space<vmem>>, vector<1x8x8xf32>
    %1480 = vector.shape_cast %1479 : vector<1x8x8xf32> to vector<8x8xf32>
    %c72_912 = arith.constant 72 : index
    %1481 = memref.load %arg2[%c72_912] : memref<81xf32, #tpu.memory_space<smem>>
    %1482 = vector.broadcast %1481 : f32 to vector<8x8xf32>
    %1483 = arith.mulf %1482, %1480 : vector<8x8xf32>
    %1484 = arith.addf %1478, %1483 : vector<8x8xf32>
    %c2_913 = arith.constant 2 : index
    %c0_914 = arith.constant 0 : index
    %c1_915 = arith.constant 1 : index
    %1485 = vector.load %arg6[%c2_913, %c0_914, %c1_915] : memref<6x10x10xf32, #tpu.memory_space<vmem>>, vector<1x8x8xf32>
    %1486 = vector.shape_cast %1485 : vector<1x8x8xf32> to vector<8x8xf32>
    %c73_916 = arith.constant 73 : index
    %1487 = memref.load %arg2[%c73_916] : memref<81xf32, #tpu.memory_space<smem>>
    %1488 = vector.broadcast %1487 : f32 to vector<8x8xf32>
    %1489 = arith.mulf %1488, %1486 : vector<8x8xf32>
    %1490 = arith.addf %1484, %1489 : vector<8x8xf32>
    %c2_917 = arith.constant 2 : index
    %c0_918 = arith.constant 0 : index
    %c2_919 = arith.constant 2 : index
    %1491 = vector.load %arg6[%c2_917, %c0_918, %c2_919] : memref<6x10x10xf32, #tpu.memory_space<vmem>>, vector<1x8x8xf32>
    %1492 = vector.shape_cast %1491 : vector<1x8x8xf32> to vector<8x8xf32>
    %c74_920 = arith.constant 74 : index
    %1493 = memref.load %arg2[%c74_920] : memref<81xf32, #tpu.memory_space<smem>>
    %1494 = vector.broadcast %1493 : f32 to vector<8x8xf32>
    %1495 = arith.mulf %1494, %1492 : vector<8x8xf32>
    %1496 = arith.addf %1490, %1495 : vector<8x8xf32>
    %c2_921 = arith.constant 2 : index
    %c1_922 = arith.constant 1 : index
    %c0_923 = arith.constant 0 : index
    %1497 = vector.load %arg6[%c2_921, %c1_922, %c0_923] : memref<6x10x10xf32, #tpu.memory_space<vmem>>, vector<1x8x8xf32>
    %1498 = vector.shape_cast %1497 : vector<1x8x8xf32> to vector<8x8xf32>
    %c75_924 = arith.constant 75 : index
    %1499 = memref.load %arg2[%c75_924] : memref<81xf32, #tpu.memory_space<smem>>
    %1500 = vector.broadcast %1499 : f32 to vector<8x8xf32>
    %1501 = arith.mulf %1500, %1498 : vector<8x8xf32>
    %1502 = arith.addf %1496, %1501 : vector<8x8xf32>
    %c2_925 = arith.constant 2 : index
    %c1_926 = arith.constant 1 : index
    %c1_927 = arith.constant 1 : index
    %1503 = vector.load %arg6[%c2_925, %c1_926, %c1_927] : memref<6x10x10xf32, #tpu.memory_space<vmem>>, vector<1x8x8xf32>
    %1504 = vector.shape_cast %1503 : vector<1x8x8xf32> to vector<8x8xf32>
    %c76_928 = arith.constant 76 : index
    %1505 = memref.load %arg2[%c76_928] : memref<81xf32, #tpu.memory_space<smem>>
    %1506 = vector.broadcast %1505 : f32 to vector<8x8xf32>
    %1507 = arith.mulf %1506, %1504 : vector<8x8xf32>
    %1508 = arith.addf %1502, %1507 : vector<8x8xf32>
    %c2_929 = arith.constant 2 : index
    %c1_930 = arith.constant 1 : index
    %c2_931 = arith.constant 2 : index
    %1509 = vector.load %arg6[%c2_929, %c1_930, %c2_931] : memref<6x10x10xf32, #tpu.memory_space<vmem>>, vector<1x8x8xf32>
    %1510 = vector.shape_cast %1509 : vector<1x8x8xf32> to vector<8x8xf32>
    %c77_932 = arith.constant 77 : index
    %1511 = memref.load %arg2[%c77_932] : memref<81xf32, #tpu.memory_space<smem>>
    %1512 = vector.broadcast %1511 : f32 to vector<8x8xf32>
    %1513 = arith.mulf %1512, %1510 : vector<8x8xf32>
    %1514 = arith.addf %1508, %1513 : vector<8x8xf32>
    %c2_933 = arith.constant 2 : index
    %c2_934 = arith.constant 2 : index
    %c0_935 = arith.constant 0 : index
    %1515 = vector.load %arg6[%c2_933, %c2_934, %c0_935] : memref<6x10x10xf32, #tpu.memory_space<vmem>>, vector<1x8x8xf32>
    %1516 = vector.shape_cast %1515 : vector<1x8x8xf32> to vector<8x8xf32>
    %c78_936 = arith.constant 78 : index
    %1517 = memref.load %arg2[%c78_936] : memref<81xf32, #tpu.memory_space<smem>>
    %1518 = vector.broadcast %1517 : f32 to vector<8x8xf32>
    %1519 = arith.mulf %1518, %1516 : vector<8x8xf32>
    %1520 = arith.addf %1514, %1519 : vector<8x8xf32>
    %c2_937 = arith.constant 2 : index
    %c2_938 = arith.constant 2 : index
    %c1_939 = arith.constant 1 : index
    %1521 = vector.load %arg6[%c2_937, %c2_938, %c1_939] : memref<6x10x10xf32, #tpu.memory_space<vmem>>, vector<1x8x8xf32>
    %1522 = vector.shape_cast %1521 : vector<1x8x8xf32> to vector<8x8xf32>
    %c79_940 = arith.constant 79 : index
    %1523 = memref.load %arg2[%c79_940] : memref<81xf32, #tpu.memory_space<smem>>
    %1524 = vector.broadcast %1523 : f32 to vector<8x8xf32>
    %1525 = arith.mulf %1524, %1522 : vector<8x8xf32>
    %1526 = arith.addf %1520, %1525 : vector<8x8xf32>
    %c2_941 = arith.constant 2 : index
    %c2_942 = arith.constant 2 : index
    %c2_943 = arith.constant 2 : index
    %1527 = vector.load %arg6[%c2_941, %c2_942, %c2_943] : memref<6x10x10xf32, #tpu.memory_space<vmem>>, vector<1x8x8xf32>
    %1528 = vector.shape_cast %1527 : vector<1x8x8xf32> to vector<8x8xf32>
    %c80_944 = arith.constant 80 : index
    %1529 = memref.load %arg2[%c80_944] : memref<81xf32, #tpu.memory_space<smem>>
    %1530 = vector.broadcast %1529 : f32 to vector<8x8xf32>
    %1531 = arith.mulf %1530, %1528 : vector<8x8xf32>
    %1532 = arith.addf %1526, %1531 : vector<8x8xf32>
    %c2_945 = arith.constant 2 : index
    %1533 = memref.load %arg3[%c2_945] : memref<3xf32, #tpu.memory_space<smem>>
    %1534 = vector.broadcast %1533 : f32 to vector<8x8xf32>
    %1535 = arith.addf %1532, %1534 : vector<8x8xf32>
    %cst_946 = arith.constant 0.000000e+00 : f32
    %1536 = vector.broadcast %cst_946 : f32 to vector<8x8xf32>
    %1537 = arith.maximumf %1535, %1536 : vector<8x8xf32>
    %c0_947 = arith.constant 0 : index
    %c2_948 = arith.constant 2 : index
    %c0_949 = arith.constant 0 : index
    %c0_950 = arith.constant 0 : index
    %1538 = vector.load %arg5[%c0_947, %c2_948, %c0_949, %c0_950] : memref<2x3x8x8xf32, #tpu.memory_space<vmem>>, vector<1x1x8x8xf32>
    %1539 = vector.shape_cast %1538 : vector<1x1x8x8xf32> to vector<8x8xf32>
    %1540 = vector.shape_cast %1537 : vector<8x8xf32> to vector<1x1x8x8xf32>
    tpu.vector_store %arg5[%c0_947, %c2_948, %c0_949, %c0_950], %1540 {strides = array<i32>} : memref<2x3x8x8xf32, #tpu.memory_space<vmem>>, vector<1x1x8x8xf32>,
    %cst_951 = arith.constant 0.000000e+00 : f32
    %1541 = vector.broadcast %cst_951 : f32 to vector<8x8xf32>
    %c3_952 = arith.constant 3 : index
    %c0_953 = arith.constant 0 : index
    %c0_954 = arith.constant 0 : index
    %1542 = vector.load %arg6[%c3_952, %c0_953, %c0_954] : memref<6x10x10xf32, #tpu.memory_space<vmem>>, vector<1x8x8xf32>
    %1543 = vector.shape_cast %1542 : vector<1x8x8xf32> to vector<8x8xf32>
    %c0_955 = arith.constant 0 : index
    %1544 = memref.load %arg2[%c0_955] : memref<81xf32, #tpu.memory_space<smem>>
    %1545 = vector.broadcast %1544 : f32 to vector<8x8xf32>
    %1546 = arith.mulf %1545, %1543 : vector<8x8xf32>
    %1547 = arith.addf %1541, %1546 : vector<8x8xf32>
    %c3_956 = arith.constant 3 : index
    %c0_957 = arith.constant 0 : index
    %c1_958 = arith.constant 1 : index
    %1548 = vector.load %arg6[%c3_956, %c0_957, %c1_958] : memref<6x10x10xf32, #tpu.memory_space<vmem>>, vector<1x8x8xf32>
    %1549 = vector.shape_cast %1548 : vector<1x8x8xf32> to vector<8x8xf32>
    %c1_959 = arith.constant 1 : index
    %1550 = memref.load %arg2[%c1_959] : memref<81xf32, #tpu.memory_space<smem>>
    %1551 = vector.broadcast %1550 : f32 to vector<8x8xf32>
    %1552 = arith.mulf %1551, %1549 : vector<8x8xf32>
    %1553 = arith.addf %1547, %1552 : vector<8x8xf32>
    %c3_960 = arith.constant 3 : index
    %c0_961 = arith.constant 0 : index
    %c2_962 = arith.constant 2 : index
    %1554 = vector.load %arg6[%c3_960, %c0_961, %c2_962] : memref<6x10x10xf32, #tpu.memory_space<vmem>>, vector<1x8x8xf32>
    %1555 = vector.shape_cast %1554 : vector<1x8x8xf32> to vector<8x8xf32>
    %c2_963 = arith.constant 2 : index
    %1556 = memref.load %arg2[%c2_963] : memref<81xf32, #tpu.memory_space<smem>>
    %1557 = vector.broadcast %1556 : f32 to vector<8x8xf32>
    %1558 = arith.mulf %1557, %1555 : vector<8x8xf32>
    %1559 = arith.addf %1553, %1558 : vector<8x8xf32>
    %c3_964 = arith.constant 3 : index
    %c1_965 = arith.constant 1 : index
    %c0_966 = arith.constant 0 : index
    %1560 = vector.load %arg6[%c3_964, %c1_965, %c0_966] : memref<6x10x10xf32, #tpu.memory_space<vmem>>, vector<1x8x8xf32>
    %1561 = vector.shape_cast %1560 : vector<1x8x8xf32> to vector<8x8xf32>
    %c3_967 = arith.constant 3 : index
    %1562 = memref.load %arg2[%c3_967] : memref<81xf32, #tpu.memory_space<smem>>
    %1563 = vector.broadcast %1562 : f32 to vector<8x8xf32>
    %1564 = arith.mulf %1563, %1561 : vector<8x8xf32>
    %1565 = arith.addf %1559, %1564 : vector<8x8xf32>
    %c3_968 = arith.constant 3 : index
    %c1_969 = arith.constant 1 : index
    %c1_970 = arith.constant 1 : index
    %1566 = vector.load %arg6[%c3_968, %c1_969, %c1_970] : memref<6x10x10xf32, #tpu.memory_space<vmem>>, vector<1x8x8xf32>
    %1567 = vector.shape_cast %1566 : vector<1x8x8xf32> to vector<8x8xf32>
    %c4_971 = arith.constant 4 : index
    %1568 = memref.load %arg2[%c4_971] : memref<81xf32, #tpu.memory_space<smem>>
    %1569 = vector.broadcast %1568 : f32 to vector<8x8xf32>
    %1570 = arith.mulf %1569, %1567 : vector<8x8xf32>
    %1571 = arith.addf %1565, %1570 : vector<8x8xf32>
    %c3_972 = arith.constant 3 : index
    %c1_973 = arith.constant 1 : index
    %c2_974 = arith.constant 2 : index
    %1572 = vector.load %arg6[%c3_972, %c1_973, %c2_974] : memref<6x10x10xf32, #tpu.memory_space<vmem>>, vector<1x8x8xf32>
    %1573 = vector.shape_cast %1572 : vector<1x8x8xf32> to vector<8x8xf32>
    %c5_975 = arith.constant 5 : index
    %1574 = memref.load %arg2[%c5_975] : memref<81xf32, #tpu.memory_space<smem>>
    %1575 = vector.broadcast %1574 : f32 to vector<8x8xf32>
    %1576 = arith.mulf %1575, %1573 : vector<8x8xf32>
    %1577 = arith.addf %1571, %1576 : vector<8x8xf32>
    %c3_976 = arith.constant 3 : index
    %c2_977 = arith.constant 2 : index
    %c0_978 = arith.constant 0 : index
    %1578 = vector.load %arg6[%c3_976, %c2_977, %c0_978] : memref<6x10x10xf32, #tpu.memory_space<vmem>>, vector<1x8x8xf32>
    %1579 = vector.shape_cast %1578 : vector<1x8x8xf32> to vector<8x8xf32>
    %c6_979 = arith.constant 6 : index
    %1580 = memref.load %arg2[%c6_979] : memref<81xf32, #tpu.memory_space<smem>>
    %1581 = vector.broadcast %1580 : f32 to vector<8x8xf32>
    %1582 = arith.mulf %1581, %1579 : vector<8x8xf32>
    %1583 = arith.addf %1577, %1582 : vector<8x8xf32>
    %c3_980 = arith.constant 3 : index
    %c2_981 = arith.constant 2 : index
    %c1_982 = arith.constant 1 : index
    %1584 = vector.load %arg6[%c3_980, %c2_981, %c1_982] : memref<6x10x10xf32, #tpu.memory_space<vmem>>, vector<1x8x8xf32>
    %1585 = vector.shape_cast %1584 : vector<1x8x8xf32> to vector<8x8xf32>
    %c7_983 = arith.constant 7 : index
    %1586 = memref.load %arg2[%c7_983] : memref<81xf32, #tpu.memory_space<smem>>
    %1587 = vector.broadcast %1586 : f32 to vector<8x8xf32>
    %1588 = arith.mulf %1587, %1585 : vector<8x8xf32>
    %1589 = arith.addf %1583, %1588 : vector<8x8xf32>
    %c3_984 = arith.constant 3 : index
    %c2_985 = arith.constant 2 : index
    %c2_986 = arith.constant 2 : index
    %1590 = vector.load %arg6[%c3_984, %c2_985, %c2_986] : memref<6x10x10xf32, #tpu.memory_space<vmem>>, vector<1x8x8xf32>
    %1591 = vector.shape_cast %1590 : vector<1x8x8xf32> to vector<8x8xf32>
    %c8_987 = arith.constant 8 : index
    %1592 = memref.load %arg2[%c8_987] : memref<81xf32, #tpu.memory_space<smem>>
    %1593 = vector.broadcast %1592 : f32 to vector<8x8xf32>
    %1594 = arith.mulf %1593, %1591 : vector<8x8xf32>
    %1595 = arith.addf %1589, %1594 : vector<8x8xf32>
    %c4_988 = arith.constant 4 : index
    %c0_989 = arith.constant 0 : index
    %c0_990 = arith.constant 0 : index
    %1596 = vector.load %arg6[%c4_988, %c0_989, %c0_990] : memref<6x10x10xf32, #tpu.memory_space<vmem>>, vector<1x8x8xf32>
    %1597 = vector.shape_cast %1596 : vector<1x8x8xf32> to vector<8x8xf32>
    %c9_991 = arith.constant 9 : index
    %1598 = memref.load %arg2[%c9_991] : memref<81xf32, #tpu.memory_space<smem>>
    %1599 = vector.broadcast %1598 : f32 to vector<8x8xf32>
    %1600 = arith.mulf %1599, %1597 : vector<8x8xf32>
    %1601 = arith.addf %1595, %1600 : vector<8x8xf32>
    %c4_992 = arith.constant 4 : index
    %c0_993 = arith.constant 0 : index
    %c1_994 = arith.constant 1 : index
    %1602 = vector.load %arg6[%c4_992, %c0_993, %c1_994] : memref<6x10x10xf32, #tpu.memory_space<vmem>>, vector<1x8x8xf32>
    %1603 = vector.shape_cast %1602 : vector<1x8x8xf32> to vector<8x8xf32>
    %c10_995 = arith.constant 10 : index
    %1604 = memref.load %arg2[%c10_995] : memref<81xf32, #tpu.memory_space<smem>>
    %1605 = vector.broadcast %1604 : f32 to vector<8x8xf32>
    %1606 = arith.mulf %1605, %1603 : vector<8x8xf32>
    %1607 = arith.addf %1601, %1606 : vector<8x8xf32>
    %c4_996 = arith.constant 4 : index
    %c0_997 = arith.constant 0 : index
    %c2_998 = arith.constant 2 : index
    %1608 = vector.load %arg6[%c4_996, %c0_997, %c2_998] : memref<6x10x10xf32, #tpu.memory_space<vmem>>, vector<1x8x8xf32>
    %1609 = vector.shape_cast %1608 : vector<1x8x8xf32> to vector<8x8xf32>
    %c11_999 = arith.constant 11 : index
    %1610 = memref.load %arg2[%c11_999] : memref<81xf32, #tpu.memory_space<smem>>
    %1611 = vector.broadcast %1610 : f32 to vector<8x8xf32>
    %1612 = arith.mulf %1611, %1609 : vector<8x8xf32>
    %1613 = arith.addf %1607, %1612 : vector<8x8xf32>
    %c4_1000 = arith.constant 4 : index
    %c1_1001 = arith.constant 1 : index
    %c0_1002 = arith.constant 0 : index
    %1614 = vector.load %arg6[%c4_1000, %c1_1001, %c0_1002] : memref<6x10x10xf32, #tpu.memory_space<vmem>>, vector<1x8x8xf32>
    %1615 = vector.shape_cast %1614 : vector<1x8x8xf32> to vector<8x8xf32>
    %c12_1003 = arith.constant 12 : index
    %1616 = memref.load %arg2[%c12_1003] : memref<81xf32, #tpu.memory_space<smem>>
    %1617 = vector.broadcast %1616 : f32 to vector<8x8xf32>
    %1618 = arith.mulf %1617, %1615 : vector<8x8xf32>
    %1619 = arith.addf %1613, %1618 : vector<8x8xf32>
    %c4_1004 = arith.constant 4 : index
    %c1_1005 = arith.constant 1 : index
    %c1_1006 = arith.constant 1 : index
    %1620 = vector.load %arg6[%c4_1004, %c1_1005, %c1_1006] : memref<6x10x10xf32, #tpu.memory_space<vmem>>, vector<1x8x8xf32>
    %1621 = vector.shape_cast %1620 : vector<1x8x8xf32> to vector<8x8xf32>
    %c13_1007 = arith.constant 13 : index
    %1622 = memref.load %arg2[%c13_1007] : memref<81xf32, #tpu.memory_space<smem>>
    %1623 = vector.broadcast %1622 : f32 to vector<8x8xf32>
    %1624 = arith.mulf %1623, %1621 : vector<8x8xf32>
    %1625 = arith.addf %1619, %1624 : vector<8x8xf32>
    %c4_1008 = arith.constant 4 : index
    %c1_1009 = arith.constant 1 : index
    %c2_1010 = arith.constant 2 : index
    %1626 = vector.load %arg6[%c4_1008, %c1_1009, %c2_1010] : memref<6x10x10xf32, #tpu.memory_space<vmem>>, vector<1x8x8xf32>
    %1627 = vector.shape_cast %1626 : vector<1x8x8xf32> to vector<8x8xf32>
    %c14_1011 = arith.constant 14 : index
    %1628 = memref.load %arg2[%c14_1011] : memref<81xf32, #tpu.memory_space<smem>>
    %1629 = vector.broadcast %1628 : f32 to vector<8x8xf32>
    %1630 = arith.mulf %1629, %1627 : vector<8x8xf32>
    %1631 = arith.addf %1625, %1630 : vector<8x8xf32>
    %c4_1012 = arith.constant 4 : index
    %c2_1013 = arith.constant 2 : index
    %c0_1014 = arith.constant 0 : index
    %1632 = vector.load %arg6[%c4_1012, %c2_1013, %c0_1014] : memref<6x10x10xf32, #tpu.memory_space<vmem>>, vector<1x8x8xf32>
    %1633 = vector.shape_cast %1632 : vector<1x8x8xf32> to vector<8x8xf32>
    %c15_1015 = arith.constant 15 : index
    %1634 = memref.load %arg2[%c15_1015] : memref<81xf32, #tpu.memory_space<smem>>
    %1635 = vector.broadcast %1634 : f32 to vector<8x8xf32>
    %1636 = arith.mulf %1635, %1633 : vector<8x8xf32>
    %1637 = arith.addf %1631, %1636 : vector<8x8xf32>
    %c4_1016 = arith.constant 4 : index
    %c2_1017 = arith.constant 2 : index
    %c1_1018 = arith.constant 1 : index
    %1638 = vector.load %arg6[%c4_1016, %c2_1017, %c1_1018] : memref<6x10x10xf32, #tpu.memory_space<vmem>>, vector<1x8x8xf32>
    %1639 = vector.shape_cast %1638 : vector<1x8x8xf32> to vector<8x8xf32>
    %c16_1019 = arith.constant 16 : index
    %1640 = memref.load %arg2[%c16_1019] : memref<81xf32, #tpu.memory_space<smem>>
    %1641 = vector.broadcast %1640 : f32 to vector<8x8xf32>
    %1642 = arith.mulf %1641, %1639 : vector<8x8xf32>
    %1643 = arith.addf %1637, %1642 : vector<8x8xf32>
    %c4_1020 = arith.constant 4 : index
    %c2_1021 = arith.constant 2 : index
    %c2_1022 = arith.constant 2 : index
    %1644 = vector.load %arg6[%c4_1020, %c2_1021, %c2_1022] : memref<6x10x10xf32, #tpu.memory_space<vmem>>, vector<1x8x8xf32>
    %1645 = vector.shape_cast %1644 : vector<1x8x8xf32> to vector<8x8xf32>
    %c17_1023 = arith.constant 17 : index
    %1646 = memref.load %arg2[%c17_1023] : memref<81xf32, #tpu.memory_space<smem>>
    %1647 = vector.broadcast %1646 : f32 to vector<8x8xf32>
    %1648 = arith.mulf %1647, %1645 : vector<8x8xf32>
    %1649 = arith.addf %1643, %1648 : vector<8x8xf32>
    %c5_1024 = arith.constant 5 : index
    %c0_1025 = arith.constant 0 : index
    %c0_1026 = arith.constant 0 : index
    %1650 = vector.load %arg6[%c5_1024, %c0_1025, %c0_1026] : memref<6x10x10xf32, #tpu.memory_space<vmem>>, vector<1x8x8xf32>
    %1651 = vector.shape_cast %1650 : vector<1x8x8xf32> to vector<8x8xf32>
    %c18_1027 = arith.constant 18 : index
    %1652 = memref.load %arg2[%c18_1027] : memref<81xf32, #tpu.memory_space<smem>>
    %1653 = vector.broadcast %1652 : f32 to vector<8x8xf32>
    %1654 = arith.mulf %1653, %1651 : vector<8x8xf32>
    %1655 = arith.addf %1649, %1654 : vector<8x8xf32>
    %c5_1028 = arith.constant 5 : index
    %c0_1029 = arith.constant 0 : index
    %c1_1030 = arith.constant 1 : index
    %1656 = vector.load %arg6[%c5_1028, %c0_1029, %c1_1030] : memref<6x10x10xf32, #tpu.memory_space<vmem>>, vector<1x8x8xf32>
    %1657 = vector.shape_cast %1656 : vector<1x8x8xf32> to vector<8x8xf32>
    %c19_1031 = arith.constant 19 : index
    %1658 = memref.load %arg2[%c19_1031] : memref<81xf32, #tpu.memory_space<smem>>
    %1659 = vector.broadcast %1658 : f32 to vector<8x8xf32>
    %1660 = arith.mulf %1659, %1657 : vector<8x8xf32>
    %1661 = arith.addf %1655, %1660 : vector<8x8xf32>
    %c5_1032 = arith.constant 5 : index
    %c0_1033 = arith.constant 0 : index
    %c2_1034 = arith.constant 2 : index
    %1662 = vector.load %arg6[%c5_1032, %c0_1033, %c2_1034] : memref<6x10x10xf32, #tpu.memory_space<vmem>>, vector<1x8x8xf32>
    %1663 = vector.shape_cast %1662 : vector<1x8x8xf32> to vector<8x8xf32>
    %c20_1035 = arith.constant 20 : index
    %1664 = memref.load %arg2[%c20_1035] : memref<81xf32, #tpu.memory_space<smem>>
    %1665 = vector.broadcast %1664 : f32 to vector<8x8xf32>
    %1666 = arith.mulf %1665, %1663 : vector<8x8xf32>
    %1667 = arith.addf %1661, %1666 : vector<8x8xf32>
    %c5_1036 = arith.constant 5 : index
    %c1_1037 = arith.constant 1 : index
    %c0_1038 = arith.constant 0 : index
    %1668 = vector.load %arg6[%c5_1036, %c1_1037, %c0_1038] : memref<6x10x10xf32, #tpu.memory_space<vmem>>, vector<1x8x8xf32>
    %1669 = vector.shape_cast %1668 : vector<1x8x8xf32> to vector<8x8xf32>
    %c21_1039 = arith.constant 21 : index
    %1670 = memref.load %arg2[%c21_1039] : memref<81xf32, #tpu.memory_space<smem>>
    %1671 = vector.broadcast %1670 : f32 to vector<8x8xf32>
    %1672 = arith.mulf %1671, %1669 : vector<8x8xf32>
    %1673 = arith.addf %1667, %1672 : vector<8x8xf32>
    %c5_1040 = arith.constant 5 : index
    %c1_1041 = arith.constant 1 : index
    %c1_1042 = arith.constant 1 : index
    %1674 = vector.load %arg6[%c5_1040, %c1_1041, %c1_1042] : memref<6x10x10xf32, #tpu.memory_space<vmem>>, vector<1x8x8xf32>
    %1675 = vector.shape_cast %1674 : vector<1x8x8xf32> to vector<8x8xf32>
    %c22_1043 = arith.constant 22 : index
    %1676 = memref.load %arg2[%c22_1043] : memref<81xf32, #tpu.memory_space<smem>>
    %1677 = vector.broadcast %1676 : f32 to vector<8x8xf32>
    %1678 = arith.mulf %1677, %1675 : vector<8x8xf32>
    %1679 = arith.addf %1673, %1678 : vector<8x8xf32>
    %c5_1044 = arith.constant 5 : index
    %c1_1045 = arith.constant 1 : index
    %c2_1046 = arith.constant 2 : index
    %1680 = vector.load %arg6[%c5_1044, %c1_1045, %c2_1046] : memref<6x10x10xf32, #tpu.memory_space<vmem>>, vector<1x8x8xf32>
    %1681 = vector.shape_cast %1680 : vector<1x8x8xf32> to vector<8x8xf32>
    %c23_1047 = arith.constant 23 : index
    %1682 = memref.load %arg2[%c23_1047] : memref<81xf32, #tpu.memory_space<smem>>
    %1683 = vector.broadcast %1682 : f32 to vector<8x8xf32>
    %1684 = arith.mulf %1683, %1681 : vector<8x8xf32>
    %1685 = arith.addf %1679, %1684 : vector<8x8xf32>
    %c5_1048 = arith.constant 5 : index
    %c2_1049 = arith.constant 2 : index
    %c0_1050 = arith.constant 0 : index
    %1686 = vector.load %arg6[%c5_1048, %c2_1049, %c0_1050] : memref<6x10x10xf32, #tpu.memory_space<vmem>>, vector<1x8x8xf32>
    %1687 = vector.shape_cast %1686 : vector<1x8x8xf32> to vector<8x8xf32>
    %c24_1051 = arith.constant 24 : index
    %1688 = memref.load %arg2[%c24_1051] : memref<81xf32, #tpu.memory_space<smem>>
    %1689 = vector.broadcast %1688 : f32 to vector<8x8xf32>
    %1690 = arith.mulf %1689, %1687 : vector<8x8xf32>
    %1691 = arith.addf %1685, %1690 : vector<8x8xf32>
    %c5_1052 = arith.constant 5 : index
    %c2_1053 = arith.constant 2 : index
    %c1_1054 = arith.constant 1 : index
    %1692 = vector.load %arg6[%c5_1052, %c2_1053, %c1_1054] : memref<6x10x10xf32, #tpu.memory_space<vmem>>, vector<1x8x8xf32>
    %1693 = vector.shape_cast %1692 : vector<1x8x8xf32> to vector<8x8xf32>
    %c25_1055 = arith.constant 25 : index
    %1694 = memref.load %arg2[%c25_1055] : memref<81xf32, #tpu.memory_space<smem>>
    %1695 = vector.broadcast %1694 : f32 to vector<8x8xf32>
    %1696 = arith.mulf %1695, %1693 : vector<8x8xf32>
    %1697 = arith.addf %1691, %1696 : vector<8x8xf32>
    %c5_1056 = arith.constant 5 : index
    %c2_1057 = arith.constant 2 : index
    %c2_1058 = arith.constant 2 : index
    %1698 = vector.load %arg6[%c5_1056, %c2_1057, %c2_1058] : memref<6x10x10xf32, #tpu.memory_space<vmem>>, vector<1x8x8xf32>
    %1699 = vector.shape_cast %1698 : vector<1x8x8xf32> to vector<8x8xf32>
    %c26_1059 = arith.constant 26 : index
    %1700 = memref.load %arg2[%c26_1059] : memref<81xf32, #tpu.memory_space<smem>>
    %1701 = vector.broadcast %1700 : f32 to vector<8x8xf32>
    %1702 = arith.mulf %1701, %1699 : vector<8x8xf32>
    %1703 = arith.addf %1697, %1702 : vector<8x8xf32>
    %c0_1060 = arith.constant 0 : index
    %1704 = memref.load %arg3[%c0_1060] : memref<3xf32, #tpu.memory_space<smem>>
    %1705 = vector.broadcast %1704 : f32 to vector<8x8xf32>
    %1706 = arith.addf %1703, %1705 : vector<8x8xf32>
    %cst_1061 = arith.constant 0.000000e+00 : f32
    %1707 = vector.broadcast %cst_1061 : f32 to vector<8x8xf32>
    %1708 = arith.maximumf %1706, %1707 : vector<8x8xf32>
    %c1_1062 = arith.constant 1 : index
    %c0_1063 = arith.constant 0 : index
    %c0_1064 = arith.constant 0 : index
    %c0_1065 = arith.constant 0 : index
    %1709 = vector.load %arg5[%c1_1062, %c0_1063, %c0_1064, %c0_1065] : memref<2x3x8x8xf32, #tpu.memory_space<vmem>>, vector<1x1x8x8xf32>
    %1710 = vector.shape_cast %1709 : vector<1x1x8x8xf32> to vector<8x8xf32>
    %1711 = vector.shape_cast %1708 : vector<8x8xf32> to vector<1x1x8x8xf32>
    tpu.vector_store %arg5[%c1_1062, %c0_1063, %c0_1064, %c0_1065], %1711 {strides = array<i32>} : memref<2x3x8x8xf32, #tpu.memory_space<vmem>>, vector<1x1x8x8xf32>,
    %cst_1066 = arith.constant 0.000000e+00 : f32
    %1712 = vector.broadcast %cst_1066 : f32 to vector<8x8xf32>
    %c3_1067 = arith.constant 3 : index
    %c0_1068 = arith.constant 0 : index
    %c0_1069 = arith.constant 0 : index
    %1713 = vector.load %arg6[%c3_1067, %c0_1068, %c0_1069] : memref<6x10x10xf32, #tpu.memory_space<vmem>>, vector<1x8x8xf32>
    %1714 = vector.shape_cast %1713 : vector<1x8x8xf32> to vector<8x8xf32>
    %c27_1070 = arith.constant 27 : index
    %1715 = memref.load %arg2[%c27_1070] : memref<81xf32, #tpu.memory_space<smem>>
    %1716 = vector.broadcast %1715 : f32 to vector<8x8xf32>
    %1717 = arith.mulf %1716, %1714 : vector<8x8xf32>
    %1718 = arith.addf %1712, %1717 : vector<8x8xf32>
    %c3_1071 = arith.constant 3 : index
    %c0_1072 = arith.constant 0 : index
    %c1_1073 = arith.constant 1 : index
    %1719 = vector.load %arg6[%c3_1071, %c0_1072, %c1_1073] : memref<6x10x10xf32, #tpu.memory_space<vmem>>, vector<1x8x8xf32>
    %1720 = vector.shape_cast %1719 : vector<1x8x8xf32> to vector<8x8xf32>
    %c28_1074 = arith.constant 28 : index
    %1721 = memref.load %arg2[%c28_1074] : memref<81xf32, #tpu.memory_space<smem>>
    %1722 = vector.broadcast %1721 : f32 to vector<8x8xf32>
    %1723 = arith.mulf %1722, %1720 : vector<8x8xf32>
    %1724 = arith.addf %1718, %1723 : vector<8x8xf32>
    %c3_1075 = arith.constant 3 : index
    %c0_1076 = arith.constant 0 : index
    %c2_1077 = arith.constant 2 : index
    %1725 = vector.load %arg6[%c3_1075, %c0_1076, %c2_1077] : memref<6x10x10xf32, #tpu.memory_space<vmem>>, vector<1x8x8xf32>
    %1726 = vector.shape_cast %1725 : vector<1x8x8xf32> to vector<8x8xf32>
    %c29_1078 = arith.constant 29 : index
    %1727 = memref.load %arg2[%c29_1078] : memref<81xf32, #tpu.memory_space<smem>>
    %1728 = vector.broadcast %1727 : f32 to vector<8x8xf32>
    %1729 = arith.mulf %1728, %1726 : vector<8x8xf32>
    %1730 = arith.addf %1724, %1729 : vector<8x8xf32>
    %c3_1079 = arith.constant 3 : index
    %c1_1080 = arith.constant 1 : index
    %c0_1081 = arith.constant 0 : index
    %1731 = vector.load %arg6[%c3_1079, %c1_1080, %c0_1081] : memref<6x10x10xf32, #tpu.memory_space<vmem>>, vector<1x8x8xf32>
    %1732 = vector.shape_cast %1731 : vector<1x8x8xf32> to vector<8x8xf32>
    %c30_1082 = arith.constant 30 : index
    %1733 = memref.load %arg2[%c30_1082] : memref<81xf32, #tpu.memory_space<smem>>
    %1734 = vector.broadcast %1733 : f32 to vector<8x8xf32>
    %1735 = arith.mulf %1734, %1732 : vector<8x8xf32>
    %1736 = arith.addf %1730, %1735 : vector<8x8xf32>
    %c3_1083 = arith.constant 3 : index
    %c1_1084 = arith.constant 1 : index
    %c1_1085 = arith.constant 1 : index
    %1737 = vector.load %arg6[%c3_1083, %c1_1084, %c1_1085] : memref<6x10x10xf32, #tpu.memory_space<vmem>>, vector<1x8x8xf32>
    %1738 = vector.shape_cast %1737 : vector<1x8x8xf32> to vector<8x8xf32>
    %c31_1086 = arith.constant 31 : index
    %1739 = memref.load %arg2[%c31_1086] : memref<81xf32, #tpu.memory_space<smem>>
    %1740 = vector.broadcast %1739 : f32 to vector<8x8xf32>
    %1741 = arith.mulf %1740, %1738 : vector<8x8xf32>
    %1742 = arith.addf %1736, %1741 : vector<8x8xf32>
    %c3_1087 = arith.constant 3 : index
    %c1_1088 = arith.constant 1 : index
    %c2_1089 = arith.constant 2 : index
    %1743 = vector.load %arg6[%c3_1087, %c1_1088, %c2_1089] : memref<6x10x10xf32, #tpu.memory_space<vmem>>, vector<1x8x8xf32>
    %1744 = vector.shape_cast %1743 : vector<1x8x8xf32> to vector<8x8xf32>
    %c32_1090 = arith.constant 32 : index
    %1745 = memref.load %arg2[%c32_1090] : memref<81xf32, #tpu.memory_space<smem>>
    %1746 = vector.broadcast %1745 : f32 to vector<8x8xf32>
    %1747 = arith.mulf %1746, %1744 : vector<8x8xf32>
    %1748 = arith.addf %1742, %1747 : vector<8x8xf32>
    %c3_1091 = arith.constant 3 : index
    %c2_1092 = arith.constant 2 : index
    %c0_1093 = arith.constant 0 : index
    %1749 = vector.load %arg6[%c3_1091, %c2_1092, %c0_1093] : memref<6x10x10xf32, #tpu.memory_space<vmem>>, vector<1x8x8xf32>
    %1750 = vector.shape_cast %1749 : vector<1x8x8xf32> to vector<8x8xf32>
    %c33_1094 = arith.constant 33 : index
    %1751 = memref.load %arg2[%c33_1094] : memref<81xf32, #tpu.memory_space<smem>>
    %1752 = vector.broadcast %1751 : f32 to vector<8x8xf32>
    %1753 = arith.mulf %1752, %1750 : vector<8x8xf32>
    %1754 = arith.addf %1748, %1753 : vector<8x8xf32>
    %c3_1095 = arith.constant 3 : index
    %c2_1096 = arith.constant 2 : index
    %c1_1097 = arith.constant 1 : index
    %1755 = vector.load %arg6[%c3_1095, %c2_1096, %c1_1097] : memref<6x10x10xf32, #tpu.memory_space<vmem>>, vector<1x8x8xf32>
    %1756 = vector.shape_cast %1755 : vector<1x8x8xf32> to vector<8x8xf32>
    %c34_1098 = arith.constant 34 : index
    %1757 = memref.load %arg2[%c34_1098] : memref<81xf32, #tpu.memory_space<smem>>
    %1758 = vector.broadcast %1757 : f32 to vector<8x8xf32>
    %1759 = arith.mulf %1758, %1756 : vector<8x8xf32>
    %1760 = arith.addf %1754, %1759 : vector<8x8xf32>
    %c3_1099 = arith.constant 3 : index
    %c2_1100 = arith.constant 2 : index
    %c2_1101 = arith.constant 2 : index
    %1761 = vector.load %arg6[%c3_1099, %c2_1100, %c2_1101] : memref<6x10x10xf32, #tpu.memory_space<vmem>>, vector<1x8x8xf32>
    %1762 = vector.shape_cast %1761 : vector<1x8x8xf32> to vector<8x8xf32>
    %c35_1102 = arith.constant 35 : index
    %1763 = memref.load %arg2[%c35_1102] : memref<81xf32, #tpu.memory_space<smem>>
    %1764 = vector.broadcast %1763 : f32 to vector<8x8xf32>
    %1765 = arith.mulf %1764, %1762 : vector<8x8xf32>
    %1766 = arith.addf %1760, %1765 : vector<8x8xf32>
    %c4_1103 = arith.constant 4 : index
    %c0_1104 = arith.constant 0 : index
    %c0_1105 = arith.constant 0 : index
    %1767 = vector.load %arg6[%c4_1103, %c0_1104, %c0_1105] : memref<6x10x10xf32, #tpu.memory_space<vmem>>, vector<1x8x8xf32>
    %1768 = vector.shape_cast %1767 : vector<1x8x8xf32> to vector<8x8xf32>
    %c36_1106 = arith.constant 36 : index
    %1769 = memref.load %arg2[%c36_1106] : memref<81xf32, #tpu.memory_space<smem>>
    %1770 = vector.broadcast %1769 : f32 to vector<8x8xf32>
    %1771 = arith.mulf %1770, %1768 : vector<8x8xf32>
    %1772 = arith.addf %1766, %1771 : vector<8x8xf32>
    %c4_1107 = arith.constant 4 : index
    %c0_1108 = arith.constant 0 : index
    %c1_1109 = arith.constant 1 : index
    %1773 = vector.load %arg6[%c4_1107, %c0_1108, %c1_1109] : memref<6x10x10xf32, #tpu.memory_space<vmem>>, vector<1x8x8xf32>
    %1774 = vector.shape_cast %1773 : vector<1x8x8xf32> to vector<8x8xf32>
    %c37_1110 = arith.constant 37 : index
    %1775 = memref.load %arg2[%c37_1110] : memref<81xf32, #tpu.memory_space<smem>>
    %1776 = vector.broadcast %1775 : f32 to vector<8x8xf32>
    %1777 = arith.mulf %1776, %1774 : vector<8x8xf32>
    %1778 = arith.addf %1772, %1777 : vector<8x8xf32>
    %c4_1111 = arith.constant 4 : index
    %c0_1112 = arith.constant 0 : index
    %c2_1113 = arith.constant 2 : index
    %1779 = vector.load %arg6[%c4_1111, %c0_1112, %c2_1113] : memref<6x10x10xf32, #tpu.memory_space<vmem>>, vector<1x8x8xf32>
    %1780 = vector.shape_cast %1779 : vector<1x8x8xf32> to vector<8x8xf32>
    %c38_1114 = arith.constant 38 : index
    %1781 = memref.load %arg2[%c38_1114] : memref<81xf32, #tpu.memory_space<smem>>
    %1782 = vector.broadcast %1781 : f32 to vector<8x8xf32>
    %1783 = arith.mulf %1782, %1780 : vector<8x8xf32>
    %1784 = arith.addf %1778, %1783 : vector<8x8xf32>
    %c4_1115 = arith.constant 4 : index
    %c1_1116 = arith.constant 1 : index
    %c0_1117 = arith.constant 0 : index
    %1785 = vector.load %arg6[%c4_1115, %c1_1116, %c0_1117] : memref<6x10x10xf32, #tpu.memory_space<vmem>>, vector<1x8x8xf32>
    %1786 = vector.shape_cast %1785 : vector<1x8x8xf32> to vector<8x8xf32>
    %c39_1118 = arith.constant 39 : index
    %1787 = memref.load %arg2[%c39_1118] : memref<81xf32, #tpu.memory_space<smem>>
    %1788 = vector.broadcast %1787 : f32 to vector<8x8xf32>
    %1789 = arith.mulf %1788, %1786 : vector<8x8xf32>
    %1790 = arith.addf %1784, %1789 : vector<8x8xf32>
    %c4_1119 = arith.constant 4 : index
    %c1_1120 = arith.constant 1 : index
    %c1_1121 = arith.constant 1 : index
    %1791 = vector.load %arg6[%c4_1119, %c1_1120, %c1_1121] : memref<6x10x10xf32, #tpu.memory_space<vmem>>, vector<1x8x8xf32>
    %1792 = vector.shape_cast %1791 : vector<1x8x8xf32> to vector<8x8xf32>
    %c40_1122 = arith.constant 40 : index
    %1793 = memref.load %arg2[%c40_1122] : memref<81xf32, #tpu.memory_space<smem>>
    %1794 = vector.broadcast %1793 : f32 to vector<8x8xf32>
    %1795 = arith.mulf %1794, %1792 : vector<8x8xf32>
    %1796 = arith.addf %1790, %1795 : vector<8x8xf32>
    %c4_1123 = arith.constant 4 : index
    %c1_1124 = arith.constant 1 : index
    %c2_1125 = arith.constant 2 : index
    %1797 = vector.load %arg6[%c4_1123, %c1_1124, %c2_1125] : memref<6x10x10xf32, #tpu.memory_space<vmem>>, vector<1x8x8xf32>
    %1798 = vector.shape_cast %1797 : vector<1x8x8xf32> to vector<8x8xf32>
    %c41_1126 = arith.constant 41 : index
    %1799 = memref.load %arg2[%c41_1126] : memref<81xf32, #tpu.memory_space<smem>>
    %1800 = vector.broadcast %1799 : f32 to vector<8x8xf32>
    %1801 = arith.mulf %1800, %1798 : vector<8x8xf32>
    %1802 = arith.addf %1796, %1801 : vector<8x8xf32>
    %c4_1127 = arith.constant 4 : index
    %c2_1128 = arith.constant 2 : index
    %c0_1129 = arith.constant 0 : index
    %1803 = vector.load %arg6[%c4_1127, %c2_1128, %c0_1129] : memref<6x10x10xf32, #tpu.memory_space<vmem>>, vector<1x8x8xf32>
    %1804 = vector.shape_cast %1803 : vector<1x8x8xf32> to vector<8x8xf32>
    %c42_1130 = arith.constant 42 : index
    %1805 = memref.load %arg2[%c42_1130] : memref<81xf32, #tpu.memory_space<smem>>
    %1806 = vector.broadcast %1805 : f32 to vector<8x8xf32>
    %1807 = arith.mulf %1806, %1804 : vector<8x8xf32>
    %1808 = arith.addf %1802, %1807 : vector<8x8xf32>
    %c4_1131 = arith.constant 4 : index
    %c2_1132 = arith.constant 2 : index
    %c1_1133 = arith.constant 1 : index
    %1809 = vector.load %arg6[%c4_1131, %c2_1132, %c1_1133] : memref<6x10x10xf32, #tpu.memory_space<vmem>>, vector<1x8x8xf32>
    %1810 = vector.shape_cast %1809 : vector<1x8x8xf32> to vector<8x8xf32>
    %c43_1134 = arith.constant 43 : index
    %1811 = memref.load %arg2[%c43_1134] : memref<81xf32, #tpu.memory_space<smem>>
    %1812 = vector.broadcast %1811 : f32 to vector<8x8xf32>
    %1813 = arith.mulf %1812, %1810 : vector<8x8xf32>
    %1814 = arith.addf %1808, %1813 : vector<8x8xf32>
    %c4_1135 = arith.constant 4 : index
    %c2_1136 = arith.constant 2 : index
    %c2_1137 = arith.constant 2 : index
    %1815 = vector.load %arg6[%c4_1135, %c2_1136, %c2_1137] : memref<6x10x10xf32, #tpu.memory_space<vmem>>, vector<1x8x8xf32>
    %1816 = vector.shape_cast %1815 : vector<1x8x8xf32> to vector<8x8xf32>
    %c44_1138 = arith.constant 44 : index
    %1817 = memref.load %arg2[%c44_1138] : memref<81xf32, #tpu.memory_space<smem>>
    %1818 = vector.broadcast %1817 : f32 to vector<8x8xf32>
    %1819 = arith.mulf %1818, %1816 : vector<8x8xf32>
    %1820 = arith.addf %1814, %1819 : vector<8x8xf32>
    %c5_1139 = arith.constant 5 : index
    %c0_1140 = arith.constant 0 : index
    %c0_1141 = arith.constant 0 : index
    %1821 = vector.load %arg6[%c5_1139, %c0_1140, %c0_1141] : memref<6x10x10xf32, #tpu.memory_space<vmem>>, vector<1x8x8xf32>
    %1822 = vector.shape_cast %1821 : vector<1x8x8xf32> to vector<8x8xf32>
    %c45_1142 = arith.constant 45 : index
    %1823 = memref.load %arg2[%c45_1142] : memref<81xf32, #tpu.memory_space<smem>>
    %1824 = vector.broadcast %1823 : f32 to vector<8x8xf32>
    %1825 = arith.mulf %1824, %1822 : vector<8x8xf32>
    %1826 = arith.addf %1820, %1825 : vector<8x8xf32>
    %c5_1143 = arith.constant 5 : index
    %c0_1144 = arith.constant 0 : index
    %c1_1145 = arith.constant 1 : index
    %1827 = vector.load %arg6[%c5_1143, %c0_1144, %c1_1145] : memref<6x10x10xf32, #tpu.memory_space<vmem>>, vector<1x8x8xf32>
    %1828 = vector.shape_cast %1827 : vector<1x8x8xf32> to vector<8x8xf32>
    %c46_1146 = arith.constant 46 : index
    %1829 = memref.load %arg2[%c46_1146] : memref<81xf32, #tpu.memory_space<smem>>
    %1830 = vector.broadcast %1829 : f32 to vector<8x8xf32>
    %1831 = arith.mulf %1830, %1828 : vector<8x8xf32>
    %1832 = arith.addf %1826, %1831 : vector<8x8xf32>
    %c5_1147 = arith.constant 5 : index
    %c0_1148 = arith.constant 0 : index
    %c2_1149 = arith.constant 2 : index
    %1833 = vector.load %arg6[%c5_1147, %c0_1148, %c2_1149] : memref<6x10x10xf32, #tpu.memory_space<vmem>>, vector<1x8x8xf32>
    %1834 = vector.shape_cast %1833 : vector<1x8x8xf32> to vector<8x8xf32>
    %c47_1150 = arith.constant 47 : index
    %1835 = memref.load %arg2[%c47_1150] : memref<81xf32, #tpu.memory_space<smem>>
    %1836 = vector.broadcast %1835 : f32 to vector<8x8xf32>
    %1837 = arith.mulf %1836, %1834 : vector<8x8xf32>
    %1838 = arith.addf %1832, %1837 : vector<8x8xf32>
    %c5_1151 = arith.constant 5 : index
    %c1_1152 = arith.constant 1 : index
    %c0_1153 = arith.constant 0 : index
    %1839 = vector.load %arg6[%c5_1151, %c1_1152, %c0_1153] : memref<6x10x10xf32, #tpu.memory_space<vmem>>, vector<1x8x8xf32>
    %1840 = vector.shape_cast %1839 : vector<1x8x8xf32> to vector<8x8xf32>
    %c48_1154 = arith.constant 48 : index
    %1841 = memref.load %arg2[%c48_1154] : memref<81xf32, #tpu.memory_space<smem>>
    %1842 = vector.broadcast %1841 : f32 to vector<8x8xf32>
    %1843 = arith.mulf %1842, %1840 : vector<8x8xf32>
    %1844 = arith.addf %1838, %1843 : vector<8x8xf32>
    %c5_1155 = arith.constant 5 : index
    %c1_1156 = arith.constant 1 : index
    %c1_1157 = arith.constant 1 : index
    %1845 = vector.load %arg6[%c5_1155, %c1_1156, %c1_1157] : memref<6x10x10xf32, #tpu.memory_space<vmem>>, vector<1x8x8xf32>
    %1846 = vector.shape_cast %1845 : vector<1x8x8xf32> to vector<8x8xf32>
    %c49_1158 = arith.constant 49 : index
    %1847 = memref.load %arg2[%c49_1158] : memref<81xf32, #tpu.memory_space<smem>>
    %1848 = vector.broadcast %1847 : f32 to vector<8x8xf32>
    %1849 = arith.mulf %1848, %1846 : vector<8x8xf32>
    %1850 = arith.addf %1844, %1849 : vector<8x8xf32>
    %c5_1159 = arith.constant 5 : index
    %c1_1160 = arith.constant 1 : index
    %c2_1161 = arith.constant 2 : index
    %1851 = vector.load %arg6[%c5_1159, %c1_1160, %c2_1161] : memref<6x10x10xf32, #tpu.memory_space<vmem>>, vector<1x8x8xf32>
    %1852 = vector.shape_cast %1851 : vector<1x8x8xf32> to vector<8x8xf32>
    %c50_1162 = arith.constant 50 : index
    %1853 = memref.load %arg2[%c50_1162] : memref<81xf32, #tpu.memory_space<smem>>
    %1854 = vector.broadcast %1853 : f32 to vector<8x8xf32>
    %1855 = arith.mulf %1854, %1852 : vector<8x8xf32>
    %1856 = arith.addf %1850, %1855 : vector<8x8xf32>
    %c5_1163 = arith.constant 5 : index
    %c2_1164 = arith.constant 2 : index
    %c0_1165 = arith.constant 0 : index
    %1857 = vector.load %arg6[%c5_1163, %c2_1164, %c0_1165] : memref<6x10x10xf32, #tpu.memory_space<vmem>>, vector<1x8x8xf32>
    %1858 = vector.shape_cast %1857 : vector<1x8x8xf32> to vector<8x8xf32>
    %c51_1166 = arith.constant 51 : index
    %1859 = memref.load %arg2[%c51_1166] : memref<81xf32, #tpu.memory_space<smem>>
    %1860 = vector.broadcast %1859 : f32 to vector<8x8xf32>
    %1861 = arith.mulf %1860, %1858 : vector<8x8xf32>
    %1862 = arith.addf %1856, %1861 : vector<8x8xf32>
    %c5_1167 = arith.constant 5 : index
    %c2_1168 = arith.constant 2 : index
    %c1_1169 = arith.constant 1 : index
    %1863 = vector.load %arg6[%c5_1167, %c2_1168, %c1_1169] : memref<6x10x10xf32, #tpu.memory_space<vmem>>, vector<1x8x8xf32>
    %1864 = vector.shape_cast %1863 : vector<1x8x8xf32> to vector<8x8xf32>
    %c52_1170 = arith.constant 52 : index
    %1865 = memref.load %arg2[%c52_1170] : memref<81xf32, #tpu.memory_space<smem>>
    %1866 = vector.broadcast %1865 : f32 to vector<8x8xf32>
    %1867 = arith.mulf %1866, %1864 : vector<8x8xf32>
    %1868 = arith.addf %1862, %1867 : vector<8x8xf32>
    %c5_1171 = arith.constant 5 : index
    %c2_1172 = arith.constant 2 : index
    %c2_1173 = arith.constant 2 : index
    %1869 = vector.load %arg6[%c5_1171, %c2_1172, %c2_1173] : memref<6x10x10xf32, #tpu.memory_space<vmem>>, vector<1x8x8xf32>
    %1870 = vector.shape_cast %1869 : vector<1x8x8xf32> to vector<8x8xf32>
    %c53_1174 = arith.constant 53 : index
    %1871 = memref.load %arg2[%c53_1174] : memref<81xf32, #tpu.memory_space<smem>>
    %1872 = vector.broadcast %1871 : f32 to vector<8x8xf32>
    %1873 = arith.mulf %1872, %1870 : vector<8x8xf32>
    %1874 = arith.addf %1868, %1873 : vector<8x8xf32>
    %c1_1175 = arith.constant 1 : index
    %1875 = memref.load %arg3[%c1_1175] : memref<3xf32, #tpu.memory_space<smem>>
    %1876 = vector.broadcast %1875 : f32 to vector<8x8xf32>
    %1877 = arith.addf %1874, %1876 : vector<8x8xf32>
    %cst_1176 = arith.constant 0.000000e+00 : f32
    %1878 = vector.broadcast %cst_1176 : f32 to vector<8x8xf32>
    %1879 = arith.maximumf %1877, %1878 : vector<8x8xf32>
    %c1_1177 = arith.constant 1 : index
    %c1_1178 = arith.constant 1 : index
    %c0_1179 = arith.constant 0 : index
    %c0_1180 = arith.constant 0 : index
    %1880 = vector.load %arg5[%c1_1177, %c1_1178, %c0_1179, %c0_1180] : memref<2x3x8x8xf32, #tpu.memory_space<vmem>>, vector<1x1x8x8xf32>
    %1881 = vector.shape_cast %1880 : vector<1x1x8x8xf32> to vector<8x8xf32>
    %1882 = vector.shape_cast %1879 : vector<8x8xf32> to vector<1x1x8x8xf32>
    tpu.vector_store %arg5[%c1_1177, %c1_1178, %c0_1179, %c0_1180], %1882 {strides = array<i32>} : memref<2x3x8x8xf32, #tpu.memory_space<vmem>>, vector<1x1x8x8xf32>,
    %cst_1181 = arith.constant 0.000000e+00 : f32
    %1883 = vector.broadcast %cst_1181 : f32 to vector<8x8xf32>
    %c3_1182 = arith.constant 3 : index
    %c0_1183 = arith.constant 0 : index
    %c0_1184 = arith.constant 0 : index
    %1884 = vector.load %arg6[%c3_1182, %c0_1183, %c0_1184] : memref<6x10x10xf32, #tpu.memory_space<vmem>>, vector<1x8x8xf32>
    %1885 = vector.shape_cast %1884 : vector<1x8x8xf32> to vector<8x8xf32>
    %c54_1185 = arith.constant 54 : index
    %1886 = memref.load %arg2[%c54_1185] : memref<81xf32, #tpu.memory_space<smem>>
    %1887 = vector.broadcast %1886 : f32 to vector<8x8xf32>
    %1888 = arith.mulf %1887, %1885 : vector<8x8xf32>
    %1889 = arith.addf %1883, %1888 : vector<8x8xf32>
    %c3_1186 = arith.constant 3 : index
    %c0_1187 = arith.constant 0 : index
    %c1_1188 = arith.constant 1 : index
    %1890 = vector.load %arg6[%c3_1186, %c0_1187, %c1_1188] : memref<6x10x10xf32, #tpu.memory_space<vmem>>, vector<1x8x8xf32>
    %1891 = vector.shape_cast %1890 : vector<1x8x8xf32> to vector<8x8xf32>
    %c55_1189 = arith.constant 55 : index
    %1892 = memref.load %arg2[%c55_1189] : memref<81xf32, #tpu.memory_space<smem>>
    %1893 = vector.broadcast %1892 : f32 to vector<8x8xf32>
    %1894 = arith.mulf %1893, %1891 : vector<8x8xf32>
    %1895 = arith.addf %1889, %1894 : vector<8x8xf32>
    %c3_1190 = arith.constant 3 : index
    %c0_1191 = arith.constant 0 : index
    %c2_1192 = arith.constant 2 : index
    %1896 = vector.load %arg6[%c3_1190, %c0_1191, %c2_1192] : memref<6x10x10xf32, #tpu.memory_space<vmem>>, vector<1x8x8xf32>
    %1897 = vector.shape_cast %1896 : vector<1x8x8xf32> to vector<8x8xf32>
    %c56_1193 = arith.constant 56 : index
    %1898 = memref.load %arg2[%c56_1193] : memref<81xf32, #tpu.memory_space<smem>>
    %1899 = vector.broadcast %1898 : f32 to vector<8x8xf32>
    %1900 = arith.mulf %1899, %1897 : vector<8x8xf32>
    %1901 = arith.addf %1895, %1900 : vector<8x8xf32>
    %c3_1194 = arith.constant 3 : index
    %c1_1195 = arith.constant 1 : index
    %c0_1196 = arith.constant 0 : index
    %1902 = vector.load %arg6[%c3_1194, %c1_1195, %c0_1196] : memref<6x10x10xf32, #tpu.memory_space<vmem>>, vector<1x8x8xf32>
    %1903 = vector.shape_cast %1902 : vector<1x8x8xf32> to vector<8x8xf32>
    %c57_1197 = arith.constant 57 : index
    %1904 = memref.load %arg2[%c57_1197] : memref<81xf32, #tpu.memory_space<smem>>
    %1905 = vector.broadcast %1904 : f32 to vector<8x8xf32>
    %1906 = arith.mulf %1905, %1903 : vector<8x8xf32>
    %1907 = arith.addf %1901, %1906 : vector<8x8xf32>
    %c3_1198 = arith.constant 3 : index
    %c1_1199 = arith.constant 1 : index
    %c1_1200 = arith.constant 1 : index
    %1908 = vector.load %arg6[%c3_1198, %c1_1199, %c1_1200] : memref<6x10x10xf32, #tpu.memory_space<vmem>>, vector<1x8x8xf32>
    %1909 = vector.shape_cast %1908 : vector<1x8x8xf32> to vector<8x8xf32>
    %c58_1201 = arith.constant 58 : index
    %1910 = memref.load %arg2[%c58_1201] : memref<81xf32, #tpu.memory_space<smem>>
    %1911 = vector.broadcast %1910 : f32 to vector<8x8xf32>
    %1912 = arith.mulf %1911, %1909 : vector<8x8xf32>
    %1913 = arith.addf %1907, %1912 : vector<8x8xf32>
    %c3_1202 = arith.constant 3 : index
    %c1_1203 = arith.constant 1 : index
    %c2_1204 = arith.constant 2 : index
    %1914 = vector.load %arg6[%c3_1202, %c1_1203, %c2_1204] : memref<6x10x10xf32, #tpu.memory_space<vmem>>, vector<1x8x8xf32>
    %1915 = vector.shape_cast %1914 : vector<1x8x8xf32> to vector<8x8xf32>
    %c59_1205 = arith.constant 59 : index
    %1916 = memref.load %arg2[%c59_1205] : memref<81xf32, #tpu.memory_space<smem>>
    %1917 = vector.broadcast %1916 : f32 to vector<8x8xf32>
    %1918 = arith.mulf %1917, %1915 : vector<8x8xf32>
    %1919 = arith.addf %1913, %1918 : vector<8x8xf32>
    %c3_1206 = arith.constant 3 : index
    %c2_1207 = arith.constant 2 : index
    %c0_1208 = arith.constant 0 : index
    %1920 = vector.load %arg6[%c3_1206, %c2_1207, %c0_1208] : memref<6x10x10xf32, #tpu.memory_space<vmem>>, vector<1x8x8xf32>
    %1921 = vector.shape_cast %1920 : vector<1x8x8xf32> to vector<8x8xf32>
    %c60_1209 = arith.constant 60 : index
    %1922 = memref.load %arg2[%c60_1209] : memref<81xf32, #tpu.memory_space<smem>>
    %1923 = vector.broadcast %1922 : f32 to vector<8x8xf32>
    %1924 = arith.mulf %1923, %1921 : vector<8x8xf32>
    %1925 = arith.addf %1919, %1924 : vector<8x8xf32>
    %c3_1210 = arith.constant 3 : index
    %c2_1211 = arith.constant 2 : index
    %c1_1212 = arith.constant 1 : index
    %1926 = vector.load %arg6[%c3_1210, %c2_1211, %c1_1212] : memref<6x10x10xf32, #tpu.memory_space<vmem>>, vector<1x8x8xf32>
    %1927 = vector.shape_cast %1926 : vector<1x8x8xf32> to vector<8x8xf32>
    %c61_1213 = arith.constant 61 : index
    %1928 = memref.load %arg2[%c61_1213] : memref<81xf32, #tpu.memory_space<smem>>
    %1929 = vector.broadcast %1928 : f32 to vector<8x8xf32>
    %1930 = arith.mulf %1929, %1927 : vector<8x8xf32>
    %1931 = arith.addf %1925, %1930 : vector<8x8xf32>
    %c3_1214 = arith.constant 3 : index
    %c2_1215 = arith.constant 2 : index
    %c2_1216 = arith.constant 2 : index
    %1932 = vector.load %arg6[%c3_1214, %c2_1215, %c2_1216] : memref<6x10x10xf32, #tpu.memory_space<vmem>>, vector<1x8x8xf32>
    %1933 = vector.shape_cast %1932 : vector<1x8x8xf32> to vector<8x8xf32>
    %c62_1217 = arith.constant 62 : index
    %1934 = memref.load %arg2[%c62_1217] : memref<81xf32, #tpu.memory_space<smem>>
    %1935 = vector.broadcast %1934 : f32 to vector<8x8xf32>
    %1936 = arith.mulf %1935, %1933 : vector<8x8xf32>
    %1937 = arith.addf %1931, %1936 : vector<8x8xf32>
    %c4_1218 = arith.constant 4 : index
    %c0_1219 = arith.constant 0 : index
    %c0_1220 = arith.constant 0 : index
    %1938 = vector.load %arg6[%c4_1218, %c0_1219, %c0_1220] : memref<6x10x10xf32, #tpu.memory_space<vmem>>, vector<1x8x8xf32>
    %1939 = vector.shape_cast %1938 : vector<1x8x8xf32> to vector<8x8xf32>
    %c63_1221 = arith.constant 63 : index
    %1940 = memref.load %arg2[%c63_1221] : memref<81xf32, #tpu.memory_space<smem>>
    %1941 = vector.broadcast %1940 : f32 to vector<8x8xf32>
    %1942 = arith.mulf %1941, %1939 : vector<8x8xf32>
    %1943 = arith.addf %1937, %1942 : vector<8x8xf32>
    %c4_1222 = arith.constant 4 : index
    %c0_1223 = arith.constant 0 : index
    %c1_1224 = arith.constant 1 : index
    %1944 = vector.load %arg6[%c4_1222, %c0_1223, %c1_1224] : memref<6x10x10xf32, #tpu.memory_space<vmem>>, vector<1x8x8xf32>
    %1945 = vector.shape_cast %1944 : vector<1x8x8xf32> to vector<8x8xf32>
    %c64_1225 = arith.constant 64 : index
    %1946 = memref.load %arg2[%c64_1225] : memref<81xf32, #tpu.memory_space<smem>>
    %1947 = vector.broadcast %1946 : f32 to vector<8x8xf32>
    %1948 = arith.mulf %1947, %1945 : vector<8x8xf32>
    %1949 = arith.addf %1943, %1948 : vector<8x8xf32>
    %c4_1226 = arith.constant 4 : index
    %c0_1227 = arith.constant 0 : index
    %c2_1228 = arith.constant 2 : index
    %1950 = vector.load %arg6[%c4_1226, %c0_1227, %c2_1228] : memref<6x10x10xf32, #tpu.memory_space<vmem>>, vector<1x8x8xf32>
    %1951 = vector.shape_cast %1950 : vector<1x8x8xf32> to vector<8x8xf32>
    %c65_1229 = arith.constant 65 : index
    %1952 = memref.load %arg2[%c65_1229] : memref<81xf32, #tpu.memory_space<smem>>
    %1953 = vector.broadcast %1952 : f32 to vector<8x8xf32>
    %1954 = arith.mulf %1953, %1951 : vector<8x8xf32>
    %1955 = arith.addf %1949, %1954 : vector<8x8xf32>
    %c4_1230 = arith.constant 4 : index
    %c1_1231 = arith.constant 1 : index
    %c0_1232 = arith.constant 0 : index
    %1956 = vector.load %arg6[%c4_1230, %c1_1231, %c0_1232] : memref<6x10x10xf32, #tpu.memory_space<vmem>>, vector<1x8x8xf32>
    %1957 = vector.shape_cast %1956 : vector<1x8x8xf32> to vector<8x8xf32>
    %c66_1233 = arith.constant 66 : index
    %1958 = memref.load %arg2[%c66_1233] : memref<81xf32, #tpu.memory_space<smem>>
    %1959 = vector.broadcast %1958 : f32 to vector<8x8xf32>
    %1960 = arith.mulf %1959, %1957 : vector<8x8xf32>
    %1961 = arith.addf %1955, %1960 : vector<8x8xf32>
    %c4_1234 = arith.constant 4 : index
    %c1_1235 = arith.constant 1 : index
    %c1_1236 = arith.constant 1 : index
    %1962 = vector.load %arg6[%c4_1234, %c1_1235, %c1_1236] : memref<6x10x10xf32, #tpu.memory_space<vmem>>, vector<1x8x8xf32>
    %1963 = vector.shape_cast %1962 : vector<1x8x8xf32> to vector<8x8xf32>
    %c67_1237 = arith.constant 67 : index
    %1964 = memref.load %arg2[%c67_1237] : memref<81xf32, #tpu.memory_space<smem>>
    %1965 = vector.broadcast %1964 : f32 to vector<8x8xf32>
    %1966 = arith.mulf %1965, %1963 : vector<8x8xf32>
    %1967 = arith.addf %1961, %1966 : vector<8x8xf32>
    %c4_1238 = arith.constant 4 : index
    %c1_1239 = arith.constant 1 : index
    %c2_1240 = arith.constant 2 : index
    %1968 = vector.load %arg6[%c4_1238, %c1_1239, %c2_1240] : memref<6x10x10xf32, #tpu.memory_space<vmem>>, vector<1x8x8xf32>
    %1969 = vector.shape_cast %1968 : vector<1x8x8xf32> to vector<8x8xf32>
    %c68_1241 = arith.constant 68 : index
    %1970 = memref.load %arg2[%c68_1241] : memref<81xf32, #tpu.memory_space<smem>>
    %1971 = vector.broadcast %1970 : f32 to vector<8x8xf32>
    %1972 = arith.mulf %1971, %1969 : vector<8x8xf32>
    %1973 = arith.addf %1967, %1972 : vector<8x8xf32>
    %c4_1242 = arith.constant 4 : index
    %c2_1243 = arith.constant 2 : index
    %c0_1244 = arith.constant 0 : index
    %1974 = vector.load %arg6[%c4_1242, %c2_1243, %c0_1244] : memref<6x10x10xf32, #tpu.memory_space<vmem>>, vector<1x8x8xf32>
    %1975 = vector.shape_cast %1974 : vector<1x8x8xf32> to vector<8x8xf32>
    %c69_1245 = arith.constant 69 : index
    %1976 = memref.load %arg2[%c69_1245] : memref<81xf32, #tpu.memory_space<smem>>
    %1977 = vector.broadcast %1976 : f32 to vector<8x8xf32>
    %1978 = arith.mulf %1977, %1975 : vector<8x8xf32>
    %1979 = arith.addf %1973, %1978 : vector<8x8xf32>
    %c4_1246 = arith.constant 4 : index
    %c2_1247 = arith.constant 2 : index
    %c1_1248 = arith.constant 1 : index
    %1980 = vector.load %arg6[%c4_1246, %c2_1247, %c1_1248] : memref<6x10x10xf32, #tpu.memory_space<vmem>>, vector<1x8x8xf32>
    %1981 = vector.shape_cast %1980 : vector<1x8x8xf32> to vector<8x8xf32>
    %c70_1249 = arith.constant 70 : index
    %1982 = memref.load %arg2[%c70_1249] : memref<81xf32, #tpu.memory_space<smem>>
    %1983 = vector.broadcast %1982 : f32 to vector<8x8xf32>
    %1984 = arith.mulf %1983, %1981 : vector<8x8xf32>
    %1985 = arith.addf %1979, %1984 : vector<8x8xf32>
    %c4_1250 = arith.constant 4 : index
    %c2_1251 = arith.constant 2 : index
    %c2_1252 = arith.constant 2 : index
    %1986 = vector.load %arg6[%c4_1250, %c2_1251, %c2_1252] : memref<6x10x10xf32, #tpu.memory_space<vmem>>, vector<1x8x8xf32>
    %1987 = vector.shape_cast %1986 : vector<1x8x8xf32> to vector<8x8xf32>
    %c71_1253 = arith.constant 71 : index
    %1988 = memref.load %arg2[%c71_1253] : memref<81xf32, #tpu.memory_space<smem>>
    %1989 = vector.broadcast %1988 : f32 to vector<8x8xf32>
    %1990 = arith.mulf %1989, %1987 : vector<8x8xf32>
    %1991 = arith.addf %1985, %1990 : vector<8x8xf32>
    %c5_1254 = arith.constant 5 : index
    %c0_1255 = arith.constant 0 : index
    %c0_1256 = arith.constant 0 : index
    %1992 = vector.load %arg6[%c5_1254, %c0_1255, %c0_1256] : memref<6x10x10xf32, #tpu.memory_space<vmem>>, vector<1x8x8xf32>
    %1993 = vector.shape_cast %1992 : vector<1x8x8xf32> to vector<8x8xf32>
    %c72_1257 = arith.constant 72 : index
    %1994 = memref.load %arg2[%c72_1257] : memref<81xf32, #tpu.memory_space<smem>>
    %1995 = vector.broadcast %1994 : f32 to vector<8x8xf32>
    %1996 = arith.mulf %1995, %1993 : vector<8x8xf32>
    %1997 = arith.addf %1991, %1996 : vector<8x8xf32>
    %c5_1258 = arith.constant 5 : index
    %c0_1259 = arith.constant 0 : index
    %c1_1260 = arith.constant 1 : index
    %1998 = vector.load %arg6[%c5_1258, %c0_1259, %c1_1260] : memref<6x10x10xf32, #tpu.memory_space<vmem>>, vector<1x8x8xf32>
    %1999 = vector.shape_cast %1998 : vector<1x8x8xf32> to vector<8x8xf32>
    %c73_1261 = arith.constant 73 : index
    %2000 = memref.load %arg2[%c73_1261] : memref<81xf32, #tpu.memory_space<smem>>
    %2001 = vector.broadcast %2000 : f32 to vector<8x8xf32>
    %2002 = arith.mulf %2001, %1999 : vector<8x8xf32>
    %2003 = arith.addf %1997, %2002 : vector<8x8xf32>
    %c5_1262 = arith.constant 5 : index
    %c0_1263 = arith.constant 0 : index
    %c2_1264 = arith.constant 2 : index
    %2004 = vector.load %arg6[%c5_1262, %c0_1263, %c2_1264] : memref<6x10x10xf32, #tpu.memory_space<vmem>>, vector<1x8x8xf32>
    %2005 = vector.shape_cast %2004 : vector<1x8x8xf32> to vector<8x8xf32>
    %c74_1265 = arith.constant 74 : index
    %2006 = memref.load %arg2[%c74_1265] : memref<81xf32, #tpu.memory_space<smem>>
    %2007 = vector.broadcast %2006 : f32 to vector<8x8xf32>
    %2008 = arith.mulf %2007, %2005 : vector<8x8xf32>
    %2009 = arith.addf %2003, %2008 : vector<8x8xf32>
    %c5_1266 = arith.constant 5 : index
    %c1_1267 = arith.constant 1 : index
    %c0_1268 = arith.constant 0 : index
    %2010 = vector.load %arg6[%c5_1266, %c1_1267, %c0_1268] : memref<6x10x10xf32, #tpu.memory_space<vmem>>, vector<1x8x8xf32>
    %2011 = vector.shape_cast %2010 : vector<1x8x8xf32> to vector<8x8xf32>
    %c75_1269 = arith.constant 75 : index
    %2012 = memref.load %arg2[%c75_1269] : memref<81xf32, #tpu.memory_space<smem>>
    %2013 = vector.broadcast %2012 : f32 to vector<8x8xf32>
    %2014 = arith.mulf %2013, %2011 : vector<8x8xf32>
    %2015 = arith.addf %2009, %2014 : vector<8x8xf32>
    %c5_1270 = arith.constant 5 : index
    %c1_1271 = arith.constant 1 : index
    %c1_1272 = arith.constant 1 : index
    %2016 = vector.load %arg6[%c5_1270, %c1_1271, %c1_1272] : memref<6x10x10xf32, #tpu.memory_space<vmem>>, vector<1x8x8xf32>
    %2017 = vector.shape_cast %2016 : vector<1x8x8xf32> to vector<8x8xf32>
    %c76_1273 = arith.constant 76 : index
    %2018 = memref.load %arg2[%c76_1273] : memref<81xf32, #tpu.memory_space<smem>>
    %2019 = vector.broadcast %2018 : f32 to vector<8x8xf32>
    %2020 = arith.mulf %2019, %2017 : vector<8x8xf32>
    %2021 = arith.addf %2015, %2020 : vector<8x8xf32>
    %c5_1274 = arith.constant 5 : index
    %c1_1275 = arith.constant 1 : index
    %c2_1276 = arith.constant 2 : index
    %2022 = vector.load %arg6[%c5_1274, %c1_1275, %c2_1276] : memref<6x10x10xf32, #tpu.memory_space<vmem>>, vector<1x8x8xf32>
    %2023 = vector.shape_cast %2022 : vector<1x8x8xf32> to vector<8x8xf32>
    %c77_1277 = arith.constant 77 : index
    %2024 = memref.load %arg2[%c77_1277] : memref<81xf32, #tpu.memory_space<smem>>
    %2025 = vector.broadcast %2024 : f32 to vector<8x8xf32>
    %2026 = arith.mulf %2025, %2023 : vector<8x8xf32>
    %2027 = arith.addf %2021, %2026 : vector<8x8xf32>
    %c5_1278 = arith.constant 5 : index
    %c2_1279 = arith.constant 2 : index
    %c0_1280 = arith.constant 0 : index
    %2028 = vector.load %arg6[%c5_1278, %c2_1279, %c0_1280] : memref<6x10x10xf32, #tpu.memory_space<vmem>>, vector<1x8x8xf32>
    %2029 = vector.shape_cast %2028 : vector<1x8x8xf32> to vector<8x8xf32>
    %c78_1281 = arith.constant 78 : index
    %2030 = memref.load %arg2[%c78_1281] : memref<81xf32, #tpu.memory_space<smem>>
    %2031 = vector.broadcast %2030 : f32 to vector<8x8xf32>
    %2032 = arith.mulf %2031, %2029 : vector<8x8xf32>
    %2033 = arith.addf %2027, %2032 : vector<8x8xf32>
    %c5_1282 = arith.constant 5 : index
    %c2_1283 = arith.constant 2 : index
    %c1_1284 = arith.constant 1 : index
    %2034 = vector.load %arg6[%c5_1282, %c2_1283, %c1_1284] : memref<6x10x10xf32, #tpu.memory_space<vmem>>, vector<1x8x8xf32>
    %2035 = vector.shape_cast %2034 : vector<1x8x8xf32> to vector<8x8xf32>
    %c79_1285 = arith.constant 79 : index
    %2036 = memref.load %arg2[%c79_1285] : memref<81xf32, #tpu.memory_space<smem>>
    %2037 = vector.broadcast %2036 : f32 to vector<8x8xf32>
    %2038 = arith.mulf %2037, %2035 : vector<8x8xf32>
    %2039 = arith.addf %2033, %2038 : vector<8x8xf32>
    %c5_1286 = arith.constant 5 : index
    %c2_1287 = arith.constant 2 : index
    %c2_1288 = arith.constant 2 : index
    %2040 = vector.load %arg6[%c5_1286, %c2_1287, %c2_1288] : memref<6x10x10xf32, #tpu.memory_space<vmem>>, vector<1x8x8xf32>
    %2041 = vector.shape_cast %2040 : vector<1x8x8xf32> to vector<8x8xf32>
    %c80_1289 = arith.constant 80 : index
    %2042 = memref.load %arg2[%c80_1289] : memref<81xf32, #tpu.memory_space<smem>>
    %2043 = vector.broadcast %2042 : f32 to vector<8x8xf32>
    %2044 = arith.mulf %2043, %2041 : vector<8x8xf32>
    %2045 = arith.addf %2039, %2044 : vector<8x8xf32>
    %c2_1290 = arith.constant 2 : index
    %2046 = memref.load %arg3[%c2_1290] : memref<3xf32, #tpu.memory_space<smem>>
    %2047 = vector.broadcast %2046 : f32 to vector<8x8xf32>
    %2048 = arith.addf %2045, %2047 : vector<8x8xf32>
    %cst_1291 = arith.constant 0.000000e+00 : f32
    %2049 = vector.broadcast %cst_1291 : f32 to vector<8x8xf32>
    %2050 = arith.maximumf %2048, %2049 : vector<8x8xf32>
    %c1_1292 = arith.constant 1 : index
    %c2_1293 = arith.constant 2 : index
    %c0_1294 = arith.constant 0 : index
    %c0_1295 = arith.constant 0 : index
    %2051 = vector.load %arg5[%c1_1292, %c2_1293, %c0_1294, %c0_1295] : memref<2x3x8x8xf32, #tpu.memory_space<vmem>>, vector<1x1x8x8xf32>
    %2052 = vector.shape_cast %2051 : vector<1x1x8x8xf32> to vector<8x8xf32>
    %2053 = vector.shape_cast %2050 : vector<8x8xf32> to vector<1x1x8x8xf32>
    tpu.vector_store %arg5[%c1_1292, %c2_1293, %c0_1294, %c0_1295], %2053 {strides = array<i32>} : memref<2x3x8x8xf32, #tpu.memory_space<vmem>>, vector<1x1x8x8xf32>,
    return
  }
}

</mosaic_0001>

<llo_original>
// kernel: model_forward.1
$region0: #{model_forward.1}
  #allocation0 [shape = 'u32[]', space=smem, size = 0x4, offset = 0x4, fixed_abs, tag = 'smem constant byte address 0x4 - core index']
  #allocation1 [shape = 'u32[144,128]{1,0:T(1,128)}', space=vmem, size = 0x12000, scoped, tag = 'internal scratch']
  #allocation2 [shape = 'f32[6,10,10]{2,1,0:T(8,128)}', space=vmem, size = 0xc000, scoped, tag = 'scratch operand']
  %s0 = inlined_call_operand.vmem [shape: f32[81], index: 0, kind: input, shape index: {}]
  %s1 = inlined_call_operand.vmem [shape: f32[3], index: 1, kind: input, shape index: {}]
  %s2 = inlined_call_operand.vmem [shape: f32[81], index: 2, kind: input, shape index: {}]
  %s3 = inlined_call_operand.vmem [shape: f32[3], index: 3, kind: input, shape index: {}]
  %s4 = inlined_call_operand.vmem [shape: f32[24,9,9], index: 4, kind: input, shape index: {}]
  %s5 = inlined_call_operand.hbm [shape: f32[2,3,8,8], index: 5, kind: output, shape index: {}]
  %s6 = sld [smem:[#allocation0]]
  $region46: #{model_forward.1} parent=0
    _
  %s8 = ssub.s32 1, %s6
  %s9 = scalar_select 0, %s8, %s6
  $region1: #{model_forward.1} parent=0
    #allocation3 [shape = 'u8[512]{0}', space=smem, size = 0x200, scoped, tag = 'input window, operand 0, single buffered']
    #allocation4 [shape = 's32[1]{0}', space=sflag, size = 0x4, scoped, tag = 'scoped memory for model_forward.1']
    #allocation5 [shape = 's32[1]{0}', space=sflag, size = 0x4, scoped, tag = 'scoped memory for model_forward.1']
    #allocation6 [shape = 'u8[512]{0}', space=smem, size = 0x200, scoped, tag = 'input window, operand 1, single buffered']
    #allocation7 [shape = 's32[1]{0}', space=sflag, size = 0x4, scoped, tag = 'scoped memory for model_forward.1']
    #allocation8 [shape = 'u8[512]{0}', space=smem, size = 0x200, scoped, tag = 'input window, operand 2, single buffered']
    #allocation9 [shape = 'u8[512]{0}', space=smem, size = 0x200, scoped, tag = 'input window, operand 3, single buffered']
    #allocation10 [shape = 's32[1]{0}', space=sflag, size = 0x4, scoped, tag = 'scoped memory for model_forward.1']
    #allocation11 [shape = 'u8[24576]{0}', space=vmem, size = 0x6000, scoped, tag = 'output window, operand 0, single buffered']
    %10 = vsyncpa [#allocation5], 0
    %11 = vsyncpa [#allocation7], 0
    %12 = vsyncpa [#allocation10], 0
    %13 = vsyncpa [#allocation4], 0
    // Predicated region
    $region2: #{model_forward.1} parent=1 // pred_check
      _
    $region3: #{model_forward.1} parent=1 // pred_check_branch
      %15 = sbr.rel (0) target = $region5
    $region4: #{model_forward.1} parent=1 // pred_region
      %s17 = ssub.s32 16, 16
      %18 = vsyncadd [#allocation5], %s17
      %s20 = sshll.u32 %s0, 4
      %s21 = int_to_ptr.vmem [resolvable:$true] %s20
      %23 = dma.vmem_to_smem %s21, 16, [#allocation3], [#allocation5]
    $region5: #{model_forward.1} parent=1 // pred_fallthru
      _
    // Predicated region
    $region6: #{model_forward.1} parent=1 // pred_check
      _
    $region7: #{model_forward.1} parent=1 // pred_check_branch
      %25 = sbr.rel (0) target = $region9
    $region8: #{model_forward.1} parent=1 // pred_region
      %s27 = ssub.s32 16, 16
      %28 = vsyncadd [#allocation7], %s27
      %s30 = sshll.u32 %s1, 4
      %s31 = int_to_ptr.vmem [resolvable:$true] %s30
      %33 = dma.vmem_to_smem %s31, 16, [#allocation6], [#allocation7]
    $region9: #{model_forward.1} parent=1 // pred_fallthru
      _
    // Predicated region
    $region10: #{model_forward.1} parent=1 // pred_check
      _
    $region11: #{model_forward.1} parent=1 // pred_check_branch
      %35 = sbr.rel (0) target = $region13
    $region12: #{model_forward.1} parent=1 // pred_region
      %s37 = ssub.s32 16, 16
      %38 = vsyncadd [#allocation7], %s37
      %s40 = sshll.u32 %s2, 4
      %s41 = int_to_ptr.vmem [resolvable:$true] %s40
      %43 = dma.vmem_to_smem %s41, 16, [#allocation8], [#allocation7]
    $region13: #{model_forward.1} parent=1 // pred_fallthru
      _
    // Predicated region
    $region14: #{model_forward.1} parent=1 // pred_check
      _
    $region15: #{model_forward.1} parent=1 // pred_check_branch
      %45 = sbr.rel (0) target = $region17
    $region16: #{model_forward.1} parent=1 // pred_region
      %s47 = ssub.s32 16, 16
      %48 = vsyncadd [#allocation10], %s47
      %s50 = sshll.u32 %s3, 4
      %s51 = int_to_ptr.vmem [resolvable:$true] %s50
      %53 = dma.vmem_to_smem %s51, 16, [#allocation9], [#allocation10]
    $region17: #{model_forward.1} parent=1 // pred_fallthru
      _
    // Predicated region
    $region18: #{model_forward.1} parent=1 // pred_check
      _
    $region19: #{model_forward.1} parent=1 // pred_check_branch
      %55 = sbr.rel (0) target = $region21
    $region20: #{model_forward.1} parent=1 // pred_region
      _
    $region21: #{model_forward.1} parent=1 // pred_fallthru
      _
    // Predicated region
    $region22: #{model_forward.1} parent=1 // pred_check
      _
    $region23: #{model_forward.1} parent=1 // pred_check_branch
      %57 = sbr.rel (0) target = $region25
    $region24: #{model_forward.1} parent=1 // pred_region
      %58 = dma.done [#allocation5], 16
    $region25: #{model_forward.1} parent=1 // pred_fallthru
      _
    // Predicated region
    $region26: #{model_forward.1} parent=1 // pred_check
      _
    $region27: #{model_forward.1} parent=1 // pred_check_branch
      %60 = sbr.rel (0) target = $region29
    $region28: #{model_forward.1} parent=1 // pred_region
      %61 = dma.done [#allocation7], 16
    $region29: #{model_forward.1} parent=1 // pred_fallthru
      _
    // Predicated region
    $region30: #{model_forward.1} parent=1 // pred_check
      _
    $region31: #{model_forward.1} parent=1 // pred_check_branch
      %63 = sbr.rel (0) target = $region33
    $region32: #{model_forward.1} parent=1 // pred_region
      %64 = dma.done [#allocation7], 16
    $region33: #{model_forward.1} parent=1 // pred_fallthru
      _
    // Predicated region
    $region34: #{model_forward.1} parent=1 // pred_check
      _
    $region35: #{model_forward.1} parent=1 // pred_check_branch
      %66 = sbr.rel (0) target = $region37
    $region36: #{model_forward.1} parent=1 // pred_region
      %67 = dma.done [#allocation10], 16
    $region37: #{model_forward.1} parent=1 // pred_fallthru
      _
    %68 = sfence
    %vm69 = vcmask 80896
    %70 = vst.msk [vmem:[#allocation2] sm:$0xff] %vm69, 0.0
    %vm71 = vcmask 74752
    %72 = vst.msk [vmem:[#allocation2 + $0x8] sm:$0x3] %vm71, 0.0
    %73 = vst.msk [vmem:[#allocation2 + $0x10] sm:$0xff] %vm69, 0.0
    %74 = vst.msk [vmem:[#allocation2 + $0x18] sm:$0x3] %vm71, 0.0
    %75 = vst.msk [vmem:[#allocation2 + $0x20] sm:$0xff] %vm69, 0.0
    %76 = vst.msk [vmem:[#allocation2 + $0x28] sm:$0x3] %vm71, 0.0
    %77 = vst.msk [vmem:[#allocation2 + $0x30] sm:$0xff] %vm69, 0.0
    %78 = vst.msk [vmem:[#allocation2 + $0x38] sm:$0x3] %vm71, 0.0
    %79 = vst.msk [vmem:[#allocation2 + $0x40] sm:$0xff] %vm69, 0.0
    %80 = vst.msk [vmem:[#allocation2 + $0x48] sm:$0x3] %vm71, 0.0
    %81 = vst.msk [vmem:[#allocation2 + $0x50] sm:$0xff] %vm69, 0.0
    %82 = vst.msk [vmem:[#allocation2 + $0x58] sm:$0x3] %vm71, 0.0
    %v83 = vld [vmem:[%s4] sm:$0xff]
    %s84 = sld [smem:[#allocation3]]
    %v85 = vstv %s84
    %v86 = vmul.f32 %v85, %v83
    %v87 = vadd.f32 %v86, 0.0
    %s88 = scalar_lea.vmem %s4, 96
    %v89 = vld [vmem:[%s88] sm:$0xff]
    %s90 = sld [smem:[#allocation3 + $0x1]]
    %v91 = vstv %s90
    %v92 = vmul.f32 %v91, %v89
    %v93 = vadd.f32 %v87, %v92
    %s94 = sld [smem:[#allocation3 + $0x2]]
    %v95 = vstv %s94
    %v96 = vmul.f32 %v95, %v83
    %98 = vrot.lane.b32.xlu0 %v96, 127
    %v99 = vpop.permute.xlu0 %98
    %v101 = vadd.f32 %v93, %v99
    %s102 = scalar_lea.vmem %s4, 192
    %v103 = vld [vmem:[%s102] sm:$0xff]
    %s104 = sld [smem:[#allocation3 + $0x3]]
    %v105 = vstv %s104
    %v106 = vmul.f32 %v105, %v103
    %v107 = vadd.f32 %v101, %v106
    %s108 = scalar_lea.vmem %s4, 288
    %v109 = vld [vmem:[%s108] sm:$0xff]
    %s110 = sld [smem:[#allocation3 + $0x4]]
    %v111 = vstv %s110
    %v112 = vmul.f32 %v111, %v109
    %v113 = vadd.f32 %v107, %v112
    %s114 = sld [smem:[#allocation3 + $0x5]]
    %v115 = vstv %s114
    %v116 = vmul.f32 %v115, %v103
    %118 = vrot.lane.b32.xlu0 %v116, 127
    %v119 = vpop.permute.xlu0 %118
    %v121 = vadd.f32 %v113, %v119
    %v122 = vld [vmem:[%s4 + $0x1] sm:$0xff]
    %s123 = sld [smem:[#allocation3 + $0x6]]
    %v124 = vstv %s123
    %v125 = vmul.f32 %v124, %v122
    %v126 = vadd.f32 %v121, %v125
    %v127 = vld [vmem:[%s88 + $0x1] sm:$0xff]
    %s128 = sld [smem:[#allocation3 + $0x7]]
    %v129 = vstv %s128
    %v130 = vmul.f32 %v129, %v127
    %v131 = vadd.f32 %v126, %v130
    %s132 = sld [smem:[#allocation3 + $0x8]]
    %v133 = vstv %s132
    %v134 = vmul.f32 %v133, %v122
    %136 = vrot.lane.b32.xlu0 %v134, 127
    %v137 = vpop.permute.xlu0 %136
    %v139 = vadd.f32 %v131, %v137
    %s140 = scalar_lea.vmem %s4, 16
    %v141 = vld [vmem:[%s140] sm:$0xff]
    %s142 = sld [smem:[#allocation3 + $0x9]]
    %v143 = vstv %s142
    %v144 = vmul.f32 %v143, %v141
    %v145 = vadd.f32 %v139, %v144
    %s146 = scalar_lea.vmem %s4, 112
    %v147 = vld [vmem:[%s146] sm:$0xff]
    %s148 = sld [smem:[#allocation3 + $0xa]]
    %v149 = vstv %s148
    %v150 = vmul.f32 %v149, %v147
    %v151 = vadd.f32 %v145, %v150
    %s152 = sld [smem:[#allocation3 + $0xb]]
    %v153 = vstv %s152
    %v154 = vmul.f32 %v153, %v141
    %156 = vrot.lane.b32.xlu0 %v154, 127
    %v157 = vpop.permute.xlu0 %156
    %v159 = vadd.f32 %v151, %v157
    %s160 = scalar_lea.vmem %s4, 208
    %v161 = vld [vmem:[%s160] sm:$0xff]
    %s162 = sld [smem:[#allocation3 + $0xc]]
    %v163 = vstv %s162
    %v164 = vmul.f32 %v163, %v161
    %v165 = vadd.f32 %v159, %v164
    %s166 = scalar_lea.vmem %s4, 304
    %v167 = vld [vmem:[%s166] sm:$0xff]
    %s168 = sld [smem:[#allocation3 + $0xd]]
    %v169 = vstv %s168
    %v170 = vmul.f32 %v169, %v167
    %v171 = vadd.f32 %v165, %v170
    %s172 = sld [smem:[#allocation3 + $0xe]]
    %v173 = vstv %s172
    %v174 = vmul.f32 %v173, %v161
    %176 = vrot.lane.b32.xlu0 %v174, 127
    %v177 = vpop.permute.xlu0 %176
    %v179 = vadd.f32 %v171, %v177
    %v180 = vld [vmem:[%s140 + $0x1] sm:$0xff]
    %s181 = sld [smem:[#allocation3 + $0xf]]
    %v182 = vstv %s181
    %v183 = vmul.f32 %v182, %v180
    %v184 = vadd.f32 %v179, %v183
    %v185 = vld [vmem:[%s146 + $0x1] sm:$0xff]
    %s186 = sld [smem:[#allocation3 + $0x10]]
    %v187 = vstv %s186
    %v188 = vmul.f32 %v187, %v185
    %v189 = vadd.f32 %v184, %v188
    %s190 = sld [smem:[#allocation3 + $0x11]]
    %v191 = vstv %s190
    %v192 = vmul.f32 %v191, %v180
    %194 = vrot.lane.b32.xlu0 %v192, 127
    %v195 = vpop.permute.xlu0 %194
    %v197 = vadd.f32 %v189, %v195
    %s198 = scalar_lea.vmem %s4, 32
    %v199 = vld [vmem:[%s198] sm:$0xff]
    %s200 = sld [smem:[#allocation3 + $0x12]]
    %v201 = vstv %s200
    %v202 = vmul.f32 %v201, %v199
    %v203 = vadd.f32 %v197, %v202
    %s204 = scalar_lea.vmem %s4, 128
    %v205 = vld [vmem:[%s204] sm:$0xff]
    %s206 = sld [smem:[#allocation3 + $0x13]]
    %v207 = vstv %s206
    %v208 = vmul.f32 %v207, %v205
    %v209 = vadd.f32 %v203, %v208
    %s210 = sld [smem:[#allocation3 + $0x14]]
    %v211 = vstv %s210
    %v212 = vmul.f32 %v211, %v199
    %214 = vrot.lane.b32.xlu0 %v212, 127
    %v215 = vpop.permute.xlu0 %214
    %v217 = vadd.f32 %v209, %v215
    %s218 = scalar_lea.vmem %s4, 224
    %v219 = vld [vmem:[%s218] sm:$0xff]
    %s220 = sld [smem:[#allocation3 + $0x15]]
    %v221 = vstv %s220
    %v222 = vmul.f32 %v221, %v219
    %v223 = vadd.f32 %v217, %v222
    %s224 = scalar_lea.vmem %s4, 320
    %v225 = vld [vmem:[%s224] sm:$0xff]
    %s226 = sld [smem:[#allocation3 + $0x16]]
    %v227 = vstv %s226
    %v228 = vmul.f32 %v227, %v225
    %v229 = vadd.f32 %v223, %v228
    %s230 = sld [smem:[#allocation3 + $0x17]]
    %v231 = vstv %s230
    %v232 = vmul.f32 %v231, %v219
    %234 = vrot.lane.b32.xlu0 %v232, 127
    %v235 = vpop.permute.xlu0 %234
    %v237 = vadd.f32 %v229, %v235
    %v238 = vld [vmem:[%s198 + $0x1] sm:$0xff]
    %s239 = sld [smem:[#allocation3 + $0x18]]
    %v240 = vstv %s239
    %v241 = vmul.f32 %v240, %v238
    %v242 = vadd.f32 %v237, %v241
    %v243 = vld [vmem:[%s204 + $0x1] sm:$0xff]
    %s244 = sld [smem:[#allocation3 + $0x19]]
    %v245 = vstv %s244
    %v246 = vmul.f32 %v245, %v243
    %v247 = vadd.f32 %v242, %v246
    %s248 = sld [smem:[#allocation3 + $0x1a]]
    %v249 = vstv %s248
    %v250 = vmul.f32 %v249, %v238
    %252 = vrot.lane.b32.xlu0 %v250, 127
    %v253 = vpop.permute.xlu0 %252
    %v255 = vadd.f32 %v247, %v253
    %s256 = sld [smem:[#allocation6]]
    %v257 = vstv %s256
    %v258 = vadd.f32 %v255, %v257
    %v259 = vmax.f32 %v258, 0.0
    %261 = vrot.lane.b32.xlu0 %v259, 1
    %v262 = vpop.permute.xlu0 %261
    %vm264 = vcmask 72712
    %265 = vst.msk [vmem:[#allocation2 + $0x1] sm:$0xff] %vm264, %v262
    %v266 = vld [vmem:[%s4] sm:$0xff]
    %s267 = sld [smem:[#allocation3 + $0x1b]]
    %v268 = vstv %s267
    %v269 = vmul.f32 %v268, %v266
    %v270 = vadd.f32 %v269, 0.0
    %v271 = vld [vmem:[%s88] sm:$0xff]
    %s272 = sld [smem:[#allocation3 + $0x1c]]
    %v273 = vstv %s272
    %v274 = vmul.f32 %v273, %v271
    %v275 = vadd.f32 %v270, %v274
    %s276 = sld [smem:[#allocation3 + $0x1d]]
    %v277 = vstv %s276
    %v278 = vmul.f32 %v277, %v266
    %280 = vrot.lane.b32.xlu0 %v278, 127
    %v281 = vpop.permute.xlu0 %280
    %v283 = vadd.f32 %v275, %v281
    %v284 = vld [vmem:[%s102] sm:$0xff]
    %s285 = sld [smem:[#allocation3 + $0x1e]]
    %v286 = vstv %s285
    %v287 = vmul.f32 %v286, %v284
    %v288 = vadd.f32 %v283, %v287
    %v289 = vld [vmem:[%s108] sm:$0xff]
    %s290 = sld [smem:[#allocation3 + $0x1f]]
    %v291 = vstv %s290
    %v292 = vmul.f32 %v291, %v289
    %v293 = vadd.f32 %v288, %v292
    %s294 = sld [smem:[#allocation3 + $0x20]]
    %v295 = vstv %s294
    %v296 = vmul.f32 %v295, %v284
    %298 = vrot.lane.b32.xlu0 %v296, 127
    %v299 = vpop.permute.xlu0 %298
    %v301 = vadd.f32 %v293, %v299
    %v302 = vld [vmem:[%s4 + $0x1] sm:$0xff]
    %s303 = sld [smem:[#allocation3 + $0x21]]
    %v304 = vstv %s303
    %v305 = vmul.f32 %v304, %v302
    %v306 = vadd.f32 %v301, %v305
    %v307 = vld [vmem:[%s88 + $0x1] sm:$0xff]
    %s308 = sld [smem:[#allocation3 + $0x22]]
    %v309 = vstv %s308
    %v310 = vmul.f32 %v309, %v307
    %v311 = vadd.f32 %v306, %v310
    %s312 = sld [smem:[#allocation3 + $0x23]]
    %v313 = vstv %s312
    %v314 = vmul.f32 %v313, %v302
    %316 = vrot.lane.b32.xlu0 %v314, 127
    %v317 = vpop.permute.xlu0 %316
    %v319 = vadd.f32 %v311, %v317
    %v320 = vld [vmem:[%s140] sm:$0xff]
    %s321 = sld [smem:[#allocation3 + $0x24]]
    %v322 = vstv %s321
    %v323 = vmul.f32 %v322, %v320
    %v324 = vadd.f32 %v319, %v323
    %v325 = vld [vmem:[%s146] sm:$0xff]
    %s326 = sld [smem:[#allocation3 + $0x25]]
    %v327 = vstv %s326
    %v328 = vmul.f32 %v327, %v325
    %v329 = vadd.f32 %v324, %v328
    %s330 = sld [smem:[#allocation3 + $0x26]]
    %v331 = vstv %s330
    %v332 = vmul.f32 %v331, %v320
    %334 = vrot.lane.b32.xlu0 %v332, 127
    %v335 = vpop.permute.xlu0 %334
    %v337 = vadd.f32 %v329, %v335
    %v338 = vld [vmem:[%s160] sm:$0xff]
    %s339 = sld [smem:[#allocation3 + $0x27]]
    %v340 = vstv %s339
    %v341 = vmul.f32 %v340, %v338
    %v342 = vadd.f32 %v337, %v341
    %v343 = vld [vmem:[%s166] sm:$0xff]
    %s344 = sld [smem:[#allocation3 + $0x28]]
    %v345 = vstv %s344
    %v346 = vmul.f32 %v345, %v343
    %v347 = vadd.f32 %v342, %v346
    %s348 = sld [smem:[#allocation3 + $0x29]]
    %v349 = vstv %s348
    %v350 = vmul.f32 %v349, %v338
    %352 = vrot.lane.b32.xlu0 %v350, 127
    %v353 = vpop.permute.xlu0 %352
    %v355 = vadd.f32 %v347, %v353
    %v356 = vld [vmem:[%s140 + $0x1] sm:$0xff]
    %s357 = sld [smem:[#allocation3 + $0x2a]]
    %v358 = vstv %s357
    %v359 = vmul.f32 %v358, %v356
    %v360 = vadd.f32 %v355, %v359
    %v361 = vld [vmem:[%s146 + $0x1] sm:$0xff]
    %s362 = sld [smem:[#allocation3 + $0x2b]]
    %v363 = vstv %s362
    %v364 = vmul.f32 %v363, %v361
    %v365 = vadd.f32 %v360, %v364
    %s366 = sld [smem:[#allocation3 + $0x2c]]
    %v367 = vstv %s366
    %v368 = vmul.f32 %v367, %v356
    %370 = vrot.lane.b32.xlu0 %v368, 127
    %v371 = vpop.permute.xlu0 %370
    %v373 = vadd.f32 %v365, %v371
    %v374 = vld [vmem:[%s198] sm:$0xff]
    %s375 = sld [smem:[#allocation3 + $0x2d]]
    %v376 = vstv %s375
    %v377 = vmul.f32 %v376, %v374
    %v378 = vadd.f32 %v373, %v377
    %v379 = vld [vmem:[%s204] sm:$0xff]
    %s380 = sld [smem:[#allocation3 + $0x2e]]
    %v381 = vstv %s380
    %v382 = vmul.f32 %v381, %v379
    %v383 = vadd.f32 %v378, %v382
    %s384 = sld [smem:[#allocation3 + $0x2f]]
    %v385 = vstv %s384
    %v386 = vmul.f32 %v385, %v374
    %388 = vrot.lane.b32.xlu0 %v386, 127
    %v389 = vpop.permute.xlu0 %388
    %v391 = vadd.f32 %v383, %v389
    %v392 = vld [vmem:[%s218] sm:$0xff]
    %s393 = sld [smem:[#allocation3 + $0x30]]
    %v394 = vstv %s393
    %v395 = vmul.f32 %v394, %v392
    %v396 = vadd.f32 %v391, %v395
    %v397 = vld [vmem:[%s224] sm:$0xff]
    %s398 = sld [smem:[#allocation3 + $0x31]]
    %v399 = vstv %s398
    %v400 = vmul.f32 %v399, %v397
    %v401 = vadd.f32 %v396, %v400
    %s402 = sld [smem:[#allocation3 + $0x32]]
    %v403 = vstv %s402
    %v404 = vmul.f32 %v403, %v392
    %406 = vrot.lane.b32.xlu0 %v404, 127
    %v407 = vpop.permute.xlu0 %406
    %v409 = vadd.f32 %v401, %v407
    %v410 = vld [vmem:[%s198 + $0x1] sm:$0xff]
    %s411 = sld [smem:[#allocation3 + $0x33]]
    %v412 = vstv %s411
    %v413 = vmul.f32 %v412, %v410
    %v414 = vadd.f32 %v409, %v413
    %v415 = vld [vmem:[%s204 + $0x1] sm:$0xff]
    %s416 = sld [smem:[#allocation3 + $0x34]]
    %v417 = vstv %s416
    %v418 = vmul.f32 %v417, %v415
    %v419 = vadd.f32 %v414, %v418
    %s420 = sld [smem:[#allocation3 + $0x35]]
    %v421 = vstv %s420
    %v422 = vmul.f32 %v421, %v410
    %424 = vrot.lane.b32.xlu0 %v422, 127
    %v425 = vpop.permute.xlu0 %424
    %v427 = vadd.f32 %v419, %v425
    %s428 = sld [smem:[#allocation6 + $0x1]]
    %v429 = vstv %s428
    %v430 = vadd.f32 %v427, %v429
    %v431 = vmax.f32 %v430, 0.0
    %433 = vrot.lane.b32.xlu0 %v431, 1
    %v434 = vpop.permute.xlu0 %433
    %s436 = scalar_lea.vmem [#allocation2], 16
    %437 = vst.msk [vmem:[%s436 + $0x1] sm:$0xff] %vm264, %v434
    %v438 = vld [vmem:[%s4] sm:$0xff]
    %s439 = sld [smem:[#allocation3 + $0x36]]
    %v440 = vstv %s439
    %v441 = vmul.f32 %v440, %v438
    %v442 = vadd.f32 %v441, 0.0
    %v443 = vld [vmem:[%s88] sm:$0xff]
    %s444 = sld [smem:[#allocation3 + $0x37]]
    %v445 = vstv %s444
    %v446 = vmul.f32 %v445, %v443
    %v447 = vadd.f32 %v442, %v446
    %s448 = sld [smem:[#allocation3 + $0x38]]
    %v449 = vstv %s448
    %v450 = vmul.f32 %v449, %v438
    %452 = vrot.lane.b32.xlu0 %v450, 127
    %v453 = vpop.permute.xlu0 %452
    %v455 = vadd.f32 %v447, %v453
    %v456 = vld [vmem:[%s102] sm:$0xff]
    %s457 = sld [smem:[#allocation3 + $0x39]]
    %v458 = vstv %s457
    %v459 = vmul.f32 %v458, %v456
    %v460 = vadd.f32 %v455, %v459
    %v461 = vld [vmem:[%s108] sm:$0xff]
    %s462 = sld [smem:[#allocation3 + $0x3a]]
    %v463 = vstv %s462
    %v464 = vmul.f32 %v463, %v461
    %v465 = vadd.f32 %v460, %v464
    %s466 = sld [smem:[#allocation3 + $0x3b]]
    %v467 = vstv %s466
    %v468 = vmul.f32 %v467, %v456
    %470 = vrot.lane.b32.xlu0 %v468, 127
    %v471 = vpop.permute.xlu0 %470
    %v473 = vadd.f32 %v465, %v471
    %v474 = vld [vmem:[%s4 + $0x1] sm:$0xff]
    %s475 = sld [smem:[#allocation3 + $0x3c]]
    %v476 = vstv %s475
    %v477 = vmul.f32 %v476, %v474
    %v478 = vadd.f32 %v473, %v477
    %v479 = vld [vmem:[%s88 + $0x1] sm:$0xff]
    %s480 = sld [smem:[#allocation3 + $0x3d]]
    %v481 = vstv %s480
    %v482 = vmul.f32 %v481, %v479
    %v483 = vadd.f32 %v478, %v482
    %s484 = sld [smem:[#allocation3 + $0x3e]]
    %v485 = vstv %s484
    %v486 = vmul.f32 %v485, %v474
    %488 = vrot.lane.b32.xlu0 %v486, 127
    %v489 = vpop.permute.xlu0 %488
    %v491 = vadd.f32 %v483, %v489
    %v492 = vld [vmem:[%s140] sm:$0xff]
    %s493 = sld [smem:[#allocation3 + $0x3f]]
    %v494 = vstv %s493
    %v495 = vmul.f32 %v494, %v492
    %v496 = vadd.f32 %v491, %v495
    %v497 = vld [vmem:[%s146] sm:$0xff]
    %s498 = sld [smem:[#allocation3 + $0x40]]
    %v499 = vstv %s498
    %v500 = vmul.f32 %v499, %v497
    %v501 = vadd.f32 %v496, %v500
    %s502 = sld [smem:[#allocation3 + $0x41]]
    %v503 = vstv %s502
    %v504 = vmul.f32 %v503, %v492
    %506 = vrot.lane.b32.xlu0 %v504, 127
    %v507 = vpop.permute.xlu0 %506
    %v509 = vadd.f32 %v501, %v507
    %v510 = vld [vmem:[%s160] sm:$0xff]
    %s511 = sld [smem:[#allocation3 + $0x42]]
    %v512 = vstv %s511
    %v513 = vmul.f32 %v512, %v510
    %v514 = vadd.f32 %v509, %v513
    %v515 = vld [vmem:[%s166] sm:$0xff]
    %s516 = sld [smem:[#allocation3 + $0x43]]
    %v517 = vstv %s516
    %v518 = vmul.f32 %v517, %v515
    %v519 = vadd.f32 %v514, %v518
    %s520 = sld [smem:[#allocation3 + $0x44]]
    %v521 = vstv %s520
    %v522 = vmul.f32 %v521, %v510
    %524 = vrot.lane.b32.xlu0 %v522, 127
    %v525 = vpop.permute.xlu0 %524
    %v527 = vadd.f32 %v519, %v525
    %v528 = vld [vmem:[%s140 + $0x1] sm:$0xff]
    %s529 = sld [smem:[#allocation3 + $0x45]]
    %v530 = vstv %s529
    %v531 = vmul.f32 %v530, %v528
    %v532 = vadd.f32 %v527, %v531
    %v533 = vld [vmem:[%s146 + $0x1] sm:$0xff]
    %s534 = sld [smem:[#allocation3 + $0x46]]
    %v535 = vstv %s534
    %v536 = vmul.f32 %v535, %v533
    %v537 = vadd.f32 %v532, %v536
    %s538 = sld [smem:[#allocation3 + $0x47]]
    %v539 = vstv %s538
    %v540 = vmul.f32 %v539, %v528
    %542 = vrot.lane.b32.xlu0 %v540, 127
    %v543 = vpop.permute.xlu0 %542
    %v545 = vadd.f32 %v537, %v543
    %v546 = vld [vmem:[%s198] sm:$0xff]
    %s547 = sld [smem:[#allocation3 + $0x48]]
    %v548 = vstv %s547
    %v549 = vmul.f32 %v548, %v546
    %v550 = vadd.f32 %v545, %v549
    %v551 = vld [vmem:[%s204] sm:$0xff]
    %s552 = sld [smem:[#allocation3 + $0x49]]
    %v553 = vstv %s552
    %v554 = vmul.f32 %v553, %v551
    %v555 = vadd.f32 %v550, %v554
    %s556 = sld [smem:[#allocation3 + $0x4a]]
    %v557 = vstv %s556
    %v558 = vmul.f32 %v557, %v546
    %560 = vrot.lane.b32.xlu0 %v558, 127
    %v561 = vpop.permute.xlu0 %560
    %v563 = vadd.f32 %v555, %v561
    %v564 = vld [vmem:[%s218] sm:$0xff]
    %s565 = sld [smem:[#allocation3 + $0x4b]]
    %v566 = vstv %s565
    %v567 = vmul.f32 %v566, %v564
    %v568 = vadd.f32 %v563, %v567
    %v569 = vld [vmem:[%s224] sm:$0xff]
    %s570 = sld [smem:[#allocation3 + $0x4c]]
    %v571 = vstv %s570
    %v572 = vmul.f32 %v571, %v569
    %v573 = vadd.f32 %v568, %v572
    %s574 = sld [smem:[#allocation3 + $0x4d]]
    %v575 = vstv %s574
    %v576 = vmul.f32 %v575, %v564
    %578 = vrot.lane.b32.xlu0 %v576, 127
    %v579 = vpop.permute.xlu0 %578
    %v581 = vadd.f32 %v573, %v579
    %v582 = vld [vmem:[%s198 + $0x1] sm:$0xff]
    %s583 = sld [smem:[#allocation3 + $0x4e]]
    %v584 = vstv %s583
    %v585 = vmul.f32 %v584, %v582
    %v586 = vadd.f32 %v581, %v585
    %v587 = vld [vmem:[%s204 + $0x1] sm:$0xff]
    %s588 = sld [smem:[#allocation3 + $0x4f]]
    %v589 = vstv %s588
    %v590 = vmul.f32 %v589, %v587
    %v591 = vadd.f32 %v586, %v590
    %s592 = sld [smem:[#allocation3 + $0x50]]
    %v593 = vstv %s592
    %v594 = vmul.f32 %v593, %v582
    %596 = vrot.lane.b32.xlu0 %v594, 127
    %v597 = vpop.permute.xlu0 %596
    %v599 = vadd.f32 %v591, %v597
    %s600 = sld [smem:[#allocation6 + $0x2]]
    %v601 = vstv %s600
    %v602 = vadd.f32 %v599, %v601
    %v603 = vmax.f32 %v602, 0.0
    %605 = vrot.lane.b32.xlu0 %v603, 1
    %v606 = vpop.permute.xlu0 %605
    %s608 = scalar_lea.vmem [#allocation2], 32
    %609 = vst.msk [vmem:[%s608 + $0x1] sm:$0xff] %vm264, %v606
    %s610 = scalar_lea.vmem %s4, 48
    %v611 = vld [vmem:[%s610] sm:$0xff]
    %s612 = sld [smem:[#allocation3]]
    %v613 = vstv %s612
    %v614 = vmul.f32 %v613, %v611
    %v615 = vadd.f32 %v614, 0.0
    %s616 = scalar_lea.vmem %s4, 144
    %v617 = vld [vmem:[%s616] sm:$0xff]
    %s618 = sld [smem:[#allocation3 + $0x1]]
    %v619 = vstv %s618
    %v620 = vmul.f32 %v619, %v617
    %v621 = vadd.f32 %v615, %v620
    %s622 = sld [smem:[#allocation3 + $0x2]]
    %v623 = vstv %s622
    %v624 = vmul.f32 %v623, %v611
    %626 = vrot.lane.b32.xlu0 %v624, 127
    %v627 = vpop.permute.xlu0 %626
    %v629 = vadd.f32 %v621, %v627
    %s630 = scalar_lea.vmem %s4, 240
    %v631 = vld [vmem:[%s630] sm:$0xff]
    %s632 = sld [smem:[#allocation3 + $0x3]]
    %v633 = vstv %s632
    %v634 = vmul.f32 %v633, %v631
    %v635 = vadd.f32 %v629, %v634
    %s636 = scalar_lea.vmem %s4, 336
    %v637 = vld [vmem:[%s636] sm:$0xff]
    %s638 = sld [smem:[#allocation3 + $0x4]]
    %v639 = vstv %s638
    %v640 = vmul.f32 %v639, %v637
    %v641 = vadd.f32 %v635, %v640
    %s642 = sld [smem:[#allocation3 + $0x5]]
    %v643 = vstv %s642
    %v644 = vmul.f32 %v643, %v631
    %646 = vrot.lane.b32.xlu0 %v644, 127
    %v647 = vpop.permute.xlu0 %646
    %v649 = vadd.f32 %v641, %v647
    %v650 = vld [vmem:[%s610 + $0x1] sm:$0xff]
    %s651 = sld [smem:[#allocation3 + $0x6]]
    %v652 = vstv %s651
    %v653 = vmul.f32 %v652, %v650
    %v654 = vadd.f32 %v649, %v653
    %v655 = vld [vmem:[%s616 + $0x1] sm:$0xff]
    %s656 = sld [smem:[#allocation3 + $0x7]]
    %v657 = vstv %s656
    %v658 = vmul.f32 %v657, %v655
    %v659 = vadd.f32 %v654, %v658
    %s660 = sld [smem:[#allocation3 + $0x8]]
    %v661 = vstv %s660
    %v662 = vmul.f32 %v661, %v650
    %664 = vrot.lane.b32.xlu0 %v662, 127
    %v665 = vpop.permute.xlu0 %664
    %v667 = vadd.f32 %v659, %v665
    %s668 = scalar_lea.vmem %s4, 64
    %v669 = vld [vmem:[%s668] sm:$0xff]
    %s670 = sld [smem:[#allocation3 + $0x9]]
    %v671 = vstv %s670
    %v672 = vmul.f32 %v671, %v669
    %v673 = vadd.f32 %v667, %v672
    %s674 = scalar_lea.vmem %s4, 160
    %v675 = vld [vmem:[%s674] sm:$0xff]
    %s676 = sld [smem:[#allocation3 + $0xa]]
    %v677 = vstv %s676
    %v678 = vmul.f32 %v677, %v675
    %v679 = vadd.f32 %v673, %v678
    %s680 = sld [smem:[#allocation3 + $0xb]]
    %v681 = vstv %s680
    %v682 = vmul.f32 %v681, %v669
    %684 = vrot.lane.b32.xlu0 %v682, 127
    %v685 = vpop.permute.xlu0 %684
    %v687 = vadd.f32 %v679, %v685
    %s688 = scalar_lea.vmem %s4, 256
    %v689 = vld [vmem:[%s688] sm:$0xff]
    %s690 = sld [smem:[#allocation3 + $0xc]]
    %v691 = vstv %s690
    %v692 = vmul.f32 %v691, %v689
    %v693 = vadd.f32 %v687, %v692
    %s694 = scalar_lea.vmem %s4, 352
    %v695 = vld [vmem:[%s694] sm:$0xff]
    %s696 = sld [smem:[#allocation3 + $0xd]]
    %v697 = vstv %s696
    %v698 = vmul.f32 %v697, %v695
    %v699 = vadd.f32 %v693, %v698
    %s700 = sld [smem:[#allocation3 + $0xe]]
    %v701 = vstv %s700
    %v702 = vmul.f32 %v701, %v689
    %704 = vrot.lane.b32.xlu0 %v702, 127
    %v705 = vpop.permute.xlu0 %704
    %v707 = vadd.f32 %v699, %v705
    %v708 = vld [vmem:[%s668 + $0x1] sm:$0xff]
    %s709 = sld [smem:[#allocation3 + $0xf]]
    %v710 = vstv %s709
    %v711 = vmul.f32 %v710, %v708
    %v712 = vadd.f32 %v707, %v711
    %v713 = vld [vmem:[%s674 + $0x1] sm:$0xff]
    %s714 = sld [smem:[#allocation3 + $0x10]]
    %v715 = vstv %s714
    %v716 = vmul.f32 %v715, %v713
    %v717 = vadd.f32 %v712, %v716
    %s718 = sld [smem:[#allocation3 + $0x11]]
    %v719 = vstv %s718
    %v720 = vmul.f32 %v719, %v708
    %722 = vrot.lane.b32.xlu0 %v720, 127
    %v723 = vpop.permute.xlu0 %722
    %v725 = vadd.f32 %v717, %v723
    %s726 = scalar_lea.vmem %s4, 80
    %v727 = vld [vmem:[%s726] sm:$0xff]
    %s728 = sld [smem:[#allocation3 + $0x12]]
    %v729 = vstv %s728
    %v730 = vmul.f32 %v729, %v727
    %v731 = vadd.f32 %v725, %v730
    %s732 = scalar_lea.vmem %s4, 176
    %v733 = vld [vmem:[%s732] sm:$0xff]
    %s734 = sld [smem:[#allocation3 + $0x13]]
    %v735 = vstv %s734
    %v736 = vmul.f32 %v735, %v733
    %v737 = vadd.f32 %v731, %v736
    %s738 = sld [smem:[#allocation3 + $0x14]]
    %v739 = vstv %s738
    %v740 = vmul.f32 %v739, %v727
    %742 = vrot.lane.b32.xlu0 %v740, 127
    %v743 = vpop.permute.xlu0 %742
    %v745 = vadd.f32 %v737, %v743
    %s746 = scalar_lea.vmem %s4, 272
    %v747 = vld [vmem:[%s746] sm:$0xff]
    %s748 = sld [smem:[#allocation3 + $0x15]]
    %v749 = vstv %s748
    %v750 = vmul.f32 %v749, %v747
    %v751 = vadd.f32 %v745, %v750
    %s752 = scalar_lea.vmem %s4, 368
    %v753 = vld [vmem:[%s752] sm:$0xff]
    %s754 = sld [smem:[#allocation3 + $0x16]]
    %v755 = vstv %s754
    %v756 = vmul.f32 %v755, %v753
    %v757 = vadd.f32 %v751, %v756
    %s758 = sld [smem:[#allocation3 + $0x17]]
    %v759 = vstv %s758
    %v760 = vmul.f32 %v759, %v747
    %762 = vrot.lane.b32.xlu0 %v760, 127
    %v763 = vpop.permute.xlu0 %762
    %v765 = vadd.f32 %v757, %v763
    %v766 = vld [vmem:[%s726 + $0x1] sm:$0xff]
    %s767 = sld [smem:[#allocation3 + $0x18]]
    %v768 = vstv %s767
    %v769 = vmul.f32 %v768, %v766
    %v770 = vadd.f32 %v765, %v769
    %v771 = vld [vmem:[%s732 + $0x1] sm:$0xff]
    %s772 = sld [smem:[#allocation3 + $0x19]]
    %v773 = vstv %s772
    %v774 = vmul.f32 %v773, %v771
    %v775 = vadd.f32 %v770, %v774
    %s776 = sld [smem:[#allocation3 + $0x1a]]
    %v777 = vstv %s776
    %v778 = vmul.f32 %v777, %v766
    %780 = vrot.lane.b32.xlu0 %v778, 127
    %v781 = vpop.permute.xlu0 %780
    %v783 = vadd.f32 %v775, %v781
    %s784 = sld [smem:[#allocation6]]
    %v785 = vstv %s784
    %v786 = vadd.f32 %v783, %v785
    %v787 = vmax.f32 %v786, 0.0
    %789 = vrot.lane.b32.xlu0 %v787, 1
    %v790 = vpop.permute.xlu0 %789
    %s792 = scalar_lea.vmem [#allocation2], 48
    %793 = vst.msk [vmem:[%s792 + $0x1] sm:$0xff] %vm264, %v790
    %v794 = vld [vmem:[%s610] sm:$0xff]
    %s795 = sld [smem:[#allocation3 + $0x1b]]
    %v796 = vstv %s795
    %v797 = vmul.f32 %v796, %v794
    %v798 = vadd.f32 %v797, 0.0
    %v799 = vld [vmem:[%s616] sm:$0xff]
    %s800 = sld [smem:[#allocation3 + $0x1c]]
    %v801 = vstv %s800
    %v802 = vmul.f32 %v801, %v799
    %v803 = vadd.f32 %v798, %v802
    %s804 = sld [smem:[#allocation3 + $0x1d]]
    %v805 = vstv %s804
    %v806 = vmul.f32 %v805, %v794
    %808 = vrot.lane.b32.xlu0 %v806, 127
    %v809 = vpop.permute.xlu0 %808
    %v811 = vadd.f32 %v803, %v809
    %v812 = vld [vmem:[%s630] sm:$0xff]
    %s813 = sld [smem:[#allocation3 + $0x1e]]
    %v814 = vstv %s813
    %v815 = vmul.f32 %v814, %v812
    %v816 = vadd.f32 %v811, %v815
    %v817 = vld [vmem:[%s636] sm:$0xff]
    %s818 = sld [smem:[#allocation3 + $0x1f]]
    %v819 = vstv %s818
    %v820 = vmul.f32 %v819, %v817
    %v821 = vadd.f32 %v816, %v820
    %s822 = sld [smem:[#allocation3 + $0x20]]
    %v823 = vstv %s822
    %v824 = vmul.f32 %v823, %v812
    %826 = vrot.lane.b32.xlu0 %v824, 127
    %v827 = vpop.permute.xlu0 %826
    %v829 = vadd.f32 %v821, %v827
    %v830 = vld [vmem:[%s610 + $0x1] sm:$0xff]
    %s831 = sld [smem:[#allocation3 + $0x21]]
    %v832 = vstv %s831
    %v833 = vmul.f32 %v832, %v830
    %v834 = vadd.f32 %v829, %v833
    %v835 = vld [vmem:[%s616 + $0x1] sm:$0xff]
    %s836 = sld [smem:[#allocation3 + $0x22]]
    %v837 = vstv %s836
    %v838 = vmul.f32 %v837, %v835
    %v839 = vadd.f32 %v834, %v838
    %s840 = sld [smem:[#allocation3 + $0x23]]
    %v841 = vstv %s840
    %v842 = vmul.f32 %v841, %v830
    %844 = vrot.lane.b32.xlu0 %v842, 127
    %v845 = vpop.permute.xlu0 %844
    %v847 = vadd.f32 %v839, %v845
    %v848 = vld [vmem:[%s668] sm:$0xff]
    %s849 = sld [smem:[#allocation3 + $0x24]]
    %v850 = vstv %s849
    %v851 = vmul.f32 %v850, %v848
    %v852 = vadd.f32 %v847, %v851
    %v853 = vld [vmem:[%s674] sm:$0xff]
    %s854 = sld [smem:[#allocation3 + $0x25]]
    %v855 = vstv %s854
    %v856 = vmul.f32 %v855, %v853
    %v857 = vadd.f32 %v852, %v856
    %s858 = sld [smem:[#allocation3 + $0x26]]
    %v859 = vstv %s858
    %v860 = vmul.f32 %v859, %v848
    %862 = vrot.lane.b32.xlu0 %v860, 127
    %v863 = vpop.permute.xlu0 %862
    %v865 = vadd.f32 %v857, %v863
    %v866 = vld [vmem:[%s688] sm:$0xff]
    %s867 = sld [smem:[#allocation3 + $0x27]]
    %v868 = vstv %s867
    %v869 = vmul.f32 %v868, %v866
    %v870 = vadd.f32 %v865, %v869
    %v871 = vld [vmem:[%s694] sm:$0xff]
    %s872 = sld [smem:[#allocation3 + $0x28]]
    %v873 = vstv %s872
    %v874 = vmul.f32 %v873, %v871
    %v875 = vadd.f32 %v870, %v874
    %s876 = sld [smem:[#allocation3 + $0x29]]
    %v877 = vstv %s876
    %v878 = vmul.f32 %v877, %v866
    %880 = vrot.lane.b32.xlu0 %v878, 127
    %v881 = vpop.permute.xlu0 %880
    %v883 = vadd.f32 %v875, %v881
    %v884 = vld [vmem:[%s668 + $0x1] sm:$0xff]
    %s885 = sld [smem:[#allocation3 + $0x2a]]
    %v886 = vstv %s885
    %v887 = vmul.f32 %v886, %v884
    %v888 = vadd.f32 %v883, %v887
    %v889 = vld [vmem:[%s674 + $0x1] sm:$0xff]
    %s890 = sld [smem:[#allocation3 + $0x2b]]
    %v891 = vstv %s890
    %v892 = vmul.f32 %v891, %v889
    %v893 = vadd.f32 %v888, %v892
    %s894 = sld [smem:[#allocation3 + $0x2c]]
    %v895 = vstv %s894
    %v896 = vmul.f32 %v895, %v884
    %898 = vrot.lane.b32.xlu0 %v896, 127
    %v899 = vpop.permute.xlu0 %898
    %v901 = vadd.f32 %v893, %v899
    %v902 = vld [vmem:[%s726] sm:$0xff]
    %s903 = sld [smem:[#allocation3 + $0x2d]]
    %v904 = vstv %s903
    %v905 = vmul.f32 %v904, %v902
    %v906 = vadd.f32 %v901, %v905
    %v907 = vld [vmem:[%s732] sm:$0xff]
    %s908 = sld [smem:[#allocation3 + $0x2e]]
    %v909 = vstv %s908
    %v910 = vmul.f32 %v909, %v907
    %v911 = vadd.f32 %v906, %v910
    %s912 = sld [smem:[#allocation3 + $0x2f]]
    %v913 = vstv %s912
    %v914 = vmul.f32 %v913, %v902
    %916 = vrot.lane.b32.xlu0 %v914, 127
    %v917 = vpop.permute.xlu0 %916
    %v919 = vadd.f32 %v911, %v917
    %v920 = vld [vmem:[%s746] sm:$0xff]
    %s921 = sld [smem:[#allocation3 + $0x30]]
    %v922 = vstv %s921
    %v923 = vmul.f32 %v922, %v920
    %v924 = vadd.f32 %v919, %v923
    %v925 = vld [vmem:[%s752] sm:$0xff]
    %s926 = sld [smem:[#allocation3 + $0x31]]
    %v927 = vstv %s926
    %v928 = vmul.f32 %v927, %v925
    %v929 = vadd.f32 %v924, %v928
    %s930 = sld [smem:[#allocation3 + $0x32]]
    %v931 = vstv %s930
    %v932 = vmul.f32 %v931, %v920
    %934 = vrot.lane.b32.xlu0 %v932, 127
    %v935 = vpop.permute.xlu0 %934
    %v937 = vadd.f32 %v929, %v935
    %v938 = vld [vmem:[%s726 + $0x1] sm:$0xff]
    %s939 = sld [smem:[#allocation3 + $0x33]]
    %v940 = vstv %s939
    %v941 = vmul.f32 %v940, %v938
    %v942 = vadd.f32 %v937, %v941
    %v943 = vld [vmem:[%s732 + $0x1] sm:$0xff]
    %s944 = sld [smem:[#allocation3 + $0x34]]
    %v945 = vstv %s944
    %v946 = vmul.f32 %v945, %v943
    %v947 = vadd.f32 %v942, %v946
    %s948 = sld [smem:[#allocation3 + $0x35]]
    %v949 = vstv %s948
    %v950 = vmul.f32 %v949, %v938
    %952 = vrot.lane.b32.xlu0 %v950, 127
    %v953 = vpop.permute.xlu0 %952
    %v955 = vadd.f32 %v947, %v953
    %s956 = sld [smem:[#allocation6 + $0x1]]
    %v957 = vstv %s956
    %v958 = vadd.f32 %v955, %v957
    %v959 = vmax.f32 %v958, 0.0
    %961 = vrot.lane.b32.xlu0 %v959, 1
    %v962 = vpop.permute.xlu0 %961
    %s964 = scalar_lea.vmem [#allocation2], 64
    %965 = vst.msk [vmem:[%s964 + $0x1] sm:$0xff] %vm264, %v962
    %v966 = vld [vmem:[%s610] sm:$0xff]
    %s967 = sld [smem:[#allocation3 + $0x36]]
    %v968 = vstv %s967
    %v969 = vmul.f32 %v968, %v966
    %v970 = vadd.f32 %v969, 0.0
    %v971 = vld [vmem:[%s616] sm:$0xff]
    %s972 = sld [smem:[#allocation3 + $0x37]]
    %v973 = vstv %s972
    %v974 = vmul.f32 %v973, %v971
    %v975 = vadd.f32 %v970, %v974
    %s976 = sld [smem:[#allocation3 + $0x38]]
    %v977 = vstv %s976
    %v978 = vmul.f32 %v977, %v966
    %980 = vrot.lane.b32.xlu0 %v978, 127
    %v981 = vpop.permute.xlu0 %980
    %v983 = vadd.f32 %v975, %v981
    %v984 = vld [vmem:[%s630] sm:$0xff]
    %s985 = sld [smem:[#allocation3 + $0x39]]
    %v986 = vstv %s985
    %v987 = vmul.f32 %v986, %v984
    %v988 = vadd.f32 %v983, %v987
    %v989 = vld [vmem:[%s636] sm:$0xff]
    %s990 = sld [smem:[#allocation3 + $0x3a]]
    %v991 = vstv %s990
    %v992 = vmul.f32 %v991, %v989
    %v993 = vadd.f32 %v988, %v992
    %s994 = sld [smem:[#allocation3 + $0x3b]]
    %v995 = vstv %s994
    %v996 = vmul.f32 %v995, %v984
    %998 = vrot.lane.b32.xlu0 %v996, 127
    %v999 = vpop.permute.xlu0 %998
    %v1001 = vadd.f32 %v993, %v999
    %v1002 = vld [vmem:[%s610 + $0x1] sm:$0xff]
    %s1003 = sld [smem:[#allocation3 + $0x3c]]
    %v1004 = vstv %s1003
    %v1005 = vmul.f32 %v1004, %v1002
    %v1006 = vadd.f32 %v1001, %v1005
    %v1007 = vld [vmem:[%s616 + $0x1] sm:$0xff]
    %s1008 = sld [smem:[#allocation3 + $0x3d]]
    %v1009 = vstv %s1008
    %v1010 = vmul.f32 %v1009, %v1007
    %v1011 = vadd.f32 %v1006, %v1010
    %s1012 = sld [smem:[#allocation3 + $0x3e]]
    %v1013 = vstv %s1012
    %v1014 = vmul.f32 %v1013, %v1002
    %1016 = vrot.lane.b32.xlu0 %v1014, 127
    %v1017 = vpop.permute.xlu0 %1016
    %v1019 = vadd.f32 %v1011, %v1017
    %v1020 = vld [vmem:[%s668] sm:$0xff]
    %s1021 = sld [smem:[#allocation3 + $0x3f]]
    %v1022 = vstv %s1021
    %v1023 = vmul.f32 %v1022, %v1020
    %v1024 = vadd.f32 %v1019, %v1023
    %v1025 = vld [vmem:[%s674] sm:$0xff]
    %s1026 = sld [smem:[#allocation3 + $0x40]]
    %v1027 = vstv %s1026
    %v1028 = vmul.f32 %v1027, %v1025
    %v1029 = vadd.f32 %v1024, %v1028
    %s1030 = sld [smem:[#allocation3 + $0x41]]
    %v1031 = vstv %s1030
    %v1032 = vmul.f32 %v1031, %v1020
    %1034 = vrot.lane.b32.xlu0 %v1032, 127
    %v1035 = vpop.permute.xlu0 %1034
    %v1037 = vadd.f32 %v1029, %v1035
    %v1038 = vld [vmem:[%s688] sm:$0xff]
    %s1039 = sld [smem:[#allocation3 + $0x42]]
    %v1040 = vstv %s1039
    %v1041 = vmul.f32 %v1040, %v1038
    %v1042 = vadd.f32 %v1037, %v1041
    %v1043 = vld [vmem:[%s694] sm:$0xff]
    %s1044 = sld [smem:[#allocation3 + $0x43]]
    %v1045 = vstv %s1044
    %v1046 = vmul.f32 %v1045, %v1043
    %v1047 = vadd.f32 %v1042, %v1046
    %s1048 = sld [smem:[#allocation3 + $0x44]]
    %v1049 = vstv %s1048
    %v1050 = vmul.f32 %v1049, %v1038
    %1052 = vrot.lane.b32.xlu0 %v1050, 127
    %v1053 = vpop.permute.xlu0 %1052
    %v1055 = vadd.f32 %v1047, %v1053
    %v1056 = vld [vmem:[%s668 + $0x1] sm:$0xff]
    %s1057 = sld [smem:[#allocation3 + $0x45]]
    %v1058 = vstv %s1057
    %v1059 = vmul.f32 %v1058, %v1056
    %v1060 = vadd.f32 %v1055, %v1059
    %v1061 = vld [vmem:[%s674 + $0x1] sm:$0xff]
    %s1062 = sld [smem:[#allocation3 + $0x46]]
    %v1063 = vstv %s1062
    %v1064 = vmul.f32 %v1063, %v1061
    %v1065 = vadd.f32 %v1060, %v1064
    %s1066 = sld [smem:[#allocation3 + $0x47]]
    %v1067 = vstv %s1066
    %v1068 = vmul.f32 %v1067, %v1056
    %1070 = vrot.lane.b32.xlu0 %v1068, 127
    %v1071 = vpop.permute.xlu0 %1070
    %v1073 = vadd.f32 %v1065, %v1071
    %v1074 = vld [vmem:[%s726] sm:$0xff]
    %s1075 = sld [smem:[#allocation3 + $0x48]]
    %v1076 = vstv %s1075
    %v1077 = vmul.f32 %v1076, %v1074
    %v1078 = vadd.f32 %v1073, %v1077
    %v1079 = vld [vmem:[%s732] sm:$0xff]
    %s1080 = sld [smem:[#allocation3 + $0x49]]
    %v1081 = vstv %s1080
    %v1082 = vmul.f32 %v1081, %v1079
    %v1083 = vadd.f32 %v1078, %v1082
    %s1084 = sld [smem:[#allocation3 + $0x4a]]
    %v1085 = vstv %s1084
    %v1086 = vmul.f32 %v1085, %v1074
    %1088 = vrot.lane.b32.xlu0 %v1086, 127
    %v1089 = vpop.permute.xlu0 %1088
    %v1091 = vadd.f32 %v1083, %v1089
    %v1092 = vld [vmem:[%s746] sm:$0xff]
    %s1093 = sld [smem:[#allocation3 + $0x4b]]
    %v1094 = vstv %s1093
    %v1095 = vmul.f32 %v1094, %v1092
    %v1096 = vadd.f32 %v1091, %v1095
    %v1097 = vld [vmem:[%s752] sm:$0xff]
    %s1098 = sld [smem:[#allocation3 + $0x4c]]
    %v1099 = vstv %s1098
    %v1100 = vmul.f32 %v1099, %v1097
    %v1101 = vadd.f32 %v1096, %v1100
    %s1102 = sld [smem:[#allocation3 + $0x4d]]
    %v1103 = vstv %s1102
    %v1104 = vmul.f32 %v1103, %v1092
    %1106 = vrot.lane.b32.xlu0 %v1104, 127
    %v1107 = vpop.permute.xlu0 %1106
    %v1109 = vadd.f32 %v1101, %v1107
    %v1110 = vld [vmem:[%s726 + $0x1] sm:$0xff]
    %s1111 = sld [smem:[#allocation3 + $0x4e]]
    %v1112 = vstv %s1111
    %v1113 = vmul.f32 %v1112, %v1110
    %v1114 = vadd.f32 %v1109, %v1113
    %v1115 = vld [vmem:[%s732 + $0x1] sm:$0xff]
    %s1116 = sld [smem:[#allocation3 + $0x4f]]
    %v1117 = vstv %s1116
    %v1118 = vmul.f32 %v1117, %v1115
    %v1119 = vadd.f32 %v1114, %v1118
    %s1120 = sld [smem:[#allocation3 + $0x50]]
    %v1121 = vstv %s1120
    %v1122 = vmul.f32 %v1121, %v1110
    %1124 = vrot.lane.b32.xlu0 %v1122, 127
    %v1125 = vpop.permute.xlu0 %1124
    %v1127 = vadd.f32 %v1119, %v1125
    %s1128 = sld [smem:[#allocation6 + $0x2]]
    %v1129 = vstv %s1128
    %v1130 = vadd.f32 %v1127, %v1129
    %v1131 = vmax.f32 %v1130, 0.0
    %1133 = vrot.lane.b32.xlu0 %v1131, 1
    %v1134 = vpop.permute.xlu0 %1133
    %s1136 = scalar_lea.vmem [#allocation2], 80
    %1137 = vst.msk [vmem:[%s1136 + $0x1] sm:$0xff] %vm264, %v1134
    %v1138 = vld [vmem:[#allocation2] sm:$0xff]
    %s1139 = sld [smem:[#allocation8]]
    %v1140 = vstv %s1139
    %v1141 = vmul.f32 %v1140, %v1138
    %v1142 = vadd.f32 %v1141, 0.0
    %s1143 = sld [smem:[#allocation8 + $0x1]]
    %v1144 = vstv %s1143
    %v1145 = vmul.f32 %v1144, %v1138
    %1147 = vrot.lane.b32.xlu0 %v1145, 127
    %v1148 = vpop.permute.xlu0 %1147
    %v1150 = vadd.f32 %v1142, %v1148
    %s1151 = sld [smem:[#allocation8 + $0x2]]
    %v1152 = vstv %s1151
    %v1153 = vmul.f32 %v1152, %v1138
    %1155 = vrot.lane.b32.xlu0 %v1153, 126
    %v1156 = vpop.permute.xlu0 %1155
    %v1158 = vadd.f32 %v1150, %v1156
    %v1159 = vld [vmem:[#allocation2 + $0x1] sm:$0xff]
    %s1160 = sld [smem:[#allocation8 + $0x3]]
    %v1161 = vstv %s1160
    %v1162 = vmul.f32 %v1161, %v1159
    %v1163 = vadd.f32 %v1158, %v1162
    %s1164 = sld [smem:[#allocation8 + $0x4]]
    %v1165 = vstv %s1164
    %v1166 = vmul.f32 %v1165, %v1159
    %1168 = vrot.lane.b32.xlu0 %v1166, 127
    %v1169 = vpop.permute.xlu0 %1168
    %v1171 = vadd.f32 %v1163, %v1169
    %s1172 = sld [smem:[#allocation8 + $0x5]]
    %v1173 = vstv %s1172
    %v1174 = vmul.f32 %v1173, %v1159
    %1176 = vrot.lane.b32.xlu0 %v1174, 126
    %v1177 = vpop.permute.xlu0 %1176
    %v1179 = vadd.f32 %v1171, %v1177
    %v1180 = vld [vmem:[#allocation2 + $0x2] sm:$0xff]
    %s1181 = sld [smem:[#allocation8 + $0x6]]
    %v1182 = vstv %s1181
    %v1183 = vmul.f32 %v1182, %v1180
    %v1184 = vadd.f32 %v1179, %v1183
    %s1185 = sld [smem:[#allocation8 + $0x7]]
    %v1186 = vstv %s1185
    %v1187 = vmul.f32 %v1186, %v1180
    %1189 = vrot.lane.b32.xlu0 %v1187, 127
    %v1190 = vpop.permute.xlu0 %1189
    %v1192 = vadd.f32 %v1184, %v1190
    %s1193 = sld [smem:[#allocation8 + $0x8]]
    %v1194 = vstv %s1193
    %v1195 = vmul.f32 %v1194, %v1180
    %1197 = vrot.lane.b32.xlu0 %v1195, 126
    %v1198 = vpop.permute.xlu0 %1197
    %v1200 = vadd.f32 %v1192, %v1198
    %v1201 = vld [vmem:[%s436] sm:$0xff]
    %s1202 = sld [smem:[#allocation8 + $0x9]]
    %v1203 = vstv %s1202
    %v1204 = vmul.f32 %v1203, %v1201
    %v1205 = vadd.f32 %v1200, %v1204
    %s1206 = sld [smem:[#allocation8 + $0xa]]
    %v1207 = vstv %s1206
    %v1208 = vmul.f32 %v1207, %v1201
    %1210 = vrot.lane.b32.xlu0 %v1208, 127
    %v1211 = vpop.permute.xlu0 %1210
    %v1213 = vadd.f32 %v1205, %v1211
    %s1214 = sld [smem:[#allocation8 + $0xb]]
    %v1215 = vstv %s1214
    %v1216 = vmul.f32 %v1215, %v1201
    %1218 = vrot.lane.b32.xlu0 %v1216, 126
    %v1219 = vpop.permute.xlu0 %1218
    %v1221 = vadd.f32 %v1213, %v1219
    %v1222 = vld [vmem:[%s436 + $0x1] sm:$0xff]
    %s1223 = sld [smem:[#allocation8 + $0xc]]
    %v1224 = vstv %s1223
    %v1225 = vmul.f32 %v1224, %v1222
    %v1226 = vadd.f32 %v1221, %v1225
    %s1227 = sld [smem:[#allocation8 + $0xd]]
    %v1228 = vstv %s1227
    %v1229 = vmul.f32 %v1228, %v1222
    %1231 = vrot.lane.b32.xlu0 %v1229, 127
    %v1232 = vpop.permute.xlu0 %1231
    %v1234 = vadd.f32 %v1226, %v1232
    %s1235 = sld [smem:[#allocation8 + $0xe]]
    %v1236 = vstv %s1235
    %v1237 = vmul.f32 %v1236, %v1222
    %1239 = vrot.lane.b32.xlu0 %v1237, 126
    %v1240 = vpop.permute.xlu0 %1239
    %v1242 = vadd.f32 %v1234, %v1240
    %v1243 = vld [vmem:[%s436 + $0x2] sm:$0xff]
    %s1244 = sld [smem:[#allocation8 + $0xf]]
    %v1245 = vstv %s1244
    %v1246 = vmul.f32 %v1245, %v1243
    %v1247 = vadd.f32 %v1242, %v1246
    %s1248 = sld [smem:[#allocation8 + $0x10]]
    %v1249 = vstv %s1248
    %v1250 = vmul.f32 %v1249, %v1243
    %1252 = vrot.lane.b32.xlu0 %v1250, 127
    %v1253 = vpop.permute.xlu0 %1252
    %v1255 = vadd.f32 %v1247, %v1253
    %s1256 = sld [smem:[#allocation8 + $0x11]]
    %v1257 = vstv %s1256
    %v1258 = vmul.f32 %v1257, %v1243
    %1260 = vrot.lane.b32.xlu0 %v1258, 126
    %v1261 = vpop.permute.xlu0 %1260
    %v1263 = vadd.f32 %v1255, %v1261
    %v1264 = vld [vmem:[%s608] sm:$0xff]
    %s1265 = sld [smem:[#allocation8 + $0x12]]
    %v1266 = vstv %s1265
    %v1267 = vmul.f32 %v1266, %v1264
    %v1268 = vadd.f32 %v1263, %v1267
    %s1269 = sld [smem:[#allocation8 + $0x13]]
    %v1270 = vstv %s1269
    %v1271 = vmul.f32 %v1270, %v1264
    %1273 = vrot.lane.b32.xlu0 %v1271, 127
    %v1274 = vpop.permute.xlu0 %1273
    %v1276 = vadd.f32 %v1268, %v1274
    %s1277 = sld [smem:[#allocation8 + $0x14]]
    %v1278 = vstv %s1277
    %v1279 = vmul.f32 %v1278, %v1264
    %1281 = vrot.lane.b32.xlu0 %v1279, 126
    %v1282 = vpop.permute.xlu0 %1281
    %v1284 = vadd.f32 %v1276, %v1282
    %v1285 = vld [vmem:[%s608 + $0x1] sm:$0xff]
    %s1286 = sld [smem:[#allocation8 + $0x15]]
    %v1287 = vstv %s1286
    %v1288 = vmul.f32 %v1287, %v1285
    %v1289 = vadd.f32 %v1284, %v1288
    %s1290 = sld [smem:[#allocation8 + $0x16]]
    %v1291 = vstv %s1290
    %v1292 = vmul.f32 %v1291, %v1285
    %1294 = vrot.lane.b32.xlu0 %v1292, 127
    %v1295 = vpop.permute.xlu0 %1294
    %v1297 = vadd.f32 %v1289, %v1295
    %s1298 = sld [smem:[#allocation8 + $0x17]]
    %v1299 = vstv %s1298
    %v1300 = vmul.f32 %v1299, %v1285
    %1302 = vrot.lane.b32.xlu0 %v1300, 126
    %v1303 = vpop.permute.xlu0 %1302
    %v1305 = vadd.f32 %v1297, %v1303
    %v1306 = vld [vmem:[%s608 + $0x2] sm:$0xff]
    %s1307 = sld [smem:[#allocation8 + $0x18]]
    %v1308 = vstv %s1307
    %v1309 = vmul.f32 %v1308, %v1306
    %v1310 = vadd.f32 %v1305, %v1309
    %s1311 = sld [smem:[#allocation8 + $0x19]]
    %v1312 = vstv %s1311
    %v1313 = vmul.f32 %v1312, %v1306
    %1315 = vrot.lane.b32.xlu0 %v1313, 127
    %v1316 = vpop.permute.xlu0 %1315
    %v1318 = vadd.f32 %v1310, %v1316
    %s1319 = sld [smem:[#allocation8 + $0x1a]]
    %v1320 = vstv %s1319
    %v1321 = vmul.f32 %v1320, %v1306
    %1323 = vrot.lane.b32.xlu0 %v1321, 126
    %v1324 = vpop.permute.xlu0 %1323
    %v1326 = vadd.f32 %v1318, %v1324
    %s1327 = sld [smem:[#allocation9]]
    %v1328 = vstv %s1327
    %v1329 = vadd.f32 %v1326, %v1328
    %v1330 = vmax.f32 %v1329, 0.0
    %vm1331 = vcmask 64512
    %1332 = vst.msk [vmem:[#allocation11] sm:$0xff] %vm1331, %v1330
    %v1333 = vld [vmem:[#allocation2] sm:$0xff]
    %s1334 = sld [smem:[#allocation8 + $0x1b]]
    %v1335 = vstv %s1334
    %v1336 = vmul.f32 %v1335, %v1333
    %v1337 = vadd.f32 %v1336, 0.0
    %s1338 = sld [smem:[#allocation8 + $0x1c]]
    %v1339 = vstv %s1338
    %v1340 = vmul.f32 %v1339, %v1333
    %1342 = vrot.lane.b32.xlu0 %v1340, 127
    %v1343 = vpop.permute.xlu0 %1342
    %v1345 = vadd.f32 %v1337, %v1343
    %s1346 = sld [smem:[#allocation8 + $0x1d]]
    %v1347 = vstv %s1346
    %v1348 = vmul.f32 %v1347, %v1333
    %1350 = vrot.lane.b32.xlu0 %v1348, 126
    %v1351 = vpop.permute.xlu0 %1350
    %v1353 = vadd.f32 %v1345, %v1351
    %v1354 = vld [vmem:[#allocation2 + $0x1] sm:$0xff]
    %s1355 = sld [smem:[#allocation8 + $0x1e]]
    %v1356 = vstv %s1355
    %v1357 = vmul.f32 %v1356, %v1354
    %v1358 = vadd.f32 %v1353, %v1357
    %s1359 = sld [smem:[#allocation8 + $0x1f]]
    %v1360 = vstv %s1359
    %v1361 = vmul.f32 %v1360, %v1354
    %1363 = vrot.lane.b32.xlu0 %v1361, 127
    %v1364 = vpop.permute.xlu0 %1363
    %v1366 = vadd.f32 %v1358, %v1364
    %s1367 = sld [smem:[#allocation8 + $0x20]]
    %v1368 = vstv %s1367
    %v1369 = vmul.f32 %v1368, %v1354
    %1371 = vrot.lane.b32.xlu0 %v1369, 126
    %v1372 = vpop.permute.xlu0 %1371
    %v1374 = vadd.f32 %v1366, %v1372
    %v1375 = vld [vmem:[#allocation2 + $0x2] sm:$0xff]
    %s1376 = sld [smem:[#allocation8 + $0x21]]
    %v1377 = vstv %s1376
    %v1378 = vmul.f32 %v1377, %v1375
    %v1379 = vadd.f32 %v1374, %v1378
    %s1380 = sld [smem:[#allocation8 + $0x22]]
    %v1381 = vstv %s1380
    %v1382 = vmul.f32 %v1381, %v1375
    %1384 = vrot.lane.b32.xlu0 %v1382, 127
    %v1385 = vpop.permute.xlu0 %1384
    %v1387 = vadd.f32 %v1379, %v1385
    %s1388 = sld [smem:[#allocation8 + $0x23]]
    %v1389 = vstv %s1388
    %v1390 = vmul.f32 %v1389, %v1375
    %1392 = vrot.lane.b32.xlu0 %v1390, 126
    %v1393 = vpop.permute.xlu0 %1392
    %v1395 = vadd.f32 %v1387, %v1393
    %v1396 = vld [vmem:[%s436] sm:$0xff]
    %s1397 = sld [smem:[#allocation8 + $0x24]]
    %v1398 = vstv %s1397
    %v1399 = vmul.f32 %v1398, %v1396
    %v1400 = vadd.f32 %v1395, %v1399
    %s1401 = sld [smem:[#allocation8 + $0x25]]
    %v1402 = vstv %s1401
    %v1403 = vmul.f32 %v1402, %v1396
    %1405 = vrot.lane.b32.xlu0 %v1403, 127
    %v1406 = vpop.permute.xlu0 %1405
    %v1408 = vadd.f32 %v1400, %v1406
    %s1409 = sld [smem:[#allocation8 + $0x26]]
    %v1410 = vstv %s1409
    %v1411 = vmul.f32 %v1410, %v1396
    %1413 = vrot.lane.b32.xlu0 %v1411, 126
    %v1414 = vpop.permute.xlu0 %1413
    %v1416 = vadd.f32 %v1408, %v1414
    %v1417 = vld [vmem:[%s436 + $0x1] sm:$0xff]
    %s1418 = sld [smem:[#allocation8 + $0x27]]
    %v1419 = vstv %s1418
    %v1420 = vmul.f32 %v1419, %v1417
    %v1421 = vadd.f32 %v1416, %v1420
    %s1422 = sld [smem:[#allocation8 + $0x28]]
    %v1423 = vstv %s1422
    %v1424 = vmul.f32 %v1423, %v1417
    %1426 = vrot.lane.b32.xlu0 %v1424, 127
    %v1427 = vpop.permute.xlu0 %1426
    %v1429 = vadd.f32 %v1421, %v1427
    %s1430 = sld [smem:[#allocation8 + $0x29]]
    %v1431 = vstv %s1430
    %v1432 = vmul.f32 %v1431, %v1417
    %1434 = vrot.lane.b32.xlu0 %v1432, 126
    %v1435 = vpop.permute.xlu0 %1434
    %v1437 = vadd.f32 %v1429, %v1435
    %v1438 = vld [vmem:[%s436 + $0x2] sm:$0xff]
    %s1439 = sld [smem:[#allocation8 + $0x2a]]
    %v1440 = vstv %s1439
    %v1441 = vmul.f32 %v1440, %v1438
    %v1442 = vadd.f32 %v1437, %v1441
    %s1443 = sld [smem:[#allocation8 + $0x2b]]
    %v1444 = vstv %s1443
    %v1445 = vmul.f32 %v1444, %v1438
    %1447 = vrot.lane.b32.xlu0 %v1445, 127
    %v1448 = vpop.permute.xlu0 %1447
    %v1450 = vadd.f32 %v1442, %v1448
    %s1451 = sld [smem:[#allocation8 + $0x2c]]
    %v1452 = vstv %s1451
    %v1453 = vmul.f32 %v1452, %v1438
    %1455 = vrot.lane.b32.xlu0 %v1453, 126
    %v1456 = vpop.permute.xlu0 %1455
    %v1458 = vadd.f32 %v1450, %v1456
    %v1459 = vld [vmem:[%s608] sm:$0xff]
    %s1460 = sld [smem:[#allocation8 + $0x2d]]
    %v1461 = vstv %s1460
    %v1462 = vmul.f32 %v1461, %v1459
    %v1463 = vadd.f32 %v1458, %v1462
    %s1464 = sld [smem:[#allocation8 + $0x2e]]
    %v1465 = vstv %s1464
    %v1466 = vmul.f32 %v1465, %v1459
    %1468 = vrot.lane.b32.xlu0 %v1466, 127
    %v1469 = vpop.permute.xlu0 %1468
    %v1471 = vadd.f32 %v1463, %v1469
    %s1472 = sld [smem:[#allocation8 + $0x2f]]
    %v1473 = vstv %s1472
    %v1474 = vmul.f32 %v1473, %v1459
    %1476 = vrot.lane.b32.xlu0 %v1474, 126
    %v1477 = vpop.permute.xlu0 %1476
    %v1479 = vadd.f32 %v1471, %v1477
    %v1480 = vld [vmem:[%s608 + $0x1] sm:$0xff]
    %s1481 = sld [smem:[#allocation8 + $0x30]]
    %v1482 = vstv %s1481
    %v1483 = vmul.f32 %v1482, %v1480
    %v1484 = vadd.f32 %v1479, %v1483
    %s1485 = sld [smem:[#allocation8 + $0x31]]
    %v1486 = vstv %s1485
    %v1487 = vmul.f32 %v1486, %v1480
    %1489 = vrot.lane.b32.xlu0 %v1487, 127
    %v1490 = vpop.permute.xlu0 %1489
    %v1492 = vadd.f32 %v1484, %v1490
    %s1493 = sld [smem:[#allocation8 + $0x32]]
    %v1494 = vstv %s1493
    %v1495 = vmul.f32 %v1494, %v1480
    %1497 = vrot.lane.b32.xlu0 %v1495, 126
    %v1498 = vpop.permute.xlu0 %1497
    %v1500 = vadd.f32 %v1492, %v1498
    %v1501 = vld [vmem:[%s608 + $0x2] sm:$0xff]
    %s1502 = sld [smem:[#allocation8 + $0x33]]
    %v1503 = vstv %s1502
    %v1504 = vmul.f32 %v1503, %v1501
    %v1505 = vadd.f32 %v1500, %v1504
    %s1506 = sld [smem:[#allocation8 + $0x34]]
    %v1507 = vstv %s1506
    %v1508 = vmul.f32 %v1507, %v1501
    %1510 = vrot.lane.b32.xlu0 %v1508, 127
    %v1511 = vpop.permute.xlu0 %1510
    %v1513 = vadd.f32 %v1505, %v1511
    %s1514 = sld [smem:[#allocation8 + $0x35]]
    %v1515 = vstv %s1514
    %v1516 = vmul.f32 %v1515, %v1501
    %1518 = vrot.lane.b32.xlu0 %v1516, 126
    %v1519 = vpop.permute.xlu0 %1518
    %v1521 = vadd.f32 %v1513, %v1519
    %s1522 = sld [smem:[#allocation9 + $0x1]]
    %v1523 = vstv %s1522
    %v1524 = vadd.f32 %v1521, %v1523
    %v1525 = vmax.f32 %v1524, 0.0
    %s1526 = scalar_lea.vmem [#allocation11], 8
    %1527 = vst.msk [vmem:[%s1526] sm:$0xff] %vm1331, %v1525
    %v1528 = vld [vmem:[#allocation2] sm:$0xff]
    %s1529 = sld [smem:[#allocation8 + $0x36]]
    %v1530 = vstv %s1529
    %v1531 = vmul.f32 %v1530, %v1528
    %v1532 = vadd.f32 %v1531, 0.0
    %s1533 = sld [smem:[#allocation8 + $0x37]]
    %v1534 = vstv %s1533
    %v1535 = vmul.f32 %v1534, %v1528
    %1537 = vrot.lane.b32.xlu0 %v1535, 127
    %v1538 = vpop.permute.xlu0 %1537
    %v1540 = vadd.f32 %v1532, %v1538
    %s1541 = sld [smem:[#allocation8 + $0x38]]
    %v1542 = vstv %s1541
    %v1543 = vmul.f32 %v1542, %v1528
    %1545 = vrot.lane.b32.xlu0 %v1543, 126
    %v1546 = vpop.permute.xlu0 %1545
    %v1548 = vadd.f32 %v1540, %v1546
    %v1549 = vld [vmem:[#allocation2 + $0x1] sm:$0xff]
    %s1550 = sld [smem:[#allocation8 + $0x39]]
    %v1551 = vstv %s1550
    %v1552 = vmul.f32 %v1551, %v1549
    %v1553 = vadd.f32 %v1548, %v1552
    %s1554 = sld [smem:[#allocation8 + $0x3a]]
    %v1555 = vstv %s1554
    %v1556 = vmul.f32 %v1555, %v1549
    %1558 = vrot.lane.b32.xlu0 %v1556, 127
    %v1559 = vpop.permute.xlu0 %1558
    %v1561 = vadd.f32 %v1553, %v1559
    %s1562 = sld [smem:[#allocation8 + $0x3b]]
    %v1563 = vstv %s1562
    %v1564 = vmul.f32 %v1563, %v1549
    %1566 = vrot.lane.b32.xlu0 %v1564, 126
    %v1567 = vpop.permute.xlu0 %1566
    %v1569 = vadd.f32 %v1561, %v1567
    %v1570 = vld [vmem:[#allocation2 + $0x2] sm:$0xff]
    %s1571 = sld [smem:[#allocation8 + $0x3c]]
    %v1572 = vstv %s1571
    %v1573 = vmul.f32 %v1572, %v1570
    %v1574 = vadd.f32 %v1569, %v1573
    %s1575 = sld [smem:[#allocation8 + $0x3d]]
    %v1576 = vstv %s1575
    %v1577 = vmul.f32 %v1576, %v1570
    %1579 = vrot.lane.b32.xlu0 %v1577, 127
    %v1580 = vpop.permute.xlu0 %1579
    %v1582 = vadd.f32 %v1574, %v1580
    %s1583 = sld [smem:[#allocation8 + $0x3e]]
    %v1584 = vstv %s1583
    %v1585 = vmul.f32 %v1584, %v1570
    %1587 = vrot.lane.b32.xlu0 %v1585, 126
    %v1588 = vpop.permute.xlu0 %1587
    %v1590 = vadd.f32 %v1582, %v1588
    %v1591 = vld [vmem:[%s436] sm:$0xff]
    %s1592 = sld [smem:[#allocation8 + $0x3f]]
    %v1593 = vstv %s1592
    %v1594 = vmul.f32 %v1593, %v1591
    %v1595 = vadd.f32 %v1590, %v1594
    %s1596 = sld [smem:[#allocation8 + $0x40]]
    %v1597 = vstv %s1596
    %v1598 = vmul.f32 %v1597, %v1591
    %1600 = vrot.lane.b32.xlu0 %v1598, 127
    %v1601 = vpop.permute.xlu0 %1600
    %v1603 = vadd.f32 %v1595, %v1601
    %s1604 = sld [smem:[#allocation8 + $0x41]]
    %v1605 = vstv %s1604
    %v1606 = vmul.f32 %v1605, %v1591
    %1608 = vrot.lane.b32.xlu0 %v1606, 126
    %v1609 = vpop.permute.xlu0 %1608
    %v1611 = vadd.f32 %v1603, %v1609
    %v1612 = vld [vmem:[%s436 + $0x1] sm:$0xff]
    %s1613 = sld [smem:[#allocation8 + $0x42]]
    %v1614 = vstv %s1613
    %v1615 = vmul.f32 %v1614, %v1612
    %v1616 = vadd.f32 %v1611, %v1615
    %s1617 = sld [smem:[#allocation8 + $0x43]]
    %v1618 = vstv %s1617
    %v1619 = vmul.f32 %v1618, %v1612
    %1621 = vrot.lane.b32.xlu0 %v1619, 127
    %v1622 = vpop.permute.xlu0 %1621
    %v1624 = vadd.f32 %v1616, %v1622
    %s1625 = sld [smem:[#allocation8 + $0x44]]
    %v1626 = vstv %s1625
    %v1627 = vmul.f32 %v1626, %v1612
    %1629 = vrot.lane.b32.xlu0 %v1627, 126
    %v1630 = vpop.permute.xlu0 %1629
    %v1632 = vadd.f32 %v1624, %v1630
    %v1633 = vld [vmem:[%s436 + $0x2] sm:$0xff]
    %s1634 = sld [smem:[#allocation8 + $0x45]]
    %v1635 = vstv %s1634
    %v1636 = vmul.f32 %v1635, %v1633
    %v1637 = vadd.f32 %v1632, %v1636
    %s1638 = sld [smem:[#allocation8 + $0x46]]
    %v1639 = vstv %s1638
    %v1640 = vmul.f32 %v1639, %v1633
    %1642 = vrot.lane.b32.xlu0 %v1640, 127
    %v1643 = vpop.permute.xlu0 %1642
    %v1645 = vadd.f32 %v1637, %v1643
    %s1646 = sld [smem:[#allocation8 + $0x47]]
    %v1647 = vstv %s1646
    %v1648 = vmul.f32 %v1647, %v1633
    %1650 = vrot.lane.b32.xlu0 %v1648, 126
    %v1651 = vpop.permute.xlu0 %1650
    %v1653 = vadd.f32 %v1645, %v1651
    %v1654 = vld [vmem:[%s608] sm:$0xff]
    %s1655 = sld [smem:[#allocation8 + $0x48]]
    %v1656 = vstv %s1655
    %v1657 = vmul.f32 %v1656, %v1654
    %v1658 = vadd.f32 %v1653, %v1657
    %s1659 = sld [smem:[#allocation8 + $0x49]]
    %v1660 = vstv %s1659
    %v1661 = vmul.f32 %v1660, %v1654
    %1663 = vrot.lane.b32.xlu0 %v1661, 127
    %v1664 = vpop.permute.xlu0 %1663
    %v1666 = vadd.f32 %v1658, %v1664
    %s1667 = sld [smem:[#allocation8 + $0x4a]]
    %v1668 = vstv %s1667
    %v1669 = vmul.f32 %v1668, %v1654
    %1671 = vrot.lane.b32.xlu0 %v1669, 126
    %v1672 = vpop.permute.xlu0 %1671
    %v1674 = vadd.f32 %v1666, %v1672
    %v1675 = vld [vmem:[%s608 + $0x1] sm:$0xff]
    %s1676 = sld [smem:[#allocation8 + $0x4b]]
    %v1677 = vstv %s1676
    %v1678 = vmul.f32 %v1677, %v1675
    %v1679 = vadd.f32 %v1674, %v1678
    %s1680 = sld [smem:[#allocation8 + $0x4c]]
    %v1681 = vstv %s1680
    %v1682 = vmul.f32 %v1681, %v1675
    %1684 = vrot.lane.b32.xlu0 %v1682, 127
    %v1685 = vpop.permute.xlu0 %1684
    %v1687 = vadd.f32 %v1679, %v1685
    %s1688 = sld [smem:[#allocation8 + $0x4d]]
    %v1689 = vstv %s1688
    %v1690 = vmul.f32 %v1689, %v1675
    %1692 = vrot.lane.b32.xlu0 %v1690, 126
    %v1693 = vpop.permute.xlu0 %1692
    %v1695 = vadd.f32 %v1687, %v1693
    %v1696 = vld [vmem:[%s608 + $0x2] sm:$0xff]
    %s1697 = sld [smem:[#allocation8 + $0x4e]]
    %v1698 = vstv %s1697
    %v1699 = vmul.f32 %v1698, %v1696
    %v1700 = vadd.f32 %v1695, %v1699
    %s1701 = sld [smem:[#allocation8 + $0x4f]]
    %v1702 = vstv %s1701
    %v1703 = vmul.f32 %v1702, %v1696
    %1705 = vrot.lane.b32.xlu0 %v1703, 127
    %v1706 = vpop.permute.xlu0 %1705
    %v1708 = vadd.f32 %v1700, %v1706
    %s1709 = sld [smem:[#allocation8 + $0x50]]
    %v1710 = vstv %s1709
    %v1711 = vmul.f32 %v1710, %v1696
    %1713 = vrot.lane.b32.xlu0 %v1711, 126
    %v1714 = vpop.permute.xlu0 %1713
    %v1716 = vadd.f32 %v1708, %v1714
    %s1717 = sld [smem:[#allocation9 + $0x2]]
    %v1718 = vstv %s1717
    %v1719 = vadd.f32 %v1716, %v1718
    %v1720 = vmax.f32 %v1719, 0.0
    %s1721 = scalar_lea.vmem [#allocation11], 16
    %1722 = vst.msk [vmem:[%s1721] sm:$0xff] %vm1331, %v1720
    %v1723 = vld [vmem:[%s792] sm:$0xff]
    %s1724 = sld [smem:[#allocation8]]
    %v1725 = vstv %s1724
    %v1726 = vmul.f32 %v1725, %v1723
    %v1727 = vadd.f32 %v1726, 0.0
    %s1728 = sld [smem:[#allocation8 + $0x1]]
    %v1729 = vstv %s1728
    %v1730 = vmul.f32 %v1729, %v1723
    %1732 = vrot.lane.b32.xlu0 %v1730, 127
    %v1733 = vpop.permute.xlu0 %1732
    %v1735 = vadd.f32 %v1727, %v1733
    %s1736 = sld [smem:[#allocation8 + $0x2]]
    %v1737 = vstv %s1736
    %v1738 = vmul.f32 %v1737, %v1723
    %1740 = vrot.lane.b32.xlu0 %v1738, 126
    %v1741 = vpop.permute.xlu0 %1740
    %v1743 = vadd.f32 %v1735, %v1741
    %v1744 = vld [vmem:[%s792 + $0x1] sm:$0xff]
    %s1745 = sld [smem:[#allocation8 + $0x3]]
    %v1746 = vstv %s1745
    %v1747 = vmul.f32 %v1746, %v1744
    %v1748 = vadd.f32 %v1743, %v1747
    %s1749 = sld [smem:[#allocation8 + $0x4]]
    %v1750 = vstv %s1749
    %v1751 = vmul.f32 %v1750, %v1744
    %1753 = vrot.lane.b32.xlu0 %v1751, 127
    %v1754 = vpop.permute.xlu0 %1753
    %v1756 = vadd.f32 %v1748, %v1754
    %s1757 = sld [smem:[#allocation8 + $0x5]]
    %v1758 = vstv %s1757
    %v1759 = vmul.f32 %v1758, %v1744
    %1761 = vrot.lane.b32.xlu0 %v1759, 126
    %v1762 = vpop.permute.xlu0 %1761
    %v1764 = vadd.f32 %v1756, %v1762
    %v1765 = vld [vmem:[%s792 + $0x2] sm:$0xff]
    %s1766 = sld [smem:[#allocation8 + $0x6]]
    %v1767 = vstv %s1766
    %v1768 = vmul.f32 %v1767, %v1765
    %v1769 = vadd.f32 %v1764, %v1768
    %s1770 = sld [smem:[#allocation8 + $0x7]]
    %v1771 = vstv %s1770
    %v1772 = vmul.f32 %v1771, %v1765
    %1774 = vrot.lane.b32.xlu0 %v1772, 127
    %v1775 = vpop.permute.xlu0 %1774
    %v1777 = vadd.f32 %v1769, %v1775
    %s1778 = sld [smem:[#allocation8 + $0x8]]
    %v1779 = vstv %s1778
    %v1780 = vmul.f32 %v1779, %v1765
    %1782 = vrot.lane.b32.xlu0 %v1780, 126
    %v1783 = vpop.permute.xlu0 %1782
    %v1785 = vadd.f32 %v1777, %v1783
    %v1786 = vld [vmem:[%s964] sm:$0xff]
    %s1787 = sld [smem:[#allocation8 + $0x9]]
    %v1788 = vstv %s1787
    %v1789 = vmul.f32 %v1788, %v1786
    %v1790 = vadd.f32 %v1785, %v1789
    %s1791 = sld [smem:[#allocation8 + $0xa]]
    %v1792 = vstv %s1791
    %v1793 = vmul.f32 %v1792, %v1786
    %1795 = vrot.lane.b32.xlu0 %v1793, 127
    %v1796 = vpop.permute.xlu0 %1795
    %v1798 = vadd.f32 %v1790, %v1796
    %s1799 = sld [smem:[#allocation8 + $0xb]]
    %v1800 = vstv %s1799
    %v1801 = vmul.f32 %v1800, %v1786
    %1803 = vrot.lane.b32.xlu0 %v1801, 126
    %v1804 = vpop.permute.xlu0 %1803
    %v1806 = vadd.f32 %v1798, %v1804
    %v1807 = vld [vmem:[%s964 + $0x1] sm:$0xff]
    %s1808 = sld [smem:[#allocation8 + $0xc]]
    %v1809 = vstv %s1808
    %v1810 = vmul.f32 %v1809, %v1807
    %v1811 = vadd.f32 %v1806, %v1810
    %s1812 = sld [smem:[#allocation8 + $0xd]]
    %v1813 = vstv %s1812
    %v1814 = vmul.f32 %v1813, %v1807
    %1816 = vrot.lane.b32.xlu0 %v1814, 127
    %v1817 = vpop.permute.xlu0 %1816
    %v1819 = vadd.f32 %v1811, %v1817
    %s1820 = sld [smem:[#allocation8 + $0xe]]
    %v1821 = vstv %s1820
    %v1822 = vmul.f32 %v1821, %v1807
    %1824 = vrot.lane.b32.xlu0 %v1822, 126
    %v1825 = vpop.permute.xlu0 %1824
    %v1827 = vadd.f32 %v1819, %v1825
    %v1828 = vld [vmem:[%s964 + $0x2] sm:$0xff]
    %s1829 = sld [smem:[#allocation8 + $0xf]]
    %v1830 = vstv %s1829
    %v1831 = vmul.f32 %v1830, %v1828
    %v1832 = vadd.f32 %v1827, %v1831
    %s1833 = sld [smem:[#allocation8 + $0x10]]
    %v1834 = vstv %s1833
    %v1835 = vmul.f32 %v1834, %v1828
    %1837 = vrot.lane.b32.xlu0 %v1835, 127
    %v1838 = vpop.permute.xlu0 %1837
    %v1840 = vadd.f32 %v1832, %v1838
    %s1841 = sld [smem:[#allocation8 + $0x11]]
    %v1842 = vstv %s1841
    %v1843 = vmul.f32 %v1842, %v1828
    %1845 = vrot.lane.b32.xlu0 %v1843, 126
    %v1846 = vpop.permute.xlu0 %1845
    %v1848 = vadd.f32 %v1840, %v1846
    %v1849 = vld [vmem:[%s1136] sm:$0xff]
    %s1850 = sld [smem:[#allocation8 + $0x12]]
    %v1851 = vstv %s1850
    %v1852 = vmul.f32 %v1851, %v1849
    %v1853 = vadd.f32 %v1848, %v1852
    %s1854 = sld [smem:[#allocation8 + $0x13]]
    %v1855 = vstv %s1854
    %v1856 = vmul.f32 %v1855, %v1849
    %1858 = vrot.lane.b32.xlu0 %v1856, 127
    %v1859 = vpop.permute.xlu0 %1858
    %v1861 = vadd.f32 %v1853, %v1859
    %s1862 = sld [smem:[#allocation8 + $0x14]]
    %v1863 = vstv %s1862
    %v1864 = vmul.f32 %v1863, %v1849
    %1866 = vrot.lane.b32.xlu0 %v1864, 126
    %v1867 = vpop.permute.xlu0 %1866
    %v1869 = vadd.f32 %v1861, %v1867
    %v1870 = vld [vmem:[%s1136 + $0x1] sm:$0xff]
    %s1871 = sld [smem:[#allocation8 + $0x15]]
    %v1872 = vstv %s1871
    %v1873 = vmul.f32 %v1872, %v1870
    %v1874 = vadd.f32 %v1869, %v1873
    %s1875 = sld [smem:[#allocation8 + $0x16]]
    %v1876 = vstv %s1875
    %v1877 = vmul.f32 %v1876, %v1870
    %1879 = vrot.lane.b32.xlu0 %v1877, 127
    %v1880 = vpop.permute.xlu0 %1879
    %v1882 = vadd.f32 %v1874, %v1880
    %s1883 = sld [smem:[#allocation8 + $0x17]]
    %v1884 = vstv %s1883
    %v1885 = vmul.f32 %v1884, %v1870
    %1887 = vrot.lane.b32.xlu0 %v1885, 126
    %v1888 = vpop.permute.xlu0 %1887
    %v1890 = vadd.f32 %v1882, %v1888
    %v1891 = vld [vmem:[%s1136 + $0x2] sm:$0xff]
    %s1892 = sld [smem:[#allocation8 + $0x18]]
    %v1893 = vstv %s1892
    %v1894 = vmul.f32 %v1893, %v1891
    %v1895 = vadd.f32 %v1890, %v1894
    %s1896 = sld [smem:[#allocation8 + $0x19]]
    %v1897 = vstv %s1896
    %v1898 = vmul.f32 %v1897, %v1891
    %1900 = vrot.lane.b32.xlu0 %v1898, 127
    %v1901 = vpop.permute.xlu0 %1900
    %v1903 = vadd.f32 %v1895, %v1901
    %s1904 = sld [smem:[#allocation8 + $0x1a]]
    %v1905 = vstv %s1904
    %v1906 = vmul.f32 %v1905, %v1891
    %1908 = vrot.lane.b32.xlu0 %v1906, 126
    %v1909 = vpop.permute.xlu0 %1908
    %v1911 = vadd.f32 %v1903, %v1909
    %s1912 = sld [smem:[#allocation9]]
    %v1913 = vstv %s1912
    %v1914 = vadd.f32 %v1911, %v1913
    %v1915 = vmax.f32 %v1914, 0.0
    %s1916 = scalar_lea.vmem [#allocation11], 24
    %1917 = vst.msk [vmem:[%s1916] sm:$0xff] %vm1331, %v1915
    %v1918 = vld [vmem:[%s792] sm:$0xff]
    %s1919 = sld [smem:[#allocation8 + $0x1b]]
    %v1920 = vstv %s1919
    %v1921 = vmul.f32 %v1920, %v1918
    %v1922 = vadd.f32 %v1921, 0.0
    %s1923 = sld [smem:[#allocation8 + $0x1c]]
    %v1924 = vstv %s1923
    %v1925 = vmul.f32 %v1924, %v1918
    %1927 = vrot.lane.b32.xlu0 %v1925, 127
    %v1928 = vpop.permute.xlu0 %1927
    %v1930 = vadd.f32 %v1922, %v1928
    %s1931 = sld [smem:[#allocation8 + $0x1d]]
    %v1932 = vstv %s1931
    %v1933 = vmul.f32 %v1932, %v1918
    %1935 = vrot.lane.b32.xlu0 %v1933, 126
    %v1936 = vpop.permute.xlu0 %1935
    %v1938 = vadd.f32 %v1930, %v1936
    %v1939 = vld [vmem:[%s792 + $0x1] sm:$0xff]
    %s1940 = sld [smem:[#allocation8 + $0x1e]]
    %v1941 = vstv %s1940
    %v1942 = vmul.f32 %v1941, %v1939
    %v1943 = vadd.f32 %v1938, %v1942
    %s1944 = sld [smem:[#allocation8 + $0x1f]]
    %v1945 = vstv %s1944
    %v1946 = vmul.f32 %v1945, %v1939
    %1948 = vrot.lane.b32.xlu0 %v1946, 127
    %v1949 = vpop.permute.xlu0 %1948
    %v1951 = vadd.f32 %v1943, %v1949
    %s1952 = sld [smem:[#allocation8 + $0x20]]
    %v1953 = vstv %s1952
    %v1954 = vmul.f32 %v1953, %v1939
    %1956 = vrot.lane.b32.xlu0 %v1954, 126
    %v1957 = vpop.permute.xlu0 %1956
    %v1959 = vadd.f32 %v1951, %v1957
    %v1960 = vld [vmem:[%s792 + $0x2] sm:$0xff]
    %s1961 = sld [smem:[#allocation8 + $0x21]]
    %v1962 = vstv %s1961
    %v1963 = vmul.f32 %v1962, %v1960
    %v1964 = vadd.f32 %v1959, %v1963
    %s1965 = sld [smem:[#allocation8 + $0x22]]
    %v1966 = vstv %s1965
    %v1967 = vmul.f32 %v1966, %v1960
    %1969 = vrot.lane.b32.xlu0 %v1967, 127
    %v1970 = vpop.permute.xlu0 %1969
    %v1972 = vadd.f32 %v1964, %v1970
    %s1973 = sld [smem:[#allocation8 + $0x23]]
    %v1974 = vstv %s1973
    %v1975 = vmul.f32 %v1974, %v1960
    %1977 = vrot.lane.b32.xlu0 %v1975, 126
    %v1978 = vpop.permute.xlu0 %1977
    %v1980 = vadd.f32 %v1972, %v1978
    %v1981 = vld [vmem:[%s964] sm:$0xff]
    %s1982 = sld [smem:[#allocation8 + $0x24]]
    %v1983 = vstv %s1982
    %v1984 = vmul.f32 %v1983, %v1981
    %v1985 = vadd.f32 %v1980, %v1984
    %s1986 = sld [smem:[#allocation8 + $0x25]]
    %v1987 = vstv %s1986
    %v1988 = vmul.f32 %v1987, %v1981
    %1990 = vrot.lane.b32.xlu0 %v1988, 127
    %v1991 = vpop.permute.xlu0 %1990
    %v1993 = vadd.f32 %v1985, %v1991
    %s1994 = sld [smem:[#allocation8 + $0x26]]
    %v1995 = vstv %s1994
    %v1996 = vmul.f32 %v1995, %v1981
    %1998 = vrot.lane.b32.xlu0 %v1996, 126
    %v1999 = vpop.permute.xlu0 %1998
    %v2001 = vadd.f32 %v1993, %v1999
    %v2002 = vld [vmem:[%s964 + $0x1] sm:$0xff]
    %s2003 = sld [smem:[#allocation8 + $0x27]]
    %v2004 = vstv %s2003
    %v2005 = vmul.f32 %v2004, %v2002
    %v2006 = vadd.f32 %v2001, %v2005
    %s2007 = sld [smem:[#allocation8 + $0x28]]
    %v2008 = vstv %s2007
    %v2009 = vmul.f32 %v2008, %v2002
    %2011 = vrot.lane.b32.xlu0 %v2009, 127
    %v2012 = vpop.permute.xlu0 %2011
    %v2014 = vadd.f32 %v2006, %v2012
    %s2015 = sld [smem:[#allocation8 + $0x29]]
    %v2016 = vstv %s2015
    %v2017 = vmul.f32 %v2016, %v2002
    %2019 = vrot.lane.b32.xlu0 %v2017, 126
    %v2020 = vpop.permute.xlu0 %2019
    %v2022 = vadd.f32 %v2014, %v2020
    %v2023 = vld [vmem:[%s964 + $0x2] sm:$0xff]
    %s2024 = sld [smem:[#allocation8 + $0x2a]]
    %v2025 = vstv %s2024
    %v2026 = vmul.f32 %v2025, %v2023
    %v2027 = vadd.f32 %v2022, %v2026
    %s2028 = sld [smem:[#allocation8 + $0x2b]]
    %v2029 = vstv %s2028
    %v2030 = vmul.f32 %v2029, %v2023
    %2032 = vrot.lane.b32.xlu0 %v2030, 127
    %v2033 = vpop.permute.xlu0 %2032
    %v2035 = vadd.f32 %v2027, %v2033
    %s2036 = sld [smem:[#allocation8 + $0x2c]]
    %v2037 = vstv %s2036
    %v2038 = vmul.f32 %v2037, %v2023
    %2040 = vrot.lane.b32.xlu0 %v2038, 126
    %v2041 = vpop.permute.xlu0 %2040
    %v2043 = vadd.f32 %v2035, %v2041
    %v2044 = vld [vmem:[%s1136] sm:$0xff]
    %s2045 = sld [smem:[#allocation8 + $0x2d]]
    %v2046 = vstv %s2045
    %v2047 = vmul.f32 %v2046, %v2044
    %v2048 = vadd.f32 %v2043, %v2047
    %s2049 = sld [smem:[#allocation8 + $0x2e]]
    %v2050 = vstv %s2049
    %v2051 = vmul.f32 %v2050, %v2044
    %2053 = vrot.lane.b32.xlu0 %v2051, 127
    %v2054 = vpop.permute.xlu0 %2053
    %v2056 = vadd.f32 %v2048, %v2054
    %s2057 = sld [smem:[#allocation8 + $0x2f]]
    %v2058 = vstv %s2057
    %v2059 = vmul.f32 %v2058, %v2044
    %2061 = vrot.lane.b32.xlu0 %v2059, 126
    %v2062 = vpop.permute.xlu0 %2061
    %v2064 = vadd.f32 %v2056, %v2062
    %v2065 = vld [vmem:[%s1136 + $0x1] sm:$0xff]
    %s2066 = sld [smem:[#allocation8 + $0x30]]
    %v2067 = vstv %s2066
    %v2068 = vmul.f32 %v2067, %v2065
    %v2069 = vadd.f32 %v2064, %v2068
    %s2070 = sld [smem:[#allocation8 + $0x31]]
    %v2071 = vstv %s2070
    %v2072 = vmul.f32 %v2071, %v2065
    %2074 = vrot.lane.b32.xlu0 %v2072, 127
    %v2075 = vpop.permute.xlu0 %2074
    %v2077 = vadd.f32 %v2069, %v2075
    %s2078 = sld [smem:[#allocation8 + $0x32]]
    %v2079 = vstv %s2078
    %v2080 = vmul.f32 %v2079, %v2065
    %2082 = vrot.lane.b32.xlu0 %v2080, 126
    %v2083 = vpop.permute.xlu0 %2082
    %v2085 = vadd.f32 %v2077, %v2083
    %v2086 = vld [vmem:[%s1136 + $0x2] sm:$0xff]
    %s2087 = sld [smem:[#allocation8 + $0x33]]
    %v2088 = vstv %s2087
    %v2089 = vmul.f32 %v2088, %v2086
    %v2090 = vadd.f32 %v2085, %v2089
    %s2091 = sld [smem:[#allocation8 + $0x34]]
    %v2092 = vstv %s2091
    %v2093 = vmul.f32 %v2092, %v2086
    %2095 = vrot.lane.b32.xlu0 %v2093, 127
    %v2096 = vpop.permute.xlu0 %2095
    %v2098 = vadd.f32 %v2090, %v2096
    %s2099 = sld [smem:[#allocation8 + $0x35]]
    %v2100 = vstv %s2099
    %v2101 = vmul.f32 %v2100, %v2086
    %2103 = vrot.lane.b32.xlu0 %v2101, 126
    %v2104 = vpop.permute.xlu0 %2103
    %v2106 = vadd.f32 %v2098, %v2104
    %s2107 = sld [smem:[#allocation9 + $0x1]]
    %v2108 = vstv %s2107
    %v2109 = vadd.f32 %v2106, %v2108
    %v2110 = vmax.f32 %v2109, 0.0
    %s2111 = scalar_lea.vmem [#allocation11], 32
    %2112 = vst.msk [vmem:[%s2111] sm:$0xff] %vm1331, %v2110
    %v2113 = vld [vmem:[%s792] sm:$0xff]
    %s2114 = sld [smem:[#allocation8 + $0x36]]
    %v2115 = vstv %s2114
    %v2116 = vmul.f32 %v2115, %v2113
    %v2117 = vadd.f32 %v2116, 0.0
    %s2118 = sld [smem:[#allocation8 + $0x37]]
    %v2119 = vstv %s2118
    %v2120 = vmul.f32 %v2119, %v2113
    %2122 = vrot.lane.b32.xlu0 %v2120, 127
    %v2123 = vpop.permute.xlu0 %2122
    %v2125 = vadd.f32 %v2117, %v2123
    %s2126 = sld [smem:[#allocation8 + $0x38]]
    %v2127 = vstv %s2126
    %v2128 = vmul.f32 %v2127, %v2113
    %2130 = vrot.lane.b32.xlu0 %v2128, 126
    %v2131 = vpop.permute.xlu0 %2130
    %v2133 = vadd.f32 %v2125, %v2131
    %v2134 = vld [vmem:[%s792 + $0x1] sm:$0xff]
    %s2135 = sld [smem:[#allocation8 + $0x39]]
    %v2136 = vstv %s2135
    %v2137 = vmul.f32 %v2136, %v2134
    %v2138 = vadd.f32 %v2133, %v2137
    %s2139 = sld [smem:[#allocation8 + $0x3a]]
    %v2140 = vstv %s2139
    %v2141 = vmul.f32 %v2140, %v2134
    %2143 = vrot.lane.b32.xlu0 %v2141, 127
    %v2144 = vpop.permute.xlu0 %2143
    %v2146 = vadd.f32 %v2138, %v2144
    %s2147 = sld [smem:[#allocation8 + $0x3b]]
    %v2148 = vstv %s2147
    %v2149 = vmul.f32 %v2148, %v2134
    %2151 = vrot.lane.b32.xlu0 %v2149, 126
    %v2152 = vpop.permute.xlu0 %2151
    %v2154 = vadd.f32 %v2146, %v2152
    %v2155 = vld [vmem:[%s792 + $0x2] sm:$0xff]
    %s2156 = sld [smem:[#allocation8 + $0x3c]]
    %v2157 = vstv %s2156
    %v2158 = vmul.f32 %v2157, %v2155
    %v2159 = vadd.f32 %v2154, %v2158
    %s2160 = sld [smem:[#allocation8 + $0x3d]]
    %v2161 = vstv %s2160
    %v2162 = vmul.f32 %v2161, %v2155
    %2164 = vrot.lane.b32.xlu0 %v2162, 127
    %v2165 = vpop.permute.xlu0 %2164
    %v2167 = vadd.f32 %v2159, %v2165
    %s2168 = sld [smem:[#allocation8 + $0x3e]]
    %v2169 = vstv %s2168
    %v2170 = vmul.f32 %v2169, %v2155
    %2172 = vrot.lane.b32.xlu0 %v2170, 126
    %v2173 = vpop.permute.xlu0 %2172
    %v2175 = vadd.f32 %v2167, %v2173
    %v2176 = vld [vmem:[%s964] sm:$0xff]
    %s2177 = sld [smem:[#allocation8 + $0x3f]]
    %v2178 = vstv %s2177
    %v2179 = vmul.f32 %v2178, %v2176
    %v2180 = vadd.f32 %v2175, %v2179
    %s2181 = sld [smem:[#allocation8 + $0x40]]
    %v2182 = vstv %s2181
    %v2183 = vmul.f32 %v2182, %v2176
    %2185 = vrot.lane.b32.xlu0 %v2183, 127
    %v2186 = vpop.permute.xlu0 %2185
    %v2188 = vadd.f32 %v2180, %v2186
    %s2189 = sld [smem:[#allocation8 + $0x41]]
    %v2190 = vstv %s2189
    %v2191 = vmul.f32 %v2190, %v2176
    %2193 = vrot.lane.b32.xlu0 %v2191, 126
    %v2194 = vpop.permute.xlu0 %2193
    %v2196 = vadd.f32 %v2188, %v2194
    %v2197 = vld [vmem:[%s964 + $0x1] sm:$0xff]
    %s2198 = sld [smem:[#allocation8 + $0x42]]
    %v2199 = vstv %s2198
    %v2200 = vmul.f32 %v2199, %v2197
    %v2201 = vadd.f32 %v2196, %v2200
    %s2202 = sld [smem:[#allocation8 + $0x43]]
    %v2203 = vstv %s2202
    %v2204 = vmul.f32 %v2203, %v2197
    %2206 = vrot.lane.b32.xlu0 %v2204, 127
    %v2207 = vpop.permute.xlu0 %2206
    %v2209 = vadd.f32 %v2201, %v2207
    %s2210 = sld [smem:[#allocation8 + $0x44]]
    %v2211 = vstv %s2210
    %v2212 = vmul.f32 %v2211, %v2197
    %2214 = vrot.lane.b32.xlu0 %v2212, 126
    %v2215 = vpop.permute.xlu0 %2214
    %v2217 = vadd.f32 %v2209, %v2215
    %v2218 = vld [vmem:[%s964 + $0x2] sm:$0xff]
    %s2219 = sld [smem:[#allocation8 + $0x45]]
    %v2220 = vstv %s2219
    %v2221 = vmul.f32 %v2220, %v2218
    %v2222 = vadd.f32 %v2217, %v2221
    %s2223 = sld [smem:[#allocation8 + $0x46]]
    %v2224 = vstv %s2223
    %v2225 = vmul.f32 %v2224, %v2218
    %2227 = vrot.lane.b32.xlu0 %v2225, 127
    %v2228 = vpop.permute.xlu0 %2227
    %v2230 = vadd.f32 %v2222, %v2228
    %s2231 = sld [smem:[#allocation8 + $0x47]]
    %v2232 = vstv %s2231
    %v2233 = vmul.f32 %v2232, %v2218
    %2235 = vrot.lane.b32.xlu0 %v2233, 126
    %v2236 = vpop.permute.xlu0 %2235
    %v2238 = vadd.f32 %v2230, %v2236
    %v2239 = vld [vmem:[%s1136] sm:$0xff]
    %s2240 = sld [smem:[#allocation8 + $0x48]]
    %v2241 = vstv %s2240
    %v2242 = vmul.f32 %v2241, %v2239
    %v2243 = vadd.f32 %v2238, %v2242
    %s2244 = sld [smem:[#allocation8 + $0x49]]
    %v2245 = vstv %s2244
    %v2246 = vmul.f32 %v2245, %v2239
    %2248 = vrot.lane.b32.xlu0 %v2246, 127
    %v2249 = vpop.permute.xlu0 %2248
    %v2251 = vadd.f32 %v2243, %v2249
    %s2252 = sld [smem:[#allocation8 + $0x4a]]
    %v2253 = vstv %s2252
    %v2254 = vmul.f32 %v2253, %v2239
    %2256 = vrot.lane.b32.xlu0 %v2254, 126
    %v2257 = vpop.permute.xlu0 %2256
    %v2259 = vadd.f32 %v2251, %v2257
    %v2260 = vld [vmem:[%s1136 + $0x1] sm:$0xff]
    %s2261 = sld [smem:[#allocation8 + $0x4b]]
    %v2262 = vstv %s2261
    %v2263 = vmul.f32 %v2262, %v2260
    %v2264 = vadd.f32 %v2259, %v2263
    %s2265 = sld [smem:[#allocation8 + $0x4c]]
    %v2266 = vstv %s2265
    %v2267 = vmul.f32 %v2266, %v2260
    %2269 = vrot.lane.b32.xlu0 %v2267, 127
    %v2270 = vpop.permute.xlu0 %2269
    %v2272 = vadd.f32 %v2264, %v2270
    %s2273 = sld [smem:[#allocation8 + $0x4d]]
    %v2274 = vstv %s2273
    %v2275 = vmul.f32 %v2274, %v2260
    %2277 = vrot.lane.b32.xlu0 %v2275, 126
    %v2278 = vpop.permute.xlu0 %2277
    %v2280 = vadd.f32 %v2272, %v2278
    %v2281 = vld [vmem:[%s1136 + $0x2] sm:$0xff]
    %s2282 = sld [smem:[#allocation8 + $0x4e]]
    %v2283 = vstv %s2282
    %v2284 = vmul.f32 %v2283, %v2281
    %v2285 = vadd.f32 %v2280, %v2284
    %s2286 = sld [smem:[#allocation8 + $0x4f]]
    %v2287 = vstv %s2286
    %v2288 = vmul.f32 %v2287, %v2281
    %2290 = vrot.lane.b32.xlu0 %v2288, 127
    %v2291 = vpop.permute.xlu0 %2290
    %v2293 = vadd.f32 %v2285, %v2291
    %s2294 = sld [smem:[#allocation8 + $0x50]]
    %v2295 = vstv %s2294
    %v2296 = vmul.f32 %v2295, %v2281
    %2298 = vrot.lane.b32.xlu0 %v2296, 126
    %v2299 = vpop.permute.xlu0 %2298
    %v2301 = vadd.f32 %v2293, %v2299
    %s2302 = sld [smem:[#allocation9 + $0x2]]
    %v2303 = vstv %s2302
    %v2304 = vadd.f32 %v2301, %v2303
    %v2305 = vmax.f32 %v2304, 0.0
    %s2306 = scalar_lea.vmem [#allocation11], 40
    %2307 = vst.msk [vmem:[%s2306] sm:$0xff] %vm1331, %v2305
    // Predicated region
    $region38: #{model_forward.1} parent=1 // pred_check
      _
    $region39: #{model_forward.1} parent=1 // pred_check_branch
      %2309 = sbr.rel (0) target = $region41
    $region40: #{model_forward.1} parent=1 // pred_region
      %s2311 = ssub.s32 768, 768
      %2312 = vsyncadd [#allocation4], %s2311
      %s2313 = sshll.u32 [#allocation11], 4
      %s2314 = int_to_ptr.vmem [resolvable:$true] %s2313
      %2319 = dma.vmem_to_hbm [thread:$0]  %s2314, 768, %s5, [#allocation4], 128, 128, 8
    $region41: #{model_forward.1} parent=1 // pred_fallthru
      _
    // Predicated region
    $region42: #{model_forward.1} parent=1 // pred_check
      _
    $region43: #{model_forward.1} parent=1 // pred_check_branch
      %2321 = sbr.rel (0) target = $region45
    $region44: #{model_forward.1} parent=1 // pred_region
      %2322 = dma.done [#allocation4], 768
    $region45: #{model_forward.1} parent=1 // pred_fallthru
      _
    %2323 = vsyncpa [#allocation4], 1
    %2324 = vsyncpa [#allocation5], 1
    %2325 = vsyncpa [#allocation7], 1
    %2326 = vsyncpa [#allocation10], 1

</llo_original>
